<compile_context>
chip_gen: v7x
topology: tpu7x:2x2x1
jax: 0.10.0
libtpu: 0.0.40
codegen_flags: <defaults>
</compile_context>

<pallas_src>
import functools
import math
import numpy as np
import jax
import jax.numpy as jnp
from jax.experimental import pallas as pl
from jax.experimental.pallas import tpu as pltpu

# ---- hyperparameters (small, consistent with Decoder.__init__) ----
MAX_SEQ_LEN = 32              # hp.max_seq_len
D_MODEL     = 32              # hp.decoder_hidden == hp.encoder_hidden (d_word_vec)
N_LAYERS    = 2               # hp.decoder_layer
N_HEAD      = 2               # hp.decoder_head
D_K         = D_MODEL // N_HEAD
D_V         = D_MODEL // N_HEAD
D_INNER     = 64              # hp.fft_conv1d_filter_size
K1, K2      = 9, 1            # fft_conv1d_kernel sizes (FastSpeech default), padding = (4, 0)
PAD1        = (K1 - 1) // 2
EPS         = 1e-5            # nn.LayerNorm default eps
NEG_INF     = -1e9            # finite "-inf": no NaN even for fully-padded sequences


# ---------------------------------------------------------------------------
# Sinusoid position encoding table (matches the PyTorch helper exactly)
# ---------------------------------------------------------------------------
def get_sinusoid_encoding_table(n_position, d_hid, padding_idx=-1):
    pos = np.arange(n_position, dtype=np.float64)[:, None]
    j = np.arange(d_hid)[None, :]
    angle = pos / np.power(10000.0, 2.0 * (j // 2) / d_hid)
    table = np.where(j % 2 == 0, np.sin(angle), np.cos(angle))
    if padding_idx != -1:
        table[padding_idx] = 0.0
    return jnp.asarray(table, dtype=jnp.float32)


# ---------------------------------------------------------------------------
# Fused Pallas kernel: position add + N_LAYERS x FFTBlock
# ---------------------------------------------------------------------------
def decoder_kernel(x_ref, pos_ref, kbias_ref, keep_ref,
                   wqkv_ref, bqkv_ref, wo_ref, bo_ref, g1_ref, be1_ref,
                   w1_ref, b1_ref, w2_ref, b2_ref, g2_ref, be2_ref,
                   out_ref, *, n_batch, seq_len):
    B, L, D = n_batch, seq_len, D_MODEL
    scale = 1.0 / math.sqrt(float(D_K))
    bf16 = jnp.bfloat16

    # ---- fused position-encoding add (per sequence; no tiled pos copy) ----
    pos = pos_ref[...]                                        # (L, D) f32
    x = jnp.concatenate([x_ref[b] + pos for b in range(B)], axis=0)   # (B*L, D) f32

    # ---- compact masks (built once, reused by every layer) ----
    kbias = kbias_ref[...]                                    # (B, L): 0 valid / NEG_INF padded key
    keep = keep_ref[...]                                      # (B*L, 1): 1 valid / 0 padded row

    def layer_norm(u, g, b):
        mu = jnp.mean(u, axis=-1, keepdims=True)
        var = jnp.mean((u - mu) * (u - mu), axis=-1, keepdims=True)
        return (u - mu) * jax.lax.rsqrt(var + EPS) * g + b

    for l in range(N_LAYERS):                                 # static unroll over layers
        wqkv = wqkv_ref[l]                                    # (D, 3D)   bf16
        bqkv = bqkv_ref[l]                                    # (1, 3D)   f32
        wo = wo_ref[l]                                        # (H, D_V, D) bf16 (pre-split per head)
        bo = bo_ref[l]
        g1, be1 = g1_ref[l], be1_ref[l]
        w1, b1 = w1_ref[l], b1_ref[l]                         # (K1*D, F) bf16 / (1, F) f32
        w2, b2 = w2_ref[l], b2_ref[l]                         # (F, D)    bf16 / (1, D) f32
        g2, be2 = g2_ref[l], be2_ref[l]

        # ---------------- fused QKV projection (batch-folded, one matmul) ----------------
        qkv = jnp.dot(x.astype(bf16), wqkv,
                      preferred_element_type=jnp.float32) + bqkv       # (B*L, 3D) f32
        qkv = qkv.astype(bf16)                                # matmul-operand precision only

        # ---------------- multi-head self-attention, per sequence ((L,L) scores) ----------
        ctx_rows = []
        for b in range(B):
            r0 = b * L
            qkv_b = qkv[r0:r0 + L, :]                         # (L, 3D) bf16, static slice
            kb = kbias[b:b + 1, :]                            # (1, L) additive key bias
            acc = jnp.zeros((L, D), jnp.float32)
            for h in range(N_HEAD):
                q = qkv_b[:, h * D_K:(h + 1) * D_K]
                k = qkv_b[:, D + h * D_K:D + (h + 1) * D_K]
                v = qkv_b[:, 2 * D + h * D_V:2 * D + (h + 1) * D_V]
                s = jnp.einsum('qd,kd->qk', q, k,
                               preferred_element_type=jnp.float32) * scale + kb
                m = jnp.max(s, axis=-1, keepdims=True)        # softmax stats in f32
                e = jnp.exp(s - m)
                inv = pl.reciprocal(jnp.sum(e, axis=-1, keepdims=True), approx=True)
                p = (e * inv).astype(bf16)
                head = jnp.dot(p, v, preferred_element_type=jnp.float32)        # (L, D_V)
                acc = acc + jnp.dot(head.astype(bf16), wo[h],
                                    preferred_element_type=jnp.float32)         # (L, D)
            ctx_rows.append(acc)
        ctx = jnp.concatenate(ctx_rows, axis=0) + bo          # (B*L, D) f32

        y = layer_norm(ctx + x, g1, be1)                      # residual + LayerNorm (f32)
        y = y * keep                                          # masked_fill(mask, 0)

        # -------- FFN: Conv1d(k=9) -> ReLU -> Conv1d(k=1) as ONE im2col matmul --------
        zpad = jnp.zeros((PAD1, D), bf16)
        cols = []
        for b in range(B):
            yb = y[b * L:(b + 1) * L, :].astype(bf16)
            ypad = jnp.concatenate([zpad, yb, zpad], axis=0)  # real zero padding per sequence
            cols.append(jnp.concatenate([ypad[kk:kk + L, :] for kk in range(K1)], axis=-1))
        col = jnp.concatenate(cols, axis=0)                   # (B*L, K1*D) bf16 im2col matrix
        hid = jnp.dot(col, w1, preferred_element_type=jnp.float32) + b1
        hid = jnp.maximum(hid, 0.0)                           # ReLU
        z = jnp.dot(hid.astype(bf16), w2, preferred_element_type=jnp.float32) + b2

        z = layer_norm(z + y, g2, be2)                        # residual + LayerNorm
        x = z * keep                                          # masked_fill(mask, 0)

    out_ref[...] = x                                          # single contiguous store
    # TODO(synk): lane-dense (packed-rows) output layout for D=32 if throughput at scale matters.


# ---------------------------------------------------------------------------
# Wrappers (glue)
# ---------------------------------------------------------------------------
def stack_layer_params(layer_params):
    """Fuse/pre-split per-layer weights and stack along a leading (N_LAYERS, ...) axis.

    Matmul weights are cast to bf16 (MXU operands); biases / LayerNorm params stay f32.
    """
    wqkv_l, bqkv_l, woh_l, bo_l, g1_l, be1_l = [], [], [], [], [], []
    w1_l, b1_l, w2_l, b2_l, g2_l, be2_l = [], [], [], [], [], []
    for (wq, bq, wk, bk, wv, bv, wo, bo, g1, be1, w1, b1, w2, b2, g2, be2) in layer_params:
        wqkv_l.append(jnp.concatenate([wq, wk, wv], axis=1).astype(jnp.bfloat16))   # (D, 3D)
        bqkv_l.append(jnp.concatenate([bq, bk, bv], axis=1))                        # (1, 3D)
        woh_l.append(wo.reshape(N_HEAD, D_V, D_MODEL).astype(jnp.bfloat16))         # per-head split
        bo_l.append(bo)
        g1_l.append(g1); be1_l.append(be1)
        w1_l.append(w1.reshape(K1 * D_MODEL, D_INNER).astype(jnp.bfloat16))         # im2col layout
        b1_l.append(b1)
        w2_l.append(w2.astype(jnp.bfloat16))
        b2_l.append(b2)
        g2_l.append(g2); be2_l.append(be2)
    groups = (wqkv_l, bqkv_l, woh_l, bo_l, g1_l, be1_l, w1_l, b1_l, w2_l, b2_l, g2_l, be2_l)
    return tuple(jnp.stack(g, axis=0) for g in groups)


def decoder_forward(enc_seq, mask, pos_table, stacked_params, training=False):
    """Equivalent of Decoder.forward(enc_seq, mask) (return_attns=False path)."""
    B, L, D = enc_seq.shape
    if (not training) and L > MAX_SEQ_LEN:
        # trace-time rebuild; recompiles per distinct L (matches the PyTorch eval path)
        pos = get_sinusoid_encoding_table(L, D_MODEL)[:L, :]
    else:
        pos = pos_table[0, :L, :]
    BL = B * L

    # Compact masks (built in the wrapper, O(B*L) HBM traffic instead of O(B^2*L^2)):
    padf = mask.astype(jnp.float32)                                # (B, L): 1 = padding
    key_bias = jnp.where(mask, NEG_INF, 0.0).astype(jnp.float32)   # (B, L) additive key bias
    row_keep = (1.0 - padf).reshape(BL, 1)                         # (B*L, 1): 1 valid / 0 pad

    kernel = functools.partial(decoder_kernel, n_batch=B, seq_len=L)
    out2d = pl.pallas_call(
        kernel,
        out_shape=jax.ShapeDtypeStruct((BL, D), jnp.float32),
        in_specs=[pl.BlockSpec(memory_space=pltpu.MemorySpace.VMEM)]
                 * (4 + len(stacked_params)),
        out_specs=pl.BlockSpec(memory_space=pltpu.MemorySpace.VMEM),
    )(enc_seq, pos.astype(jnp.float32), key_bias, row_keep, *stacked_params)
    return out2d.reshape(B, L, D)
    # TODO(synk): return_attns=True path (collecting per-layer attention maps) is not returned.


# ---------------------------------------------------------------------------
# Deterministic synthetic parameters (reference layout; fused/stacked for the kernel)
# ---------------------------------------------------------------------------
def init_params(key):
    layers = []
    for lk in jax.random.split(key, N_LAYERS):
        ks = jax.random.split(lk, 10)
        std = 0.02
        wq = jax.random.normal(ks[0], (D_MODEL, N_HEAD * D_K), jnp.float32) * std
        wk = jax.random.normal(ks[1], (D_MODEL, N_HEAD * D_K), jnp.float32) * std
        wv = jax.random.normal(ks[2], (D_MODEL, N_HEAD * D_V), jnp.float32) * std
        bq = jax.random.normal(ks[3], (1, N_HEAD * D_K), jnp.float32) * std
        bk = jax.random.normal(ks[4], (1, N_HEAD * D_K), jnp.float32) * std
        bv = jax.random.normal(ks[5], (1, N_HEAD * D_V), jnp.float32) * std
        wo = jax.random.normal(ks[6], (N_HEAD * D_V, D_MODEL), jnp.float32) * std
        bo = jnp.zeros((1, D_MODEL), jnp.float32)
        g1 = jnp.ones((1, D_MODEL), jnp.float32)
        be1 = jnp.zeros((1, D_MODEL), jnp.float32)
        w1 = jax.random.normal(ks[7], (K1, D_MODEL, D_INNER), jnp.float32) * std  # Conv1d k=9 (tap,in,out)
        b1 = jax.random.normal(ks[8], (1, D_INNER), jnp.float32) * std
        w2 = jax.random.normal(ks[9], (D_INNER, D_MODEL), jnp.float32) * std      # Conv1d k=1 == linear
        b2 = jnp.zeros((1, D_MODEL), jnp.float32)
        g2 = jnp.ones((1, D_MODEL), jnp.float32)
        be2 = jnp.zeros((1, D_MODEL), jnp.float32)
        layers.append((wq, bq, wk, bk, wv, bv, wo, bo, g1, be1,
                       w1, b1, w2, b2, g2, be2))
    return layers


# ---------------------------------------------------------------------------
# Pure-JAX f32 reference (for correctness check only)
# ---------------------------------------------------------------------------
def _ln(x, g, b):
    mu = jnp.mean(x, axis=-1, keepdims=True)
    var = jnp.mean((x - mu) ** 2, axis=-1, keepdims=True)
    return (x - mu) * jax.lax.rsqrt(var + EPS) * g + b


def ref_fft_block(x, pad, p):
    (wq, bq, wk, bk, wv, bv, wo, bo, g1, be1, w1, b1, w2, b2, g2, be2) = p
    B, L, D = x.shape
    q = (x @ wq + bq).reshape(B, L, N_HEAD, D_K).transpose(0, 2, 1, 3)
    k = (x @ wk + bk).reshape(B, L, N_HEAD, D_K).transpose(0, 2, 1, 3)
    v = (x @ wv + bv).reshape(B, L, N_HEAD, D_V).transpose(0, 2, 1, 3)
    s = jnp.einsum('bhqd,bhkd->bhqk', q, k) / math.sqrt(float(D_K))
    s = jnp.where(pad[:, None, None, :], NEG_INF, s)
    a = jax.nn.softmax(s, axis=-1)
    o = jnp.einsum('bhqk,bhkd->bhqd', a, v).transpose(0, 2, 1, 3).reshape(B, L, N_HEAD * D_V)
    y = _ln(o @ wo + bo + x, g1, be1)
    y = jnp.where(pad[:, :, None], 0.0, y)
    yp = jnp.pad(y, ((0, 0), (PAD1, PAD1), (0, 0)))
    hid = b1[None] + sum(jnp.einsum('bld,df->blf', yp[:, kk:kk + L, :], w1[kk]) for kk in range(K1))
    hid = jnp.maximum(hid, 0.0)
    z = _ln(hid @ w2 + b2 + y, g2, be2)
    return jnp.where(pad[:, :, None], 0.0, z)


def ref_decoder(enc_seq, mask, pos_table, layer_params):
    B, L, D = enc_seq.shape
    x = enc_seq + pos_table[:, :L, :]
    for p in layer_params:
        x = ref_fft_block(x, mask, p)
    return x


# ---------------------------------------------------------------------------
if __name__ == "__main__":
    key = jax.random.PRNGKey(0)
    k_in, k_par = jax.random.split(key)

    B, L = 2, 8
    enc_seq = jax.random.normal(k_in, (B, L, D_MODEL), dtype=jnp.float32)
    lengths = jnp.array([8, 5], dtype=jnp.int32)
    mask = jnp.arange(L)[None, :] >= lengths[:, None]          # (B, L) bool, True = padding

    pos_table = get_sinusoid_encoding_table(MAX_SEQ_LEN + 1, D_MODEL)[None]  # (1, n_position, D)
    layer_params = init_params(k_par)
    stacked_params = stack_layer_params(layer_params)

    out = decoder_forward(enc_seq, mask, pos_table, stacked_params, training=False)
    out = jax.block_until_ready(out)

    ref = ref_decoder(enc_seq, mask, pos_table, layer_params)
    assert out.shape == (B, L, D_MODEL)
    # Kernel uses bf16 matmul operands (f32 accumulation); compare against the f32
    # reference with a bf16-appropriate tolerance.
    np.testing.assert_allclose(np.asarray(out), np.asarray(ref), atol=2e-2, rtol=2e-2)

    print("KERNEL_OK")
</pallas_src>

<mosaic_0001>
module attributes {stable_mosaic.version = 11 : i64} {
  func.func @decoder_kernel(%arg0: memref<2x8x32xf32, #tpu.memory_space<vmem>>, %arg1: memref<8x32xf32, #tpu.memory_space<vmem>>, %arg2: memref<2x8xf32, #tpu.memory_space<vmem>>, %arg3: memref<16x1xf32, #tpu.memory_space<vmem>>, %arg4: memref<2x32x96xbf16, #tpu.memory_space<vmem>>, %arg5: memref<2x1x96xf32, #tpu.memory_space<vmem>>, %arg6: memref<2x2x16x32xbf16, #tpu.memory_space<vmem>>, %arg7: memref<2x1x32xf32, #tpu.memory_space<vmem>>, %arg8: memref<2x1x32xf32, #tpu.memory_space<vmem>>, %arg9: memref<2x1x32xf32, #tpu.memory_space<vmem>>, %arg10: memref<2x288x64xbf16, #tpu.memory_space<vmem>>, %arg11: memref<2x1x64xf32, #tpu.memory_space<vmem>>, %arg12: memref<2x64x32xbf16, #tpu.memory_space<vmem>>, %arg13: memref<2x1x32xf32, #tpu.memory_space<vmem>>, %arg14: memref<2x1x32xf32, #tpu.memory_space<vmem>>, %arg15: memref<2x1x32xf32, #tpu.memory_space<vmem>>, %arg16: memref<16x32xf32, #tpu.memory_space<vmem>>) attributes {dimension_semantics = [], scalar_prefetch = 0 : i64, scratch_operands = 0 : i64, tpu.core_type = #tpu.core_type<tc>} {
    %c0 = arith.constant 0 : index
    %c0_0 = arith.constant 0 : index
    %0 = vector.load %arg1[%c0, %c0_0] : memref<8x32xf32, #tpu.memory_space<vmem>>, vector<8x32xf32>
    %c0_1 = arith.constant 0 : index
    %c0_2 = arith.constant 0 : index
    %c0_3 = arith.constant 0 : index
    %1 = vector.load %arg0[%c0_1, %c0_2, %c0_3] : memref<2x8x32xf32, #tpu.memory_space<vmem>>, vector<1x8x32xf32>
    %2 = vector.shape_cast %1 : vector<1x8x32xf32> to vector<8x32xf32>
    %3 = arith.addf %2, %0 : vector<8x32xf32>
    %c1 = arith.constant 1 : index
    %c0_4 = arith.constant 0 : index
    %c0_5 = arith.constant 0 : index
    %4 = vector.load %arg0[%c1, %c0_4, %c0_5] : memref<2x8x32xf32, #tpu.memory_space<vmem>>, vector<1x8x32xf32>
    %5 = vector.shape_cast %4 : vector<1x8x32xf32> to vector<8x32xf32>
    %6 = arith.addf %5, %0 : vector<8x32xf32>
    %7 = tpu.concatenate %3, %6 in 0 : vector<8x32xf32>, vector<8x32xf32> -> vector<16x32xf32>
    %c0_6 = arith.constant 0 : index
    %c0_7 = arith.constant 0 : index
    %8 = vector.load %arg2[%c0_6, %c0_7] : memref<2x8xf32, #tpu.memory_space<vmem>>, vector<2x8xf32>
    %c0_8 = arith.constant 0 : index
    %c0_9 = arith.constant 0 : index
    %9 = vector.load %arg3[%c0_8, %c0_9] : memref<16x1xf32, #tpu.memory_space<vmem>>, vector<16x1xf32>
    %c0_10 = arith.constant 0 : index
    %c0_11 = arith.constant 0 : index
    %c0_12 = arith.constant 0 : index
    %10 = vector.load %arg4[%c0_10, %c0_11, %c0_12] : memref<2x32x96xbf16, #tpu.memory_space<vmem>>, vector<1x32x96xbf16>
    %11 = vector.shape_cast %10 : vector<1x32x96xbf16> to vector<32x96xbf16>
    %c0_13 = arith.constant 0 : index
    %c0_14 = arith.constant 0 : index
    %c0_15 = arith.constant 0 : index
    %12 = vector.load %arg5[%c0_13, %c0_14, %c0_15] : memref<2x1x96xf32, #tpu.memory_space<vmem>>, vector<1x1x96xf32>
    %13 = vector.shape_cast %12 : vector<1x1x96xf32> to vector<1x96xf32>
    %c0_16 = arith.constant 0 : index
    %c0_17 = arith.constant 0 : index
    %c0_18 = arith.constant 0 : index
    %c0_19 = arith.constant 0 : index
    %14 = vector.load %arg6[%c0_16, %c0_17, %c0_18, %c0_19] : memref<2x2x16x32xbf16, #tpu.memory_space<vmem>>, vector<1x2x16x32xbf16>
    %15 = vector.shape_cast %14 : vector<1x2x16x32xbf16> to vector<2x16x32xbf16>
    %c0_20 = arith.constant 0 : index
    %c0_21 = arith.constant 0 : index
    %c0_22 = arith.constant 0 : index
    %16 = vector.load %arg7[%c0_20, %c0_21, %c0_22] : memref<2x1x32xf32, #tpu.memory_space<vmem>>, vector<1x1x32xf32>
    %17 = vector.shape_cast %16 : vector<1x1x32xf32> to vector<1x32xf32>
    %c0_23 = arith.constant 0 : index
    %c0_24 = arith.constant 0 : index
    %c0_25 = arith.constant 0 : index
    %18 = vector.load %arg8[%c0_23, %c0_24, %c0_25] : memref<2x1x32xf32, #tpu.memory_space<vmem>>, vector<1x1x32xf32>
    %19 = vector.shape_cast %18 : vector<1x1x32xf32> to vector<1x32xf32>
    %c0_26 = arith.constant 0 : index
    %c0_27 = arith.constant 0 : index
    %c0_28 = arith.constant 0 : index
    %20 = vector.load %arg9[%c0_26, %c0_27, %c0_28] : memref<2x1x32xf32, #tpu.memory_space<vmem>>, vector<1x1x32xf32>
    %21 = vector.shape_cast %20 : vector<1x1x32xf32> to vector<1x32xf32>
    %c0_29 = arith.constant 0 : index
    %c0_30 = arith.constant 0 : index
    %c0_31 = arith.constant 0 : index
    %22 = vector.load %arg10[%c0_29, %c0_30, %c0_31] : memref<2x288x64xbf16, #tpu.memory_space<vmem>>, vector<1x288x64xbf16>
    %23 = vector.shape_cast %22 : vector<1x288x64xbf16> to vector<288x64xbf16>
    %c0_32 = arith.constant 0 : index
    %c0_33 = arith.constant 0 : index
    %c0_34 = arith.constant 0 : index
    %24 = vector.load %arg11[%c0_32, %c0_33, %c0_34] : memref<2x1x64xf32, #tpu.memory_space<vmem>>, vector<1x1x64xf32>
    %25 = vector.shape_cast %24 : vector<1x1x64xf32> to vector<1x64xf32>
    %c0_35 = arith.constant 0 : index
    %c0_36 = arith.constant 0 : index
    %c0_37 = arith.constant 0 : index
    %26 = vector.load %arg12[%c0_35, %c0_36, %c0_37] : memref<2x64x32xbf16, #tpu.memory_space<vmem>>, vector<1x64x32xbf16>
    %27 = vector.shape_cast %26 : vector<1x64x32xbf16> to vector<64x32xbf16>
    %c0_38 = arith.constant 0 : index
    %c0_39 = arith.constant 0 : index
    %c0_40 = arith.constant 0 : index
    %28 = vector.load %arg13[%c0_38, %c0_39, %c0_40] : memref<2x1x32xf32, #tpu.memory_space<vmem>>, vector<1x1x32xf32>
    %29 = vector.shape_cast %28 : vector<1x1x32xf32> to vector<1x32xf32>
    %c0_41 = arith.constant 0 : index
    %c0_42 = arith.constant 0 : index
    %c0_43 = arith.constant 0 : index
    %30 = vector.load %arg14[%c0_41, %c0_42, %c0_43] : memref<2x1x32xf32, #tpu.memory_space<vmem>>, vector<1x1x32xf32>
    %31 = vector.shape_cast %30 : vector<1x1x32xf32> to vector<1x32xf32>
    %c0_44 = arith.constant 0 : index
    %c0_45 = arith.constant 0 : index
    %c0_46 = arith.constant 0 : index
    %32 = vector.load %arg15[%c0_44, %c0_45, %c0_46] : memref<2x1x32xf32, #tpu.memory_space<vmem>>, vector<1x1x32xf32>
    %33 = vector.shape_cast %32 : vector<1x1x32xf32> to vector<1x32xf32>
    %34 = arith.truncf %7 : vector<16x32xf32> to vector<16x32xbf16>
    %cst = arith.constant dense<0.000000e+00> : vector<16x96xf32>
    %35 = tpu.matmul %34, %11, %cst {dimension_numbers = #tpu.dot_dimension_numbers<[1], [0], [0], [1], [0, 0, 1, 1], [], []>} : vector<16x32xbf16>, vector<32x96xbf16>, vector<16x96xf32> -> vector<16x96xf32>
    %36 = vector.broadcast %13 : vector<1x96xf32> to vector<16x96xf32>
    %37 = arith.addf %35, %36 : vector<16x96xf32>
    %38 = arith.truncf %37 : vector<16x96xf32> to vector<16x96xbf16>
    %39 = vector.extract_strided_slice %38 {offsets = [0, 0], sizes = [8, 96], strides = [1, 1]} : vector<16x96xbf16> to vector<8x96xbf16>
    %40 = vector.extract_strided_slice %8 {offsets = [0, 0], sizes = [1, 8], strides = [1, 1]} : vector<2x8xf32> to vector<1x8xf32>
    %cst_47 = arith.constant 0.000000e+00 : f32
    %41 = vector.broadcast %cst_47 : f32 to vector<8x32xf32>
    %42 = vector.extract_strided_slice %39 {offsets = [0, 0], sizes = [8, 16], strides = [1, 1]} : vector<8x96xbf16> to vector<8x16xbf16>
    %43 = vector.extract_strided_slice %39 {offsets = [0, 32], sizes = [8, 16], strides = [1, 1]} : vector<8x96xbf16> to vector<8x16xbf16>
    %44 = vector.extract_strided_slice %39 {offsets = [0, 64], sizes = [8, 16], strides = [1, 1]} : vector<8x96xbf16> to vector<8x16xbf16>
    "tpu.trace_start"() <{level = 10 : i32, message = "qd,kd->qk"}> : () -> ()
    %cst_48 = arith.constant dense<0.000000e+00> : vector<8x8xf32>
    %45 = tpu.matmul %42, %43, %cst_48 {dimension_numbers = #tpu.dot_dimension_numbers<[1], [1], [0], [0], [0, 0, 1, 0], [], []>} : vector<8x16xbf16>, vector<8x16xbf16>, vector<8x8xf32> -> vector<8x8xf32>
    "tpu.trace_stop"() : () -> ()
    %cst_49 = arith.constant 2.500000e-01 : f32
    %46 = vector.broadcast %cst_49 : f32 to vector<8x8xf32>
    %47 = arith.mulf %45, %46 : vector<8x8xf32>
    %48 = vector.broadcast %40 : vector<1x8xf32> to vector<8x8xf32>
    %49 = arith.addf %47, %48 : vector<8x8xf32>
    %cst_50 = arith.constant dense<0xFF800000> : vector<8xf32>
    %50 = vector.multi_reduction <maximumf>, %49, %cst_50 [1] : vector<8x8xf32> to vector<8xf32>
    %51 = vector.shape_cast %50 : vector<8xf32> to vector<8x1xf32>
    %52 = vector.broadcast %51 : vector<8x1xf32> to vector<8x8xf32>
    %53 = arith.subf %49, %52 : vector<8x8xf32>
    %54 = math.exp %53 : vector<8x8xf32>
    %cst_51 = arith.constant dense<0.000000e+00> : vector<8xf32>
    %55 = vector.multi_reduction <add>, %54, %cst_51 [1] : vector<8x8xf32> to vector<8xf32>
    %56 = vector.shape_cast %55 : vector<8xf32> to vector<8x1xf32>
    %57 = tpu.reciprocal %56 {approx = true} : vector<8x1xf32> -> vector<8x1xf32>
    %58 = vector.broadcast %57 : vector<8x1xf32> to vector<8x8xf32>
    %59 = arith.mulf %54, %58 : vector<8x8xf32>
    %60 = arith.truncf %59 : vector<8x8xf32> to vector<8x8xbf16>
    %cst_52 = arith.constant dense<0.000000e+00> : vector<8x16xf32>
    %61 = tpu.matmul %60, %44, %cst_52 {dimension_numbers = #tpu.dot_dimension_numbers<[1], [0], [0], [1], [0, 0, 1, 1], [], []>} : vector<8x8xbf16>, vector<8x16xbf16>, vector<8x16xf32> -> vector<8x16xf32>
    %62 = arith.truncf %61 : vector<8x16xf32> to vector<8x16xbf16>
    %63 = vector.extract_strided_slice %15 {offsets = [0, 0, 0], sizes = [1, 16, 32], strides = [1, 1, 1]} : vector<2x16x32xbf16> to vector<1x16x32xbf16>
    %64 = vector.shape_cast %63 : vector<1x16x32xbf16> to vector<16x32xbf16>
    %cst_53 = arith.constant dense<0.000000e+00> : vector<8x32xf32>
    %65 = tpu.matmul %62, %64, %cst_53 {dimension_numbers = #tpu.dot_dimension_numbers<[1], [0], [0], [1], [0, 0, 1, 1], [], []>} : vector<8x16xbf16>, vector<16x32xbf16>, vector<8x32xf32> -> vector<8x32xf32>
    %66 = arith.addf %41, %65 : vector<8x32xf32>
    %67 = vector.extract_strided_slice %39 {offsets = [0, 16], sizes = [8, 16], strides = [1, 1]} : vector<8x96xbf16> to vector<8x16xbf16>
    %68 = vector.extract_strided_slice %39 {offsets = [0, 48], sizes = [8, 16], strides = [1, 1]} : vector<8x96xbf16> to vector<8x16xbf16>
    %69 = vector.extract_strided_slice %39 {offsets = [0, 80], sizes = [8, 16], strides = [1, 1]} : vector<8x96xbf16> to vector<8x16xbf16>
    "tpu.trace_start"() <{level = 10 : i32, message = "qd,kd->qk"}> : () -> ()
    %cst_54 = arith.constant dense<0.000000e+00> : vector<8x8xf32>
    %70 = tpu.matmul %67, %68, %cst_54 {dimension_numbers = #tpu.dot_dimension_numbers<[1], [1], [0], [0], [0, 0, 1, 0], [], []>} : vector<8x16xbf16>, vector<8x16xbf16>, vector<8x8xf32> -> vector<8x8xf32>
    "tpu.trace_stop"() : () -> ()
    %cst_55 = arith.constant 2.500000e-01 : f32
    %71 = vector.broadcast %cst_55 : f32 to vector<8x8xf32>
    %72 = arith.mulf %70, %71 : vector<8x8xf32>
    %73 = vector.broadcast %40 : vector<1x8xf32> to vector<8x8xf32>
    %74 = arith.addf %72, %73 : vector<8x8xf32>
    %cst_56 = arith.constant dense<0xFF800000> : vector<8xf32>
    %75 = vector.multi_reduction <maximumf>, %74, %cst_56 [1] : vector<8x8xf32> to vector<8xf32>
    %76 = vector.shape_cast %75 : vector<8xf32> to vector<8x1xf32>
    %77 = vector.broadcast %76 : vector<8x1xf32> to vector<8x8xf32>
    %78 = arith.subf %74, %77 : vector<8x8xf32>
    %79 = math.exp %78 : vector<8x8xf32>
    %cst_57 = arith.constant dense<0.000000e+00> : vector<8xf32>
    %80 = vector.multi_reduction <add>, %79, %cst_57 [1] : vector<8x8xf32> to vector<8xf32>
    %81 = vector.shape_cast %80 : vector<8xf32> to vector<8x1xf32>
    %82 = tpu.reciprocal %81 {approx = true} : vector<8x1xf32> -> vector<8x1xf32>
    %83 = vector.broadcast %82 : vector<8x1xf32> to vector<8x8xf32>
    %84 = arith.mulf %79, %83 : vector<8x8xf32>
    %85 = arith.truncf %84 : vector<8x8xf32> to vector<8x8xbf16>
    %cst_58 = arith.constant dense<0.000000e+00> : vector<8x16xf32>
    %86 = tpu.matmul %85, %69, %cst_58 {dimension_numbers = #tpu.dot_dimension_numbers<[1], [0], [0], [1], [0, 0, 1, 1], [], []>} : vector<8x8xbf16>, vector<8x16xbf16>, vector<8x16xf32> -> vector<8x16xf32>
    %87 = arith.truncf %86 : vector<8x16xf32> to vector<8x16xbf16>
    %88 = vector.extract_strided_slice %15 {offsets = [1, 0, 0], sizes = [1, 16, 32], strides = [1, 1, 1]} : vector<2x16x32xbf16> to vector<1x16x32xbf16>
    %89 = vector.shape_cast %88 : vector<1x16x32xbf16> to vector<16x32xbf16>
    %cst_59 = arith.constant dense<0.000000e+00> : vector<8x32xf32>
    %90 = tpu.matmul %87, %89, %cst_59 {dimension_numbers = #tpu.dot_dimension_numbers<[1], [0], [0], [1], [0, 0, 1, 1], [], []>} : vector<8x16xbf16>, vector<16x32xbf16>, vector<8x32xf32> -> vector<8x32xf32>
    %91 = arith.addf %66, %90 : vector<8x32xf32>
    %92 = vector.extract_strided_slice %38 {offsets = [8, 0], sizes = [8, 96], strides = [1, 1]} : vector<16x96xbf16> to vector<8x96xbf16>
    %93 = vector.extract_strided_slice %8 {offsets = [1, 0], sizes = [1, 8], strides = [1, 1]} : vector<2x8xf32> to vector<1x8xf32>
    %cst_60 = arith.constant 0.000000e+00 : f32
    %94 = vector.broadcast %cst_60 : f32 to vector<8x32xf32>
    %95 = vector.extract_strided_slice %92 {offsets = [0, 0], sizes = [8, 16], strides = [1, 1]} : vector<8x96xbf16> to vector<8x16xbf16>
    %96 = vector.extract_strided_slice %92 {offsets = [0, 32], sizes = [8, 16], strides = [1, 1]} : vector<8x96xbf16> to vector<8x16xbf16>
    %97 = vector.extract_strided_slice %92 {offsets = [0, 64], sizes = [8, 16], strides = [1, 1]} : vector<8x96xbf16> to vector<8x16xbf16>
    "tpu.trace_start"() <{level = 10 : i32, message = "qd,kd->qk"}> : () -> ()
    %cst_61 = arith.constant dense<0.000000e+00> : vector<8x8xf32>
    %98 = tpu.matmul %95, %96, %cst_61 {dimension_numbers = #tpu.dot_dimension_numbers<[1], [1], [0], [0], [0, 0, 1, 0], [], []>} : vector<8x16xbf16>, vector<8x16xbf16>, vector<8x8xf32> -> vector<8x8xf32>
    "tpu.trace_stop"() : () -> ()
    %cst_62 = arith.constant 2.500000e-01 : f32
    %99 = vector.broadcast %cst_62 : f32 to vector<8x8xf32>
    %100 = arith.mulf %98, %99 : vector<8x8xf32>
    %101 = vector.broadcast %93 : vector<1x8xf32> to vector<8x8xf32>
    %102 = arith.addf %100, %101 : vector<8x8xf32>
    %cst_63 = arith.constant dense<0xFF800000> : vector<8xf32>
    %103 = vector.multi_reduction <maximumf>, %102, %cst_63 [1] : vector<8x8xf32> to vector<8xf32>
    %104 = vector.shape_cast %103 : vector<8xf32> to vector<8x1xf32>
    %105 = vector.broadcast %104 : vector<8x1xf32> to vector<8x8xf32>
    %106 = arith.subf %102, %105 : vector<8x8xf32>
    %107 = math.exp %106 : vector<8x8xf32>
    %cst_64 = arith.constant dense<0.000000e+00> : vector<8xf32>
    %108 = vector.multi_reduction <add>, %107, %cst_64 [1] : vector<8x8xf32> to vector<8xf32>
    %109 = vector.shape_cast %108 : vector<8xf32> to vector<8x1xf32>
    %110 = tpu.reciprocal %109 {approx = true} : vector<8x1xf32> -> vector<8x1xf32>
    %111 = vector.broadcast %110 : vector<8x1xf32> to vector<8x8xf32>
    %112 = arith.mulf %107, %111 : vector<8x8xf32>
    %113 = arith.truncf %112 : vector<8x8xf32> to vector<8x8xbf16>
    %cst_65 = arith.constant dense<0.000000e+00> : vector<8x16xf32>
    %114 = tpu.matmul %113, %97, %cst_65 {dimension_numbers = #tpu.dot_dimension_numbers<[1], [0], [0], [1], [0, 0, 1, 1], [], []>} : vector<8x8xbf16>, vector<8x16xbf16>, vector<8x16xf32> -> vector<8x16xf32>
    %115 = arith.truncf %114 : vector<8x16xf32> to vector<8x16xbf16>
    %116 = vector.extract_strided_slice %15 {offsets = [0, 0, 0], sizes = [1, 16, 32], strides = [1, 1, 1]} : vector<2x16x32xbf16> to vector<1x16x32xbf16>
    %117 = vector.shape_cast %116 : vector<1x16x32xbf16> to vector<16x32xbf16>
    %cst_66 = arith.constant dense<0.000000e+00> : vector<8x32xf32>
    %118 = tpu.matmul %115, %117, %cst_66 {dimension_numbers = #tpu.dot_dimension_numbers<[1], [0], [0], [1], [0, 0, 1, 1], [], []>} : vector<8x16xbf16>, vector<16x32xbf16>, vector<8x32xf32> -> vector<8x32xf32>
    %119 = arith.addf %94, %118 : vector<8x32xf32>
    %120 = vector.extract_strided_slice %92 {offsets = [0, 16], sizes = [8, 16], strides = [1, 1]} : vector<8x96xbf16> to vector<8x16xbf16>
    %121 = vector.extract_strided_slice %92 {offsets = [0, 48], sizes = [8, 16], strides = [1, 1]} : vector<8x96xbf16> to vector<8x16xbf16>
    %122 = vector.extract_strided_slice %92 {offsets = [0, 80], sizes = [8, 16], strides = [1, 1]} : vector<8x96xbf16> to vector<8x16xbf16>
    "tpu.trace_start"() <{level = 10 : i32, message = "qd,kd->qk"}> : () -> ()
    %cst_67 = arith.constant dense<0.000000e+00> : vector<8x8xf32>
    %123 = tpu.matmul %120, %121, %cst_67 {dimension_numbers = #tpu.dot_dimension_numbers<[1], [1], [0], [0], [0, 0, 1, 0], [], []>} : vector<8x16xbf16>, vector<8x16xbf16>, vector<8x8xf32> -> vector<8x8xf32>
    "tpu.trace_stop"() : () -> ()
    %cst_68 = arith.constant 2.500000e-01 : f32
    %124 = vector.broadcast %cst_68 : f32 to vector<8x8xf32>
    %125 = arith.mulf %123, %124 : vector<8x8xf32>
    %126 = vector.broadcast %93 : vector<1x8xf32> to vector<8x8xf32>
    %127 = arith.addf %125, %126 : vector<8x8xf32>
    %cst_69 = arith.constant dense<0xFF800000> : vector<8xf32>
    %128 = vector.multi_reduction <maximumf>, %127, %cst_69 [1] : vector<8x8xf32> to vector<8xf32>
    %129 = vector.shape_cast %128 : vector<8xf32> to vector<8x1xf32>
    %130 = vector.broadcast %129 : vector<8x1xf32> to vector<8x8xf32>
    %131 = arith.subf %127, %130 : vector<8x8xf32>
    %132 = math.exp %131 : vector<8x8xf32>
    %cst_70 = arith.constant dense<0.000000e+00> : vector<8xf32>
    %133 = vector.multi_reduction <add>, %132, %cst_70 [1] : vector<8x8xf32> to vector<8xf32>
    %134 = vector.shape_cast %133 : vector<8xf32> to vector<8x1xf32>
    %135 = tpu.reciprocal %134 {approx = true} : vector<8x1xf32> -> vector<8x1xf32>
    %136 = vector.broadcast %135 : vector<8x1xf32> to vector<8x8xf32>
    %137 = arith.mulf %132, %136 : vector<8x8xf32>
    %138 = arith.truncf %137 : vector<8x8xf32> to vector<8x8xbf16>
    %cst_71 = arith.constant dense<0.000000e+00> : vector<8x16xf32>
    %139 = tpu.matmul %138, %122, %cst_71 {dimension_numbers = #tpu.dot_dimension_numbers<[1], [0], [0], [1], [0, 0, 1, 1], [], []>} : vector<8x8xbf16>, vector<8x16xbf16>, vector<8x16xf32> -> vector<8x16xf32>
    %140 = arith.truncf %139 : vector<8x16xf32> to vector<8x16xbf16>
    %141 = vector.extract_strided_slice %15 {offsets = [1, 0, 0], sizes = [1, 16, 32], strides = [1, 1, 1]} : vector<2x16x32xbf16> to vector<1x16x32xbf16>
    %142 = vector.shape_cast %141 : vector<1x16x32xbf16> to vector<16x32xbf16>
    %cst_72 = arith.constant dense<0.000000e+00> : vector<8x32xf32>
    %143 = tpu.matmul %140, %142, %cst_72 {dimension_numbers = #tpu.dot_dimension_numbers<[1], [0], [0], [1], [0, 0, 1, 1], [], []>} : vector<8x16xbf16>, vector<16x32xbf16>, vector<8x32xf32> -> vector<8x32xf32>
    %144 = arith.addf %119, %143 : vector<8x32xf32>
    %145 = tpu.concatenate %91, %144 in 0 : vector<8x32xf32>, vector<8x32xf32> -> vector<16x32xf32>
    %146 = vector.broadcast %17 : vector<1x32xf32> to vector<16x32xf32>
    %147 = arith.addf %145, %146 : vector<16x32xf32>
    %148 = arith.addf %147, %7 : vector<16x32xf32>
    %cst_73 = arith.constant dense<0.000000e+00> : vector<16xf32>
    %149 = vector.multi_reduction <add>, %148, %cst_73 [1] : vector<16x32xf32> to vector<16xf32>
    %150 = vector.shape_cast %149 : vector<16xf32> to vector<16x1xf32>
    %cst_74 = arith.constant 3.200000e+01 : f32
    %151 = vector.broadcast %cst_74 : f32 to vector<16x1xf32>
    %152 = arith.divf %150, %151 : vector<16x1xf32>
    %153 = vector.broadcast %152 : vector<16x1xf32> to vector<16x32xf32>
    %154 = arith.subf %148, %153 : vector<16x32xf32>
    %155 = vector.broadcast %152 : vector<16x1xf32> to vector<16x32xf32>
    %156 = arith.subf %148, %155 : vector<16x32xf32>
    %157 = arith.mulf %154, %156 : vector<16x32xf32>
    %cst_75 = arith.constant dense<0.000000e+00> : vector<16xf32>
    %158 = vector.multi_reduction <add>, %157, %cst_75 [1] : vector<16x32xf32> to vector<16xf32>
    %159 = vector.shape_cast %158 : vector<16xf32> to vector<16x1xf32>
    %cst_76 = arith.constant 3.200000e+01 : f32
    %160 = vector.broadcast %cst_76 : f32 to vector<16x1xf32>
    %161 = arith.divf %159, %160 : vector<16x1xf32>
    %162 = vector.broadcast %152 : vector<16x1xf32> to vector<16x32xf32>
    %163 = arith.subf %148, %162 : vector<16x32xf32>
    %cst_77 = arith.constant 9.99999974E-6 : f32
    %164 = vector.broadcast %cst_77 : f32 to vector<16x1xf32>
    %165 = arith.addf %161, %164 : vector<16x1xf32>
    %166 = math.rsqrt %165 : vector<16x1xf32>
    %167 = vector.broadcast %166 : vector<16x1xf32> to vector<16x32xf32>
    %168 = arith.mulf %163, %167 : vector<16x32xf32>
    %169 = vector.broadcast %19 : vector<1x32xf32> to vector<16x32xf32>
    %170 = arith.mulf %168, %169 : vector<16x32xf32>
    %171 = vector.broadcast %21 : vector<1x32xf32> to vector<16x32xf32>
    %172 = arith.addf %170, %171 : vector<16x32xf32>
    %173 = vector.broadcast %9 : vector<16x1xf32> to vector<16x32xf32>
    %174 = arith.mulf %172, %173 : vector<16x32xf32>
    %cst_78 = arith.constant 0.000000e+00 : bf16
    %175 = vector.broadcast %cst_78 : bf16 to vector<4x32xbf16>
    %176 = vector.extract_strided_slice %174 {offsets = [0, 0], sizes = [8, 32], strides = [1, 1]} : vector<16x32xf32> to vector<8x32xf32>
    %177 = arith.truncf %176 : vector<8x32xf32> to vector<8x32xbf16>
    %178 = tpu.concatenate %175, %177, %175 in 0 : vector<4x32xbf16>, vector<8x32xbf16>, vector<4x32xbf16> -> vector<16x32xbf16>
    %179 = vector.extract_strided_slice %178 {offsets = [0, 0], sizes = [8, 32], strides = [1, 1]} : vector<16x32xbf16> to vector<8x32xbf16>
    %180 = vector.extract_strided_slice %178 {offsets = [1, 0], sizes = [8, 32], strides = [1, 1]} : vector<16x32xbf16> to vector<8x32xbf16>
    %181 = vector.extract_strided_slice %178 {offsets = [2, 0], sizes = [8, 32], strides = [1, 1]} : vector<16x32xbf16> to vector<8x32xbf16>
    %182 = vector.extract_strided_slice %178 {offsets = [3, 0], sizes = [8, 32], strides = [1, 1]} : vector<16x32xbf16> to vector<8x32xbf16>
    %183 = vector.extract_strided_slice %178 {offsets = [4, 0], sizes = [8, 32], strides = [1, 1]} : vector<16x32xbf16> to vector<8x32xbf16>
    %184 = vector.extract_strided_slice %178 {offsets = [5, 0], sizes = [8, 32], strides = [1, 1]} : vector<16x32xbf16> to vector<8x32xbf16>
    %185 = vector.extract_strided_slice %178 {offsets = [6, 0], sizes = [8, 32], strides = [1, 1]} : vector<16x32xbf16> to vector<8x32xbf16>
    %186 = vector.extract_strided_slice %178 {offsets = [7, 0], sizes = [8, 32], strides = [1, 1]} : vector<16x32xbf16> to vector<8x32xbf16>
    %187 = vector.extract_strided_slice %178 {offsets = [8, 0], sizes = [8, 32], strides = [1, 1]} : vector<16x32xbf16> to vector<8x32xbf16>
    %188 = tpu.concatenate %179, %180, %181, %182, %183, %184, %185, %186, %187 in 1 : vector<8x32xbf16>, vector<8x32xbf16>, vector<8x32xbf16>, vector<8x32xbf16>, vector<8x32xbf16>, vector<8x32xbf16>, vector<8x32xbf16>, vector<8x32xbf16>, vector<8x32xbf16> -> vector<8x288xbf16>
    %189 = vector.extract_strided_slice %174 {offsets = [8, 0], sizes = [8, 32], strides = [1, 1]} : vector<16x32xf32> to vector<8x32xf32>
    %190 = arith.truncf %189 : vector<8x32xf32> to vector<8x32xbf16>
    %191 = tpu.concatenate %175, %190, %175 in 0 : vector<4x32xbf16>, vector<8x32xbf16>, vector<4x32xbf16> -> vector<16x32xbf16>
    %192 = vector.extract_strided_slice %191 {offsets = [0, 0], sizes = [8, 32], strides = [1, 1]} : vector<16x32xbf16> to vector<8x32xbf16>
    %193 = vector.extract_strided_slice %191 {offsets = [1, 0], sizes = [8, 32], strides = [1, 1]} : vector<16x32xbf16> to vector<8x32xbf16>
    %194 = vector.extract_strided_slice %191 {offsets = [2, 0], sizes = [8, 32], strides = [1, 1]} : vector<16x32xbf16> to vector<8x32xbf16>
    %195 = vector.extract_strided_slice %191 {offsets = [3, 0], sizes = [8, 32], strides = [1, 1]} : vector<16x32xbf16> to vector<8x32xbf16>
    %196 = vector.extract_strided_slice %191 {offsets = [4, 0], sizes = [8, 32], strides = [1, 1]} : vector<16x32xbf16> to vector<8x32xbf16>
    %197 = vector.extract_strided_slice %191 {offsets = [5, 0], sizes = [8, 32], strides = [1, 1]} : vector<16x32xbf16> to vector<8x32xbf16>
    %198 = vector.extract_strided_slice %191 {offsets = [6, 0], sizes = [8, 32], strides = [1, 1]} : vector<16x32xbf16> to vector<8x32xbf16>
    %199 = vector.extract_strided_slice %191 {offsets = [7, 0], sizes = [8, 32], strides = [1, 1]} : vector<16x32xbf16> to vector<8x32xbf16>
    %200 = vector.extract_strided_slice %191 {offsets = [8, 0], sizes = [8, 32], strides = [1, 1]} : vector<16x32xbf16> to vector<8x32xbf16>
    %201 = tpu.concatenate %192, %193, %194, %195, %196, %197, %198, %199, %200 in 1 : vector<8x32xbf16>, vector<8x32xbf16>, vector<8x32xbf16>, vector<8x32xbf16>, vector<8x32xbf16>, vector<8x32xbf16>, vector<8x32xbf16>, vector<8x32xbf16>, vector<8x32xbf16> -> vector<8x288xbf16>
    %202 = tpu.concatenate %188, %201 in 0 : vector<8x288xbf16>, vector<8x288xbf16> -> vector<16x288xbf16>
    %cst_79 = arith.constant dense<0.000000e+00> : vector<16x64xf32>
    %203 = tpu.matmul %202, %23, %cst_79 {dimension_numbers = #tpu.dot_dimension_numbers<[1], [0], [0], [1], [0, 0, 1, 1], [], []>} : vector<16x288xbf16>, vector<288x64xbf16>, vector<16x64xf32> -> vector<16x64xf32>
    %204 = vector.broadcast %25 : vector<1x64xf32> to vector<16x64xf32>
    %205 = arith.addf %203, %204 : vector<16x64xf32>
    %cst_80 = arith.constant 0.000000e+00 : f32
    %206 = vector.broadcast %cst_80 : f32 to vector<16x64xf32>
    %207 = arith.maximumf %205, %206 : vector<16x64xf32>
    %208 = arith.truncf %207 : vector<16x64xf32> to vector<16x64xbf16>
    %cst_81 = arith.constant dense<0.000000e+00> : vector<16x32xf32>
    %209 = tpu.matmul %208, %27, %cst_81 {dimension_numbers = #tpu.dot_dimension_numbers<[1], [0], [0], [1], [0, 0, 1, 1], [], []>} : vector<16x64xbf16>, vector<64x32xbf16>, vector<16x32xf32> -> vector<16x32xf32>
    %210 = vector.broadcast %29 : vector<1x32xf32> to vector<16x32xf32>
    %211 = arith.addf %209, %210 : vector<16x32xf32>
    %212 = arith.addf %211, %174 : vector<16x32xf32>
    %cst_82 = arith.constant dense<0.000000e+00> : vector<16xf32>
    %213 = vector.multi_reduction <add>, %212, %cst_82 [1] : vector<16x32xf32> to vector<16xf32>
    %214 = vector.shape_cast %213 : vector<16xf32> to vector<16x1xf32>
    %cst_83 = arith.constant 3.200000e+01 : f32
    %215 = vector.broadcast %cst_83 : f32 to vector<16x1xf32>
    %216 = arith.divf %214, %215 : vector<16x1xf32>
    %217 = vector.broadcast %216 : vector<16x1xf32> to vector<16x32xf32>
    %218 = arith.subf %212, %217 : vector<16x32xf32>
    %219 = vector.broadcast %216 : vector<16x1xf32> to vector<16x32xf32>
    %220 = arith.subf %212, %219 : vector<16x32xf32>
    %221 = arith.mulf %218, %220 : vector<16x32xf32>
    %cst_84 = arith.constant dense<0.000000e+00> : vector<16xf32>
    %222 = vector.multi_reduction <add>, %221, %cst_84 [1] : vector<16x32xf32> to vector<16xf32>
    %223 = vector.shape_cast %222 : vector<16xf32> to vector<16x1xf32>
    %cst_85 = arith.constant 3.200000e+01 : f32
    %224 = vector.broadcast %cst_85 : f32 to vector<16x1xf32>
    %225 = arith.divf %223, %224 : vector<16x1xf32>
    %226 = vector.broadcast %216 : vector<16x1xf32> to vector<16x32xf32>
    %227 = arith.subf %212, %226 : vector<16x32xf32>
    %cst_86 = arith.constant 9.99999974E-6 : f32
    %228 = vector.broadcast %cst_86 : f32 to vector<16x1xf32>
    %229 = arith.addf %225, %228 : vector<16x1xf32>
    %230 = math.rsqrt %229 : vector<16x1xf32>
    %231 = vector.broadcast %230 : vector<16x1xf32> to vector<16x32xf32>
    %232 = arith.mulf %227, %231 : vector<16x32xf32>
    %233 = vector.broadcast %31 : vector<1x32xf32> to vector<16x32xf32>
    %234 = arith.mulf %232, %233 : vector<16x32xf32>
    %235 = vector.broadcast %33 : vector<1x32xf32> to vector<16x32xf32>
    %236 = arith.addf %234, %235 : vector<16x32xf32>
    %237 = vector.broadcast %9 : vector<16x1xf32> to vector<16x32xf32>
    %238 = arith.mulf %236, %237 : vector<16x32xf32>
    %c1_87 = arith.constant 1 : index
    %c0_88 = arith.constant 0 : index
    %c0_89 = arith.constant 0 : index
    %239 = vector.load %arg4[%c1_87, %c0_88, %c0_89] : memref<2x32x96xbf16, #tpu.memory_space<vmem>>, vector<1x32x96xbf16>
    %240 = vector.shape_cast %239 : vector<1x32x96xbf16> to vector<32x96xbf16>
    %c1_90 = arith.constant 1 : index
    %c0_91 = arith.constant 0 : index
    %c0_92 = arith.constant 0 : index
    %241 = vector.load %arg5[%c1_90, %c0_91, %c0_92] : memref<2x1x96xf32, #tpu.memory_space<vmem>>, vector<1x1x96xf32>
    %242 = vector.shape_cast %241 : vector<1x1x96xf32> to vector<1x96xf32>
    %c1_93 = arith.constant 1 : index
    %c0_94 = arith.constant 0 : index
    %c0_95 = arith.constant 0 : index
    %c0_96 = arith.constant 0 : index
    %243 = vector.load %arg6[%c1_93, %c0_94, %c0_95, %c0_96] : memref<2x2x16x32xbf16, #tpu.memory_space<vmem>>, vector<1x2x16x32xbf16>
    %244 = vector.shape_cast %243 : vector<1x2x16x32xbf16> to vector<2x16x32xbf16>
    %c1_97 = arith.constant 1 : index
    %c0_98 = arith.constant 0 : index
    %c0_99 = arith.constant 0 : index
    %245 = vector.load %arg7[%c1_97, %c0_98, %c0_99] : memref<2x1x32xf32, #tpu.memory_space<vmem>>, vector<1x1x32xf32>
    %246 = vector.shape_cast %245 : vector<1x1x32xf32> to vector<1x32xf32>
    %c1_100 = arith.constant 1 : index
    %c0_101 = arith.constant 0 : index
    %c0_102 = arith.constant 0 : index
    %247 = vector.load %arg8[%c1_100, %c0_101, %c0_102] : memref<2x1x32xf32, #tpu.memory_space<vmem>>, vector<1x1x32xf32>
    %248 = vector.shape_cast %247 : vector<1x1x32xf32> to vector<1x32xf32>
    %c1_103 = arith.constant 1 : index
    %c0_104 = arith.constant 0 : index
    %c0_105 = arith.constant 0 : index
    %249 = vector.load %arg9[%c1_103, %c0_104, %c0_105] : memref<2x1x32xf32, #tpu.memory_space<vmem>>, vector<1x1x32xf32>
    %250 = vector.shape_cast %249 : vector<1x1x32xf32> to vector<1x32xf32>
    %c1_106 = arith.constant 1 : index
    %c0_107 = arith.constant 0 : index
    %c0_108 = arith.constant 0 : index
    %251 = vector.load %arg10[%c1_106, %c0_107, %c0_108] : memref<2x288x64xbf16, #tpu.memory_space<vmem>>, vector<1x288x64xbf16>
    %252 = vector.shape_cast %251 : vector<1x288x64xbf16> to vector<288x64xbf16>
    %c1_109 = arith.constant 1 : index
    %c0_110 = arith.constant 0 : index
    %c0_111 = arith.constant 0 : index
    %253 = vector.load %arg11[%c1_109, %c0_110, %c0_111] : memref<2x1x64xf32, #tpu.memory_space<vmem>>, vector<1x1x64xf32>
    %254 = vector.shape_cast %253 : vector<1x1x64xf32> to vector<1x64xf32>
    %c1_112 = arith.constant 1 : index
    %c0_113 = arith.constant 0 : index
    %c0_114 = arith.constant 0 : index
    %255 = vector.load %arg12[%c1_112, %c0_113, %c0_114] : memref<2x64x32xbf16, #tpu.memory_space<vmem>>, vector<1x64x32xbf16>
    %256 = vector.shape_cast %255 : vector<1x64x32xbf16> to vector<64x32xbf16>
    %c1_115 = arith.constant 1 : index
    %c0_116 = arith.constant 0 : index
    %c0_117 = arith.constant 0 : index
    %257 = vector.load %arg13[%c1_115, %c0_116, %c0_117] : memref<2x1x32xf32, #tpu.memory_space<vmem>>, vector<1x1x32xf32>
    %258 = vector.shape_cast %257 : vector<1x1x32xf32> to vector<1x32xf32>
    %c1_118 = arith.constant 1 : index
    %c0_119 = arith.constant 0 : index
    %c0_120 = arith.constant 0 : index
    %259 = vector.load %arg14[%c1_118, %c0_119, %c0_120] : memref<2x1x32xf32, #tpu.memory_space<vmem>>, vector<1x1x32xf32>
    %260 = vector.shape_cast %259 : vector<1x1x32xf32> to vector<1x32xf32>
    %c1_121 = arith.constant 1 : index
    %c0_122 = arith.constant 0 : index
    %c0_123 = arith.constant 0 : index
    %261 = vector.load %arg15[%c1_121, %c0_122, %c0_123] : memref<2x1x32xf32, #tpu.memory_space<vmem>>, vector<1x1x32xf32>
    %262 = vector.shape_cast %261 : vector<1x1x32xf32> to vector<1x32xf32>
    %263 = arith.truncf %238 : vector<16x32xf32> to vector<16x32xbf16>
    %cst_124 = arith.constant dense<0.000000e+00> : vector<16x96xf32>
    %264 = tpu.matmul %263, %240, %cst_124 {dimension_numbers = #tpu.dot_dimension_numbers<[1], [0], [0], [1], [0, 0, 1, 1], [], []>} : vector<16x32xbf16>, vector<32x96xbf16>, vector<16x96xf32> -> vector<16x96xf32>
    %265 = vector.broadcast %242 : vector<1x96xf32> to vector<16x96xf32>
    %266 = arith.addf %264, %265 : vector<16x96xf32>
    %267 = arith.truncf %266 : vector<16x96xf32> to vector<16x96xbf16>
    %268 = vector.extract_strided_slice %267 {offsets = [0, 0], sizes = [8, 96], strides = [1, 1]} : vector<16x96xbf16> to vector<8x96xbf16>
    %269 = vector.extract_strided_slice %8 {offsets = [0, 0], sizes = [1, 8], strides = [1, 1]} : vector<2x8xf32> to vector<1x8xf32>
    %cst_125 = arith.constant 0.000000e+00 : f32
    %270 = vector.broadcast %cst_125 : f32 to vector<8x32xf32>
    %271 = vector.extract_strided_slice %268 {offsets = [0, 0], sizes = [8, 16], strides = [1, 1]} : vector<8x96xbf16> to vector<8x16xbf16>
    %272 = vector.extract_strided_slice %268 {offsets = [0, 32], sizes = [8, 16], strides = [1, 1]} : vector<8x96xbf16> to vector<8x16xbf16>
    %273 = vector.extract_strided_slice %268 {offsets = [0, 64], sizes = [8, 16], strides = [1, 1]} : vector<8x96xbf16> to vector<8x16xbf16>
    "tpu.trace_start"() <{level = 10 : i32, message = "qd,kd->qk"}> : () -> ()
    %cst_126 = arith.constant dense<0.000000e+00> : vector<8x8xf32>
    %274 = tpu.matmul %271, %272, %cst_126 {dimension_numbers = #tpu.dot_dimension_numbers<[1], [1], [0], [0], [0, 0, 1, 0], [], []>} : vector<8x16xbf16>, vector<8x16xbf16>, vector<8x8xf32> -> vector<8x8xf32>
    "tpu.trace_stop"() : () -> ()
    %cst_127 = arith.constant 2.500000e-01 : f32
    %275 = vector.broadcast %cst_127 : f32 to vector<8x8xf32>
    %276 = arith.mulf %274, %275 : vector<8x8xf32>
    %277 = vector.broadcast %269 : vector<1x8xf32> to vector<8x8xf32>
    %278 = arith.addf %276, %277 : vector<8x8xf32>
    %cst_128 = arith.constant dense<0xFF800000> : vector<8xf32>
    %279 = vector.multi_reduction <maximumf>, %278, %cst_128 [1] : vector<8x8xf32> to vector<8xf32>
    %280 = vector.shape_cast %279 : vector<8xf32> to vector<8x1xf32>
    %281 = vector.broadcast %280 : vector<8x1xf32> to vector<8x8xf32>
    %282 = arith.subf %278, %281 : vector<8x8xf32>
    %283 = math.exp %282 : vector<8x8xf32>
    %cst_129 = arith.constant dense<0.000000e+00> : vector<8xf32>
    %284 = vector.multi_reduction <add>, %283, %cst_129 [1] : vector<8x8xf32> to vector<8xf32>
    %285 = vector.shape_cast %284 : vector<8xf32> to vector<8x1xf32>
    %286 = tpu.reciprocal %285 {approx = true} : vector<8x1xf32> -> vector<8x1xf32>
    %287 = vector.broadcast %286 : vector<8x1xf32> to vector<8x8xf32>
    %288 = arith.mulf %283, %287 : vector<8x8xf32>
    %289 = arith.truncf %288 : vector<8x8xf32> to vector<8x8xbf16>
    %cst_130 = arith.constant dense<0.000000e+00> : vector<8x16xf32>
    %290 = tpu.matmul %289, %273, %cst_130 {dimension_numbers = #tpu.dot_dimension_numbers<[1], [0], [0], [1], [0, 0, 1, 1], [], []>} : vector<8x8xbf16>, vector<8x16xbf16>, vector<8x16xf32> -> vector<8x16xf32>
    %291 = arith.truncf %290 : vector<8x16xf32> to vector<8x16xbf16>
    %292 = vector.extract_strided_slice %244 {offsets = [0, 0, 0], sizes = [1, 16, 32], strides = [1, 1, 1]} : vector<2x16x32xbf16> to vector<1x16x32xbf16>
    %293 = vector.shape_cast %292 : vector<1x16x32xbf16> to vector<16x32xbf16>
    %cst_131 = arith.constant dense<0.000000e+00> : vector<8x32xf32>
    %294 = tpu.matmul %291, %293, %cst_131 {dimension_numbers = #tpu.dot_dimension_numbers<[1], [0], [0], [1], [0, 0, 1, 1], [], []>} : vector<8x16xbf16>, vector<16x32xbf16>, vector<8x32xf32> -> vector<8x32xf32>
    %295 = arith.addf %270, %294 : vector<8x32xf32>
    %296 = vector.extract_strided_slice %268 {offsets = [0, 16], sizes = [8, 16], strides = [1, 1]} : vector<8x96xbf16> to vector<8x16xbf16>
    %297 = vector.extract_strided_slice %268 {offsets = [0, 48], sizes = [8, 16], strides = [1, 1]} : vector<8x96xbf16> to vector<8x16xbf16>
    %298 = vector.extract_strided_slice %268 {offsets = [0, 80], sizes = [8, 16], strides = [1, 1]} : vector<8x96xbf16> to vector<8x16xbf16>
    "tpu.trace_start"() <{level = 10 : i32, message = "qd,kd->qk"}> : () -> ()
    %cst_132 = arith.constant dense<0.000000e+00> : vector<8x8xf32>
    %299 = tpu.matmul %296, %297, %cst_132 {dimension_numbers = #tpu.dot_dimension_numbers<[1], [1], [0], [0], [0, 0, 1, 0], [], []>} : vector<8x16xbf16>, vector<8x16xbf16>, vector<8x8xf32> -> vector<8x8xf32>
    "tpu.trace_stop"() : () -> ()
    %cst_133 = arith.constant 2.500000e-01 : f32
    %300 = vector.broadcast %cst_133 : f32 to vector<8x8xf32>
    %301 = arith.mulf %299, %300 : vector<8x8xf32>
    %302 = vector.broadcast %269 : vector<1x8xf32> to vector<8x8xf32>
    %303 = arith.addf %301, %302 : vector<8x8xf32>
    %cst_134 = arith.constant dense<0xFF800000> : vector<8xf32>
    %304 = vector.multi_reduction <maximumf>, %303, %cst_134 [1] : vector<8x8xf32> to vector<8xf32>
    %305 = vector.shape_cast %304 : vector<8xf32> to vector<8x1xf32>
    %306 = vector.broadcast %305 : vector<8x1xf32> to vector<8x8xf32>
    %307 = arith.subf %303, %306 : vector<8x8xf32>
    %308 = math.exp %307 : vector<8x8xf32>
    %cst_135 = arith.constant dense<0.000000e+00> : vector<8xf32>
    %309 = vector.multi_reduction <add>, %308, %cst_135 [1] : vector<8x8xf32> to vector<8xf32>
    %310 = vector.shape_cast %309 : vector<8xf32> to vector<8x1xf32>
    %311 = tpu.reciprocal %310 {approx = true} : vector<8x1xf32> -> vector<8x1xf32>
    %312 = vector.broadcast %311 : vector<8x1xf32> to vector<8x8xf32>
    %313 = arith.mulf %308, %312 : vector<8x8xf32>
    %314 = arith.truncf %313 : vector<8x8xf32> to vector<8x8xbf16>
    %cst_136 = arith.constant dense<0.000000e+00> : vector<8x16xf32>
    %315 = tpu.matmul %314, %298, %cst_136 {dimension_numbers = #tpu.dot_dimension_numbers<[1], [0], [0], [1], [0, 0, 1, 1], [], []>} : vector<8x8xbf16>, vector<8x16xbf16>, vector<8x16xf32> -> vector<8x16xf32>
    %316 = arith.truncf %315 : vector<8x16xf32> to vector<8x16xbf16>
    %317 = vector.extract_strided_slice %244 {offsets = [1, 0, 0], sizes = [1, 16, 32], strides = [1, 1, 1]} : vector<2x16x32xbf16> to vector<1x16x32xbf16>
    %318 = vector.shape_cast %317 : vector<1x16x32xbf16> to vector<16x32xbf16>
    %cst_137 = arith.constant dense<0.000000e+00> : vector<8x32xf32>
    %319 = tpu.matmul %316, %318, %cst_137 {dimension_numbers = #tpu.dot_dimension_numbers<[1], [0], [0], [1], [0, 0, 1, 1], [], []>} : vector<8x16xbf16>, vector<16x32xbf16>, vector<8x32xf32> -> vector<8x32xf32>
    %320 = arith.addf %295, %319 : vector<8x32xf32>
    %321 = vector.extract_strided_slice %267 {offsets = [8, 0], sizes = [8, 96], strides = [1, 1]} : vector<16x96xbf16> to vector<8x96xbf16>
    %322 = vector.extract_strided_slice %8 {offsets = [1, 0], sizes = [1, 8], strides = [1, 1]} : vector<2x8xf32> to vector<1x8xf32>
    %cst_138 = arith.constant 0.000000e+00 : f32
    %323 = vector.broadcast %cst_138 : f32 to vector<8x32xf32>
    %324 = vector.extract_strided_slice %321 {offsets = [0, 0], sizes = [8, 16], strides = [1, 1]} : vector<8x96xbf16> to vector<8x16xbf16>
    %325 = vector.extract_strided_slice %321 {offsets = [0, 32], sizes = [8, 16], strides = [1, 1]} : vector<8x96xbf16> to vector<8x16xbf16>
    %326 = vector.extract_strided_slice %321 {offsets = [0, 64], sizes = [8, 16], strides = [1, 1]} : vector<8x96xbf16> to vector<8x16xbf16>
    "tpu.trace_start"() <{level = 10 : i32, message = "qd,kd->qk"}> : () -> ()
    %cst_139 = arith.constant dense<0.000000e+00> : vector<8x8xf32>
    %327 = tpu.matmul %324, %325, %cst_139 {dimension_numbers = #tpu.dot_dimension_numbers<[1], [1], [0], [0], [0, 0, 1, 0], [], []>} : vector<8x16xbf16>, vector<8x16xbf16>, vector<8x8xf32> -> vector<8x8xf32>
    "tpu.trace_stop"() : () -> ()
    %cst_140 = arith.constant 2.500000e-01 : f32
    %328 = vector.broadcast %cst_140 : f32 to vector<8x8xf32>
    %329 = arith.mulf %327, %328 : vector<8x8xf32>
    %330 = vector.broadcast %322 : vector<1x8xf32> to vector<8x8xf32>
    %331 = arith.addf %329, %330 : vector<8x8xf32>
    %cst_141 = arith.constant dense<0xFF800000> : vector<8xf32>
    %332 = vector.multi_reduction <maximumf>, %331, %cst_141 [1] : vector<8x8xf32> to vector<8xf32>
    %333 = vector.shape_cast %332 : vector<8xf32> to vector<8x1xf32>
    %334 = vector.broadcast %333 : vector<8x1xf32> to vector<8x8xf32>
    %335 = arith.subf %331, %334 : vector<8x8xf32>
    %336 = math.exp %335 : vector<8x8xf32>
    %cst_142 = arith.constant dense<0.000000e+00> : vector<8xf32>
    %337 = vector.multi_reduction <add>, %336, %cst_142 [1] : vector<8x8xf32> to vector<8xf32>
    %338 = vector.shape_cast %337 : vector<8xf32> to vector<8x1xf32>
    %339 = tpu.reciprocal %338 {approx = true} : vector<8x1xf32> -> vector<8x1xf32>
    %340 = vector.broadcast %339 : vector<8x1xf32> to vector<8x8xf32>
    %341 = arith.mulf %336, %340 : vector<8x8xf32>
    %342 = arith.truncf %341 : vector<8x8xf32> to vector<8x8xbf16>
    %cst_143 = arith.constant dense<0.000000e+00> : vector<8x16xf32>
    %343 = tpu.matmul %342, %326, %cst_143 {dimension_numbers = #tpu.dot_dimension_numbers<[1], [0], [0], [1], [0, 0, 1, 1], [], []>} : vector<8x8xbf16>, vector<8x16xbf16>, vector<8x16xf32> -> vector<8x16xf32>
    %344 = arith.truncf %343 : vector<8x16xf32> to vector<8x16xbf16>
    %345 = vector.extract_strided_slice %244 {offsets = [0, 0, 0], sizes = [1, 16, 32], strides = [1, 1, 1]} : vector<2x16x32xbf16> to vector<1x16x32xbf16>
    %346 = vector.shape_cast %345 : vector<1x16x32xbf16> to vector<16x32xbf16>
    %cst_144 = arith.constant dense<0.000000e+00> : vector<8x32xf32>
    %347 = tpu.matmul %344, %346, %cst_144 {dimension_numbers = #tpu.dot_dimension_numbers<[1], [0], [0], [1], [0, 0, 1, 1], [], []>} : vector<8x16xbf16>, vector<16x32xbf16>, vector<8x32xf32> -> vector<8x32xf32>
    %348 = arith.addf %323, %347 : vector<8x32xf32>
    %349 = vector.extract_strided_slice %321 {offsets = [0, 16], sizes = [8, 16], strides = [1, 1]} : vector<8x96xbf16> to vector<8x16xbf16>
    %350 = vector.extract_strided_slice %321 {offsets = [0, 48], sizes = [8, 16], strides = [1, 1]} : vector<8x96xbf16> to vector<8x16xbf16>
    %351 = vector.extract_strided_slice %321 {offsets = [0, 80], sizes = [8, 16], strides = [1, 1]} : vector<8x96xbf16> to vector<8x16xbf16>
    "tpu.trace_start"() <{level = 10 : i32, message = "qd,kd->qk"}> : () -> ()
    %cst_145 = arith.constant dense<0.000000e+00> : vector<8x8xf32>
    %352 = tpu.matmul %349, %350, %cst_145 {dimension_numbers = #tpu.dot_dimension_numbers<[1], [1], [0], [0], [0, 0, 1, 0], [], []>} : vector<8x16xbf16>, vector<8x16xbf16>, vector<8x8xf32> -> vector<8x8xf32>
    "tpu.trace_stop"() : () -> ()
    %cst_146 = arith.constant 2.500000e-01 : f32
    %353 = vector.broadcast %cst_146 : f32 to vector<8x8xf32>
    %354 = arith.mulf %352, %353 : vector<8x8xf32>
    %355 = vector.broadcast %322 : vector<1x8xf32> to vector<8x8xf32>
    %356 = arith.addf %354, %355 : vector<8x8xf32>
    %cst_147 = arith.constant dense<0xFF800000> : vector<8xf32>
    %357 = vector.multi_reduction <maximumf>, %356, %cst_147 [1] : vector<8x8xf32> to vector<8xf32>
    %358 = vector.shape_cast %357 : vector<8xf32> to vector<8x1xf32>
    %359 = vector.broadcast %358 : vector<8x1xf32> to vector<8x8xf32>
    %360 = arith.subf %356, %359 : vector<8x8xf32>
    %361 = math.exp %360 : vector<8x8xf32>
    %cst_148 = arith.constant dense<0.000000e+00> : vector<8xf32>
    %362 = vector.multi_reduction <add>, %361, %cst_148 [1] : vector<8x8xf32> to vector<8xf32>
    %363 = vector.shape_cast %362 : vector<8xf32> to vector<8x1xf32>
    %364 = tpu.reciprocal %363 {approx = true} : vector<8x1xf32> -> vector<8x1xf32>
    %365 = vector.broadcast %364 : vector<8x1xf32> to vector<8x8xf32>
    %366 = arith.mulf %361, %365 : vector<8x8xf32>
    %367 = arith.truncf %366 : vector<8x8xf32> to vector<8x8xbf16>
    %cst_149 = arith.constant dense<0.000000e+00> : vector<8x16xf32>
    %368 = tpu.matmul %367, %351, %cst_149 {dimension_numbers = #tpu.dot_dimension_numbers<[1], [0], [0], [1], [0, 0, 1, 1], [], []>} : vector<8x8xbf16>, vector<8x16xbf16>, vector<8x16xf32> -> vector<8x16xf32>
    %369 = arith.truncf %368 : vector<8x16xf32> to vector<8x16xbf16>
    %370 = vector.extract_strided_slice %244 {offsets = [1, 0, 0], sizes = [1, 16, 32], strides = [1, 1, 1]} : vector<2x16x32xbf16> to vector<1x16x32xbf16>
    %371 = vector.shape_cast %370 : vector<1x16x32xbf16> to vector<16x32xbf16>
    %cst_150 = arith.constant dense<0.000000e+00> : vector<8x32xf32>
    %372 = tpu.matmul %369, %371, %cst_150 {dimension_numbers = #tpu.dot_dimension_numbers<[1], [0], [0], [1], [0, 0, 1, 1], [], []>} : vector<8x16xbf16>, vector<16x32xbf16>, vector<8x32xf32> -> vector<8x32xf32>
    %373 = arith.addf %348, %372 : vector<8x32xf32>
    %374 = tpu.concatenate %320, %373 in 0 : vector<8x32xf32>, vector<8x32xf32> -> vector<16x32xf32>
    %375 = vector.broadcast %246 : vector<1x32xf32> to vector<16x32xf32>
    %376 = arith.addf %374, %375 : vector<16x32xf32>
    %377 = arith.addf %376, %238 : vector<16x32xf32>
    %cst_151 = arith.constant dense<0.000000e+00> : vector<16xf32>
    %378 = vector.multi_reduction <add>, %377, %cst_151 [1] : vector<16x32xf32> to vector<16xf32>
    %379 = vector.shape_cast %378 : vector<16xf32> to vector<16x1xf32>
    %cst_152 = arith.constant 3.200000e+01 : f32
    %380 = vector.broadcast %cst_152 : f32 to vector<16x1xf32>
    %381 = arith.divf %379, %380 : vector<16x1xf32>
    %382 = vector.broadcast %381 : vector<16x1xf32> to vector<16x32xf32>
    %383 = arith.subf %377, %382 : vector<16x32xf32>
    %384 = vector.broadcast %381 : vector<16x1xf32> to vector<16x32xf32>
    %385 = arith.subf %377, %384 : vector<16x32xf32>
    %386 = arith.mulf %383, %385 : vector<16x32xf32>
    %cst_153 = arith.constant dense<0.000000e+00> : vector<16xf32>
    %387 = vector.multi_reduction <add>, %386, %cst_153 [1] : vector<16x32xf32> to vector<16xf32>
    %388 = vector.shape_cast %387 : vector<16xf32> to vector<16x1xf32>
    %cst_154 = arith.constant 3.200000e+01 : f32
    %389 = vector.broadcast %cst_154 : f32 to vector<16x1xf32>
    %390 = arith.divf %388, %389 : vector<16x1xf32>
    %391 = vector.broadcast %381 : vector<16x1xf32> to vector<16x32xf32>
    %392 = arith.subf %377, %391 : vector<16x32xf32>
    %cst_155 = arith.constant 9.99999974E-6 : f32
    %393 = vector.broadcast %cst_155 : f32 to vector<16x1xf32>
    %394 = arith.addf %390, %393 : vector<16x1xf32>
    %395 = math.rsqrt %394 : vector<16x1xf32>
    %396 = vector.broadcast %395 : vector<16x1xf32> to vector<16x32xf32>
    %397 = arith.mulf %392, %396 : vector<16x32xf32>
    %398 = vector.broadcast %248 : vector<1x32xf32> to vector<16x32xf32>
    %399 = arith.mulf %397, %398 : vector<16x32xf32>
    %400 = vector.broadcast %250 : vector<1x32xf32> to vector<16x32xf32>
    %401 = arith.addf %399, %400 : vector<16x32xf32>
    %402 = vector.broadcast %9 : vector<16x1xf32> to vector<16x32xf32>
    %403 = arith.mulf %401, %402 : vector<16x32xf32>
    %cst_156 = arith.constant 0.000000e+00 : bf16
    %404 = vector.broadcast %cst_156 : bf16 to vector<4x32xbf16>
    %405 = vector.extract_strided_slice %403 {offsets = [0, 0], sizes = [8, 32], strides = [1, 1]} : vector<16x32xf32> to vector<8x32xf32>
    %406 = arith.truncf %405 : vector<8x32xf32> to vector<8x32xbf16>
    %407 = tpu.concatenate %404, %406, %404 in 0 : vector<4x32xbf16>, vector<8x32xbf16>, vector<4x32xbf16> -> vector<16x32xbf16>
    %408 = vector.extract_strided_slice %407 {offsets = [0, 0], sizes = [8, 32], strides = [1, 1]} : vector<16x32xbf16> to vector<8x32xbf16>
    %409 = vector.extract_strided_slice %407 {offsets = [1, 0], sizes = [8, 32], strides = [1, 1]} : vector<16x32xbf16> to vector<8x32xbf16>
    %410 = vector.extract_strided_slice %407 {offsets = [2, 0], sizes = [8, 32], strides = [1, 1]} : vector<16x32xbf16> to vector<8x32xbf16>
    %411 = vector.extract_strided_slice %407 {offsets = [3, 0], sizes = [8, 32], strides = [1, 1]} : vector<16x32xbf16> to vector<8x32xbf16>
    %412 = vector.extract_strided_slice %407 {offsets = [4, 0], sizes = [8, 32], strides = [1, 1]} : vector<16x32xbf16> to vector<8x32xbf16>
    %413 = vector.extract_strided_slice %407 {offsets = [5, 0], sizes = [8, 32], strides = [1, 1]} : vector<16x32xbf16> to vector<8x32xbf16>
    %414 = vector.extract_strided_slice %407 {offsets = [6, 0], sizes = [8, 32], strides = [1, 1]} : vector<16x32xbf16> to vector<8x32xbf16>
    %415 = vector.extract_strided_slice %407 {offsets = [7, 0], sizes = [8, 32], strides = [1, 1]} : vector<16x32xbf16> to vector<8x32xbf16>
    %416 = vector.extract_strided_slice %407 {offsets = [8, 0], sizes = [8, 32], strides = [1, 1]} : vector<16x32xbf16> to vector<8x32xbf16>
    %417 = tpu.concatenate %408, %409, %410, %411, %412, %413, %414, %415, %416 in 1 : vector<8x32xbf16>, vector<8x32xbf16>, vector<8x32xbf16>, vector<8x32xbf16>, vector<8x32xbf16>, vector<8x32xbf16>, vector<8x32xbf16>, vector<8x32xbf16>, vector<8x32xbf16> -> vector<8x288xbf16>
    %418 = vector.extract_strided_slice %403 {offsets = [8, 0], sizes = [8, 32], strides = [1, 1]} : vector<16x32xf32> to vector<8x32xf32>
    %419 = arith.truncf %418 : vector<8x32xf32> to vector<8x32xbf16>
    %420 = tpu.concatenate %404, %419, %404 in 0 : vector<4x32xbf16>, vector<8x32xbf16>, vector<4x32xbf16> -> vector<16x32xbf16>
    %421 = vector.extract_strided_slice %420 {offsets = [0, 0], sizes = [8, 32], strides = [1, 1]} : vector<16x32xbf16> to vector<8x32xbf16>
    %422 = vector.extract_strided_slice %420 {offsets = [1, 0], sizes = [8, 32], strides = [1, 1]} : vector<16x32xbf16> to vector<8x32xbf16>
    %423 = vector.extract_strided_slice %420 {offsets = [2, 0], sizes = [8, 32], strides = [1, 1]} : vector<16x32xbf16> to vector<8x32xbf16>
    %424 = vector.extract_strided_slice %420 {offsets = [3, 0], sizes = [8, 32], strides = [1, 1]} : vector<16x32xbf16> to vector<8x32xbf16>
    %425 = vector.extract_strided_slice %420 {offsets = [4, 0], sizes = [8, 32], strides = [1, 1]} : vector<16x32xbf16> to vector<8x32xbf16>
    %426 = vector.extract_strided_slice %420 {offsets = [5, 0], sizes = [8, 32], strides = [1, 1]} : vector<16x32xbf16> to vector<8x32xbf16>
    %427 = vector.extract_strided_slice %420 {offsets = [6, 0], sizes = [8, 32], strides = [1, 1]} : vector<16x32xbf16> to vector<8x32xbf16>
    %428 = vector.extract_strided_slice %420 {offsets = [7, 0], sizes = [8, 32], strides = [1, 1]} : vector<16x32xbf16> to vector<8x32xbf16>
    %429 = vector.extract_strided_slice %420 {offsets = [8, 0], sizes = [8, 32], strides = [1, 1]} : vector<16x32xbf16> to vector<8x32xbf16>
    %430 = tpu.concatenate %421, %422, %423, %424, %425, %426, %427, %428, %429 in 1 : vector<8x32xbf16>, vector<8x32xbf16>, vector<8x32xbf16>, vector<8x32xbf16>, vector<8x32xbf16>, vector<8x32xbf16>, vector<8x32xbf16>, vector<8x32xbf16>, vector<8x32xbf16> -> vector<8x288xbf16>
    %431 = tpu.concatenate %417, %430 in 0 : vector<8x288xbf16>, vector<8x288xbf16> -> vector<16x288xbf16>
    %cst_157 = arith.constant dense<0.000000e+00> : vector<16x64xf32>
    %432 = tpu.matmul %431, %252, %cst_157 {dimension_numbers = #tpu.dot_dimension_numbers<[1], [0], [0], [1], [0, 0, 1, 1], [], []>} : vector<16x288xbf16>, vector<288x64xbf16>, vector<16x64xf32> -> vector<16x64xf32>
    %433 = vector.broadcast %254 : vector<1x64xf32> to vector<16x64xf32>
    %434 = arith.addf %432, %433 : vector<16x64xf32>
    %cst_158 = arith.constant 0.000000e+00 : f32
    %435 = vector.broadcast %cst_158 : f32 to vector<16x64xf32>
    %436 = arith.maximumf %434, %435 : vector<16x64xf32>
    %437 = arith.truncf %436 : vector<16x64xf32> to vector<16x64xbf16>
    %cst_159 = arith.constant dense<0.000000e+00> : vector<16x32xf32>
    %438 = tpu.matmul %437, %256, %cst_159 {dimension_numbers = #tpu.dot_dimension_numbers<[1], [0], [0], [1], [0, 0, 1, 1], [], []>} : vector<16x64xbf16>, vector<64x32xbf16>, vector<16x32xf32> -> vector<16x32xf32>
    %439 = vector.broadcast %258 : vector<1x32xf32> to vector<16x32xf32>
    %440 = arith.addf %438, %439 : vector<16x32xf32>
    %441 = arith.addf %440, %403 : vector<16x32xf32>
    %cst_160 = arith.constant dense<0.000000e+00> : vector<16xf32>
    %442 = vector.multi_reduction <add>, %441, %cst_160 [1] : vector<16x32xf32> to vector<16xf32>
    %443 = vector.shape_cast %442 : vector<16xf32> to vector<16x1xf32>
    %cst_161 = arith.constant 3.200000e+01 : f32
    %444 = vector.broadcast %cst_161 : f32 to vector<16x1xf32>
    %445 = arith.divf %443, %444 : vector<16x1xf32>
    %446 = vector.broadcast %445 : vector<16x1xf32> to vector<16x32xf32>
    %447 = arith.subf %441, %446 : vector<16x32xf32>
    %448 = vector.broadcast %445 : vector<16x1xf32> to vector<16x32xf32>
    %449 = arith.subf %441, %448 : vector<16x32xf32>
    %450 = arith.mulf %447, %449 : vector<16x32xf32>
    %cst_162 = arith.constant dense<0.000000e+00> : vector<16xf32>
    %451 = vector.multi_reduction <add>, %450, %cst_162 [1] : vector<16x32xf32> to vector<16xf32>
    %452 = vector.shape_cast %451 : vector<16xf32> to vector<16x1xf32>
    %cst_163 = arith.constant 3.200000e+01 : f32
    %453 = vector.broadcast %cst_163 : f32 to vector<16x1xf32>
    %454 = arith.divf %452, %453 : vector<16x1xf32>
    %455 = vector.broadcast %445 : vector<16x1xf32> to vector<16x32xf32>
    %456 = arith.subf %441, %455 : vector<16x32xf32>
    %cst_164 = arith.constant 9.99999974E-6 : f32
    %457 = vector.broadcast %cst_164 : f32 to vector<16x1xf32>
    %458 = arith.addf %454, %457 : vector<16x1xf32>
    %459 = math.rsqrt %458 : vector<16x1xf32>
    %460 = vector.broadcast %459 : vector<16x1xf32> to vector<16x32xf32>
    %461 = arith.mulf %456, %460 : vector<16x32xf32>
    %462 = vector.broadcast %260 : vector<1x32xf32> to vector<16x32xf32>
    %463 = arith.mulf %461, %462 : vector<16x32xf32>
    %464 = vector.broadcast %262 : vector<1x32xf32> to vector<16x32xf32>
    %465 = arith.addf %463, %464 : vector<16x32xf32>
    %466 = vector.broadcast %9 : vector<16x1xf32> to vector<16x32xf32>
    %467 = arith.mulf %465, %466 : vector<16x32xf32>
    %c0_165 = arith.constant 0 : index
    %c0_166 = arith.constant 0 : index
    %468 = vector.load %arg16[%c0_165, %c0_166] : memref<16x32xf32, #tpu.memory_space<vmem>>, vector<16x32xf32>
    tpu.vector_store %arg16[%c0_165, %c0_166], %467 {strides = array<i32>} : memref<16x32xf32, #tpu.memory_space<vmem>>, vector<16x32xf32>,
    return
  }
}

</mosaic_0001>

<llo_original>
// kernel: tpu_custom_call.1
$region0: #{tpu_custom_call.1}
  #allocation0 [shape = 'u32[]', space=smem, size = 0x4, offset = 0x4, fixed_abs, tag = 'smem constant byte address 0x4 - core index']
  #allocation1 [shape = 'u32[144,128]{1,0:T(1,128)}', space=vmem, size = 0x12000, scoped, tag = 'internal scratch']
  %s0 = inlined_call_operand.vmem [shape: f32[2,8,32], index: 0, kind: input, shape index: {}]
  %s1 = inlined_call_operand.vmem [shape: f32[8,32], index: 1, kind: input, shape index: {}]
  %s2 = inlined_call_operand.vmem [shape: f32[2,8], index: 2, kind: input, shape index: {}]
  %s3 = inlined_call_operand.vmem [shape: f32[16,1], index: 3, kind: input, shape index: {}]
  %s4 = inlined_call_operand.vmem [shape: bf16[2,32,96], index: 4, kind: input, shape index: {}]
  %s5 = inlined_call_operand.vmem [shape: f32[2,1,96], index: 5, kind: input, shape index: {}]
  %s6 = inlined_call_operand.vmem [shape: bf16[2,2,16,32], index: 6, kind: input, shape index: {}]
  %s7 = inlined_call_operand.vmem [shape: f32[2,1,32], index: 7, kind: input, shape index: {}]
  %s8 = inlined_call_operand.vmem [shape: f32[2,1,32], index: 8, kind: input, shape index: {}]
  %s9 = inlined_call_operand.vmem [shape: f32[2,1,32], index: 9, kind: input, shape index: {}]
  %s10 = inlined_call_operand.vmem [shape: bf16[2,288,64], index: 10, kind: input, shape index: {}]
  %s11 = inlined_call_operand.vmem [shape: f32[2,1,64], index: 11, kind: input, shape index: {}]
  %s12 = inlined_call_operand.vmem [shape: bf16[2,64,32], index: 12, kind: input, shape index: {}]
  %s13 = inlined_call_operand.vmem [shape: f32[2,1,32], index: 13, kind: input, shape index: {}]
  %s14 = inlined_call_operand.vmem [shape: f32[2,1,32], index: 14, kind: input, shape index: {}]
  %s15 = inlined_call_operand.vmem [shape: f32[2,1,32], index: 15, kind: input, shape index: {}]
  %s16 = inlined_call_operand.hbm [shape: f32[16,32], index: 16, kind: output, shape index: {}]
  %s17 = sld [smem:[#allocation0]]
  $region74: #{tpu_custom_call.1} parent=0
    _
  %s19 = ssub.s32 1, %s17
  %s20 = scalar_select 0, %s19, %s17
  $region1: #{tpu_custom_call.1} parent=0
    #allocation2 [shape = 'u8[8192]{0}', space=vmem, size = 0x2000, scoped, tag = 'output window, operand 0, single buffered']
    #allocation3 [shape = 's32[1]{0}', space=sflag, size = 0x4, scoped, tag = 'scoped memory for tpu_custom_call.1']
    %21 = vsyncpa [#allocation3], 0
    // Predicated region
    $region2: #{tpu_custom_call.1} parent=1 // pred_check
      _
    $region3: #{tpu_custom_call.1} parent=1 // pred_check_branch
      %23 = sbr.rel (0) target = $region5
    $region4: #{tpu_custom_call.1} parent=1 // pred_region
      _
    $region5: #{tpu_custom_call.1} parent=1 // pred_fallthru
      _
    // Predicated region
    $region6: #{tpu_custom_call.1} parent=1 // pred_check
      _
    $region7: #{tpu_custom_call.1} parent=1 // pred_check_branch
      %25 = sbr.rel (0) target = $region9
    $region8: #{tpu_custom_call.1} parent=1 // pred_region
      _
    $region9: #{tpu_custom_call.1} parent=1 // pred_fallthru
      _
    // Predicated region
    $region10: #{tpu_custom_call.1} parent=1 // pred_check
      _
    $region11: #{tpu_custom_call.1} parent=1 // pred_check_branch
      %27 = sbr.rel (0) target = $region13
    $region12: #{tpu_custom_call.1} parent=1 // pred_region
      _
    $region13: #{tpu_custom_call.1} parent=1 // pred_fallthru
      _
    // Predicated region
    $region14: #{tpu_custom_call.1} parent=1 // pred_check
      _
    $region15: #{tpu_custom_call.1} parent=1 // pred_check_branch
      %29 = sbr.rel (0) target = $region17
    $region16: #{tpu_custom_call.1} parent=1 // pred_region
      _
    $region17: #{tpu_custom_call.1} parent=1 // pred_fallthru
      _
    // Predicated region
    $region18: #{tpu_custom_call.1} parent=1 // pred_check
      _
    $region19: #{tpu_custom_call.1} parent=1 // pred_check_branch
      %31 = sbr.rel (0) target = $region21
    $region20: #{tpu_custom_call.1} parent=1 // pred_region
      _
    $region21: #{tpu_custom_call.1} parent=1 // pred_fallthru
      _
    // Predicated region
    $region22: #{tpu_custom_call.1} parent=1 // pred_check
      _
    $region23: #{tpu_custom_call.1} parent=1 // pred_check_branch
      %33 = sbr.rel (0) target = $region25
    $region24: #{tpu_custom_call.1} parent=1 // pred_region
      _
    $region25: #{tpu_custom_call.1} parent=1 // pred_fallthru
      _
    // Predicated region
    $region26: #{tpu_custom_call.1} parent=1 // pred_check
      _
    $region27: #{tpu_custom_call.1} parent=1 // pred_check_branch
      %35 = sbr.rel (0) target = $region29
    $region28: #{tpu_custom_call.1} parent=1 // pred_region
      _
    $region29: #{tpu_custom_call.1} parent=1 // pred_fallthru
      _
    // Predicated region
    $region30: #{tpu_custom_call.1} parent=1 // pred_check
      _
    $region31: #{tpu_custom_call.1} parent=1 // pred_check_branch
      %37 = sbr.rel (0) target = $region33
    $region32: #{tpu_custom_call.1} parent=1 // pred_region
      _
    $region33: #{tpu_custom_call.1} parent=1 // pred_fallthru
      _
    // Predicated region
    $region34: #{tpu_custom_call.1} parent=1 // pred_check
      _
    $region35: #{tpu_custom_call.1} parent=1 // pred_check_branch
      %39 = sbr.rel (0) target = $region37
    $region36: #{tpu_custom_call.1} parent=1 // pred_region
      _
    $region37: #{tpu_custom_call.1} parent=1 // pred_fallthru
      _
    // Predicated region
    $region38: #{tpu_custom_call.1} parent=1 // pred_check
      _
    $region39: #{tpu_custom_call.1} parent=1 // pred_check_branch
      %41 = sbr.rel (0) target = $region41
    $region40: #{tpu_custom_call.1} parent=1 // pred_region
      _
    $region41: #{tpu_custom_call.1} parent=1 // pred_fallthru
      _
    // Predicated region
    $region42: #{tpu_custom_call.1} parent=1 // pred_check
      _
    $region43: #{tpu_custom_call.1} parent=1 // pred_check_branch
      %43 = sbr.rel (0) target = $region45
    $region44: #{tpu_custom_call.1} parent=1 // pred_region
      _
    $region45: #{tpu_custom_call.1} parent=1 // pred_fallthru
      _
    // Predicated region
    $region46: #{tpu_custom_call.1} parent=1 // pred_check
      _
    $region47: #{tpu_custom_call.1} parent=1 // pred_check_branch
      %45 = sbr.rel (0) target = $region49
    $region48: #{tpu_custom_call.1} parent=1 // pred_region
      _
    $region49: #{tpu_custom_call.1} parent=1 // pred_fallthru
      _
    // Predicated region
    $region50: #{tpu_custom_call.1} parent=1 // pred_check
      _
    $region51: #{tpu_custom_call.1} parent=1 // pred_check_branch
      %47 = sbr.rel (0) target = $region53
    $region52: #{tpu_custom_call.1} parent=1 // pred_region
      _
    $region53: #{tpu_custom_call.1} parent=1 // pred_fallthru
      _
    // Predicated region
    $region54: #{tpu_custom_call.1} parent=1 // pred_check
      _
    $region55: #{tpu_custom_call.1} parent=1 // pred_check_branch
      %49 = sbr.rel (0) target = $region57
    $region56: #{tpu_custom_call.1} parent=1 // pred_region
      _
    $region57: #{tpu_custom_call.1} parent=1 // pred_fallthru
      _
    // Predicated region
    $region58: #{tpu_custom_call.1} parent=1 // pred_check
      _
    $region59: #{tpu_custom_call.1} parent=1 // pred_check_branch
      %51 = sbr.rel (0) target = $region61
    $region60: #{tpu_custom_call.1} parent=1 // pred_region
      _
    $region61: #{tpu_custom_call.1} parent=1 // pred_fallthru
      _
    // Predicated region
    $region62: #{tpu_custom_call.1} parent=1 // pred_check
      _
    $region63: #{tpu_custom_call.1} parent=1 // pred_check_branch
      %53 = sbr.rel (0) target = $region65
    $region64: #{tpu_custom_call.1} parent=1 // pred_region
      _
    $region65: #{tpu_custom_call.1} parent=1 // pred_fallthru
      _
    %v55 = vld [vmem:[%s1] sm:$0xff]
    %v56 = vld [vmem:[%s0] sm:$0xff]
    %v57 = vadd.f32 %v56, %v55
    %s58 = scalar_lea.vmem %s0, 8
    %v59 = vld [vmem:[%s58] sm:$0xff]
    %v60 = vadd.f32 %v59, %v55
    %v61 = vld [vmem:[%s2] sm:$0x3]
    %v62 = vld [vmem:[%s3] sm:$0xff]
    %v63 = vld [vmem:[%s3 + $0x8] sm:$0xff]
    %v64 = vld [vmem:[%s4] sm:$0xf]
    %v65 = vld [vmem:[%s4 + $0x4] sm:$0xf]
    %v66 = vld [vmem:[%s4 + $0x8] sm:$0xf]
    %v67 = vld [vmem:[%s4 + $0xc] sm:$0xf]
    %v68 = vld [vmem:[%s5] sm:$0x1]
    %v69 = vld [vmem:[%s6] sm:$0xf]
    %v70 = vld [vmem:[%s6 + $0x4] sm:$0xf]
    %v71 = vld [vmem:[%s6 + $0x8] sm:$0xf]
    %v72 = vld [vmem:[%s6 + $0xc] sm:$0xf]
    %v73 = vld [vmem:[%s7] sm:$0x1]
    %v74 = vld [vmem:[%s8] sm:$0x1]
    %v75 = vld [vmem:[%s9] sm:$0x1]
    %v76 = vld [vmem:[%s10] sm:$0xf]
    %v77 = vld [vmem:[%s10 + $0x4] sm:$0xf]
    %v78 = vld [vmem:[%s10 + $0x8] sm:$0xf]
    %v79 = vld [vmem:[%s10 + $0xc] sm:$0xf]
    %v80 = vld [vmem:[%s10 + $0x10] sm:$0xf]
    %v81 = vld [vmem:[%s10 + $0x14] sm:$0xf]
    %v82 = vld [vmem:[%s10 + $0x18] sm:$0xf]
    %v83 = vld [vmem:[%s10 + $0x1c] sm:$0xf]
    %v84 = vld [vmem:[%s10 + $0x20] sm:$0xf]
    %v85 = vld [vmem:[%s10 + $0x24] sm:$0xf]
    %v86 = vld [vmem:[%s10 + $0x28] sm:$0xf]
    %v87 = vld [vmem:[%s10 + $0x2c] sm:$0xf]
    %v88 = vld [vmem:[%s10 + $0x30] sm:$0xf]
    %v89 = vld [vmem:[%s10 + $0x34] sm:$0xf]
    %v90 = vld [vmem:[%s10 + $0x38] sm:$0xf]
    %v91 = vld [vmem:[%s10 + $0x3c] sm:$0xf]
    %v92 = vld [vmem:[%s10 + $0x40] sm:$0xf]
    %v93 = vld [vmem:[%s10 + $0x44] sm:$0xf]
    %v94 = vld [vmem:[%s10 + $0x48] sm:$0xf]
    %v95 = vld [vmem:[%s10 + $0x4c] sm:$0xf]
    %v96 = vld [vmem:[%s10 + $0x50] sm:$0xf]
    %v97 = vld [vmem:[%s10 + $0x54] sm:$0xf]
    %v98 = vld [vmem:[%s10 + $0x58] sm:$0xf]
    %v99 = vld [vmem:[%s10 + $0x5c] sm:$0xf]
    %v100 = vld [vmem:[%s10 + $0x60] sm:$0xf]
    %v101 = vld [vmem:[%s10 + $0x64] sm:$0xf]
    %v102 = vld [vmem:[%s10 + $0x68] sm:$0xf]
    %v103 = vld [vmem:[%s10 + $0x6c] sm:$0xf]
    %v104 = vld [vmem:[%s10 + $0x70] sm:$0xf]
    %v105 = vld [vmem:[%s10 + $0x74] sm:$0xf]
    %v106 = vld [vmem:[%s10 + $0x78] sm:$0xf]
    %v107 = vld [vmem:[%s10 + $0x7c] sm:$0xf]
    %v108 = vld [vmem:[%s10 + $0x80] sm:$0xf]
    %v109 = vld [vmem:[%s10 + $0x84] sm:$0xf]
    %v110 = vld [vmem:[%s10 + $0x88] sm:$0xf]
    %v111 = vld [vmem:[%s10 + $0x8c] sm:$0xf]
    %v112 = vld [vmem:[%s11] sm:$0x1]
    %v113 = vld [vmem:[%s12] sm:$0xf]
    %v114 = vld [vmem:[%s12 + $0x4] sm:$0xf]
    %v115 = vld [vmem:[%s12 + $0x8] sm:$0xf]
    %v116 = vld [vmem:[%s12 + $0xc] sm:$0xf]
    %v117 = vld [vmem:[%s12 + $0x10] sm:$0xf]
    %v118 = vld [vmem:[%s12 + $0x14] sm:$0xf]
    %v119 = vld [vmem:[%s12 + $0x18] sm:$0xf]
    %v120 = vld [vmem:[%s12 + $0x1c] sm:$0xf]
    %v121 = vld [vmem:[%s13] sm:$0x1]
    %v122 = vld [vmem:[%s14] sm:$0x1]
    %v123 = vld [vmem:[%s15] sm:$0x1]
    %v124 = vpack.c.bf16 %v60, %v57
    %v126 = vlaneseq
    %v127 = vshrl.u32 %v126, 7
    %v128 = vsub.s32 0, %v127
    %v129 = vrot.slane %v68, %v128
    %v135 = vunpack.c.l.b16 %v64
    %v136 = vunpack.c.l.b16 %v65
    %v137 = vunpack.c.l.b16 %v66
    %v138 = vunpack.c.l.b16 %v67
    %v139 = vpack.c.b16 %v136, %v135
    %v140 = vpack.c.b16 %v138, %v137
    %vm143 = vcmask 261120
    %v145 = vsel %vm143, %v124, 0
    %147 = vmatprep.subr.bf16.mxu0 0
    %148 = vmatpush1.bf16.msra.mxu0 %v139
    %149 = vmatprep.subr.bf16.mxu0 0
    %150 = vmatpush1.bf16.msra.mxu0 %v140
    %151 = vmatprep.subr.bf16.mxu0 0
    %152 = vmatpush1.bf16.msra.mxu0 0
    %153 = vmatprep.subr.bf16.mxu0 0
    %154 = vmatpush1.bf16.msra.mxu0 0
    %155 = vmatprep.subr.bf16.mxu0 0
    %156 = vmatpush1.bf16.msra.mxu0 0
    %157 = vmatprep.subr.bf16.mxu0 0
    %158 = vmatpush1.bf16.msra.mxu0 0
    %159 = vmatprep.subr.bf16.mxu0 0
    %160 = vmatpush1.bf16.msra.mxu0 0
    %161 = vmatprep.subr.bf16.mxu0 0
    %162 = vmatpush1.bf16.msra.mxu0 0
    %163 = vmatprep.subr.bf16.mxu0 0
    %164 = vmatpush1.bf16.msra.mxu0 0
    %165 = vmatprep.subr.bf16.mxu0 0
    %166 = vmatpush1.bf16.msra.mxu0 0
    %167 = vmatprep.subr.bf16.mxu0 0
    %168 = vmatpush1.bf16.msra.mxu0 0
    %169 = vmatprep.subr.bf16.mxu0 0
    %170 = vmatpush1.bf16.msra.mxu0 0
    %171 = vmatprep.subr.bf16.mxu0 0
    %172 = vmatpush1.bf16.msra.mxu0 0
    %173 = vmatprep.subr.bf16.mxu0 0
    %174 = vmatpush1.bf16.msra.mxu0 0
    %175 = vmatprep.subr.bf16.mxu0 0
    %176 = vmatpush1.bf16.msra.mxu0 0
    %177 = vmatprep.subr.bf16.mxu0 0
    %178 = vmatpush1.bf16.msra.mxu0 0
    %179 = vmatprep.mubr.bf16.mxu0 0
    %180 = vmatmul.mubr.bf16.gmra.mrb[0].mxu0 %v145
    %v181 = vpop.f32.mrb[0].mxu0
    %v182 = vadd.f32 %v129, %v181
    %v183 = vpop.f32.mrb[0].mxu0
    %v184 = vpop.f32.mrb[0].mxu0
    %v185 = vadd.f32 %v129, %v184
    %v186 = vpop.f32.mrb[0].mxu0
    %187 = vdwg.mxu0
    %v188 = vpack.c.bf16 %v185, %v182
    %190 = vrot.lane.b32.xlu0 %v188, 96
    %v191 = vpop.permute.xlu0 %190
    %vm192 = vcmask 130048
    %v194 = vsel %vm192, %v188, 0
    %v197 = vsel %vm192, %v191, 0
    %199 = vmatprep.subr.bf16.mxu0 0
    %200 = vmatpush1.bf16.xpose.msra.mxu0 %v197
    %201 = vmatprep.subr.bf16.mxu0 0
    %202 = vmatpush1.bf16.xpose.msra.mxu0 0
    %203 = vmatprep.subr.bf16.mxu0 0
    %204 = vmatpush1.bf16.xpose.msra.mxu0 0
    %205 = vmatprep.subr.bf16.mxu0 0
    %206 = vmatpush1.bf16.xpose.msra.mxu0 0
    %207 = vmatprep.subr.bf16.mxu0 0
    %208 = vmatpush1.bf16.xpose.msra.mxu0 0
    %209 = vmatprep.subr.bf16.mxu0 0
    %210 = vmatpush1.bf16.xpose.msra.mxu0 0
    %211 = vmatprep.subr.bf16.mxu0 0
    %212 = vmatpush1.bf16.xpose.msra.mxu0 0
    %213 = vmatprep.subr.bf16.mxu0 0
    %214 = vmatpush1.bf16.xpose.msra.mxu0 0
    %215 = vmatprep.subr.bf16.mxu0 0
    %216 = vmatpush1.bf16.xpose.msra.mxu0 0
    %217 = vmatprep.subr.bf16.mxu0 0
    %218 = vmatpush1.bf16.xpose.msra.mxu0 0
    %219 = vmatprep.subr.bf16.mxu0 0
    %220 = vmatpush1.bf16.xpose.msra.mxu0 0
    %221 = vmatprep.subr.bf16.mxu0 0
    %222 = vmatpush1.bf16.xpose.msra.mxu0 0
    %223 = vmatprep.subr.bf16.mxu0 0
    %224 = vmatpush1.bf16.xpose.msra.mxu0 0
    %225 = vmatprep.subr.bf16.mxu0 0
    %226 = vmatpush1.bf16.xpose.msra.mxu0 0
    %227 = vmatprep.subr.bf16.mxu0 0
    %228 = vmatpush1.bf16.xpose.msra.mxu0 0
    %229 = vmatprep.subr.bf16.mxu0 0
    %230 = vmatpush1.bf16.xpose.msra.mxu0 0
    %231 = vmatprep.mubr.bf16.mxu0 0
    %232 = vmatmul.mubr.bf16.gmra.mrb[0].mxu0 %v194
    %v233 = vpop.f32.mrb[0].mxu0
    %v234 = vadd.f32 0.0, %v233
    %v235 = vpop.f32.mrb[0].mxu0
    %v236 = vpop.f32.mrb[0].mxu0
    %v237 = vpop.f32.mrb[0].mxu0
    %238 = vdwg.mxu0
    %v239 = vmul.f32 %v234, 0.25
    %v240 = vlaneseq
    %v241 = vshrl.u32 %v240, 7
    %v242 = vsub.s32 0, %v241
    %v243 = vrot.slane %v61, %v242
    %v244 = vadd.f32 %v239, %v243
    %vm245 = vcmask 64512
    %v246 = vsel %vm245, %v244, -inf
    %247 = vmax.xlane.f32.xlu0 %v246
    %v248 = vpop.xlane.xlu0 %247
    %v249 = vsub.f32 %v244, %v248
    %v250 = vmul.f32 %v249, 1.442695
    %v251 = vpow.pop %v250
    %v252 = vsel %vm245, %v251, 0.0
    %253 = vadd.xlane.f32.xlu0 %v252
    %v254 = vpop.xlane.xlu0 %253
    %v255 = vrcp.pop %v254
    %v256 = vmul.f32 %v251, %v255
    %v257 = vpack.c.bf16 %v256, %v256
    %258 = vrot.lane.b32.xlu0 %v188, 64
    %v259 = vpop.permute.xlu0 %258
    %v261 = vsel %vm245, %v257, 0
    %vm263 = vcmask 1043456
    %v265 = vsel %vm263, %v259, 0
    %267 = vmatprep.subr.bf16.mxu0 0
    %268 = vmatpush1.bf16.msra.mxu0 %v265
    %269 = vmatprep.subr.bf16.mxu0 0
    %270 = vmatpush1.bf16.msra.mxu0 0
    %271 = vmatprep.subr.bf16.mxu0 0
    %272 = vmatpush1.bf16.msra.mxu0 0
    %273 = vmatprep.subr.bf16.mxu0 0
    %274 = vmatpush1.bf16.msra.mxu0 0
    %275 = vmatprep.subr.bf16.mxu0 0
    %276 = vmatpush1.bf16.msra.mxu0 0
    %277 = vmatprep.subr.bf16.mxu0 0
    %278 = vmatpush1.bf16.msra.mxu0 0
    %279 = vmatprep.subr.bf16.mxu0 0
    %280 = vmatpush1.bf16.msra.mxu0 0
    %281 = vmatprep.subr.bf16.mxu0 0
    %282 = vmatpush1.bf16.msra.mxu0 0
    %283 = vmatprep.subr.bf16.mxu0 0
    %284 = vmatpush1.bf16.msra.mxu0 0
    %285 = vmatprep.subr.bf16.mxu0 0
    %286 = vmatpush1.bf16.msra.mxu0 0
    %287 = vmatprep.subr.bf16.mxu0 0
    %288 = vmatpush1.bf16.msra.mxu0 0
    %289 = vmatprep.subr.bf16.mxu0 0
    %290 = vmatpush1.bf16.msra.mxu0 0
    %291 = vmatprep.subr.bf16.mxu0 0
    %292 = vmatpush1.bf16.msra.mxu0 0
    %293 = vmatprep.subr.bf16.mxu0 0
    %294 = vmatpush1.bf16.msra.mxu0 0
    %295 = vmatprep.subr.bf16.mxu0 0
    %296 = vmatpush1.bf16.msra.mxu0 0
    %297 = vmatprep.subr.bf16.mxu0 0
    %298 = vmatpush1.bf16.msra.mxu0 0
    %299 = vmatprep.mubr.bf16.mxu0 0
    %300 = vmatmul.mubr.bf16.gmra.mrb[0].mxu0 %v261
    %v301 = vpop.f32.mrb[0].mxu0
    %v302 = vadd.f32 0.0, %v301
    %v303 = vpop.f32.mrb[0].mxu0
    %v304 = vpop.f32.mrb[0].mxu0
    %v305 = vpop.f32.mrb[0].mxu0
    %306 = vdwg.mxu0
    %v307 = vpack.c.bf16 %v302, %v302
    %308 = vrot.lane.b32.xlu0 %v188, 112
    %v309 = vpop.permute.xlu0 %308
    %310 = vrot.lane.b32.xlu0 %v188, 80
    %v311 = vpop.permute.xlu0 %310
    %v313 = vsel %vm192, %v309, 0
    %v316 = vsel %vm192, %v311, 0
    %318 = vmatprep.subr.bf16.mxu0 0
    %319 = vmatpush1.bf16.xpose.msra.mxu0 %v316
    %320 = vmatprep.subr.bf16.mxu0 0
    %321 = vmatpush1.bf16.xpose.msra.mxu0 0
    %322 = vmatprep.subr.bf16.mxu0 0
    %323 = vmatpush1.bf16.xpose.msra.mxu0 0
    %324 = vmatprep.subr.bf16.mxu0 0
    %325 = vmatpush1.bf16.xpose.msra.mxu0 0
    %326 = vmatprep.subr.bf16.mxu0 0
    %327 = vmatpush1.bf16.xpose.msra.mxu0 0
    %328 = vmatprep.subr.bf16.mxu0 0
    %329 = vmatpush1.bf16.xpose.msra.mxu0 0
    %330 = vmatprep.subr.bf16.mxu0 0
    %331 = vmatpush1.bf16.xpose.msra.mxu0 0
    %332 = vmatprep.subr.bf16.mxu0 0
    %333 = vmatpush1.bf16.xpose.msra.mxu0 0
    %334 = vmatprep.subr.bf16.mxu0 0
    %335 = vmatpush1.bf16.xpose.msra.mxu0 0
    %336 = vmatprep.subr.bf16.mxu0 0
    %337 = vmatpush1.bf16.xpose.msra.mxu0 0
    %338 = vmatprep.subr.bf16.mxu0 0
    %339 = vmatpush1.bf16.xpose.msra.mxu0 0
    %340 = vmatprep.subr.bf16.mxu0 0
    %341 = vmatpush1.bf16.xpose.msra.mxu0 0
    %342 = vmatprep.subr.bf16.mxu0 0
    %343 = vmatpush1.bf16.xpose.msra.mxu0 0
    %344 = vmatprep.subr.bf16.mxu0 0
    %345 = vmatpush1.bf16.xpose.msra.mxu0 0
    %346 = vmatprep.subr.bf16.mxu0 0
    %347 = vmatpush1.bf16.xpose.msra.mxu0 0
    %348 = vmatprep.subr.bf16.mxu0 0
    %349 = vmatpush1.bf16.xpose.msra.mxu0 0
    %350 = vmatprep.mubr.bf16.mxu0 0
    %351 = vmatmul.mubr.bf16.gmra.mrb[0].mxu0 %v313
    %v352 = vpop.f32.mrb[0].mxu0
    %v353 = vadd.f32 0.0, %v352
    %v354 = vpop.f32.mrb[0].mxu0
    %v355 = vpop.f32.mrb[0].mxu0
    %v356 = vpop.f32.mrb[0].mxu0
    %357 = vdwg.mxu0
    %v358 = vmul.f32 %v353, 0.25
    %v359 = vadd.f32 %v358, %v243
    %v360 = vsel %vm245, %v359, -inf
    %361 = vmax.xlane.f32.xlu0 %v360
    %v362 = vpop.xlane.xlu0 %361
    %v363 = vsub.f32 %v359, %v362
    %v364 = vmul.f32 %v363, 1.442695
    %v365 = vpow.pop %v364
    %v366 = vsel %vm245, %v365, 0.0
    %367 = vadd.xlane.f32.xlu0 %v366
    %v368 = vpop.xlane.xlu0 %367
    %v369 = vrcp.pop %v368
    %v370 = vmul.f32 %v365, %v369
    %v371 = vpack.c.bf16 %v370, %v370
    %372 = vrot.lane.b32.xlu0 %v188, 48
    %v373 = vpop.permute.xlu0 %372
    %v375 = vsel %vm245, %v371, 0
    %v378 = vsel %vm263, %v373, 0
    %380 = vmatprep.subr.bf16.mxu0 0
    %381 = vmatpush1.bf16.msra.mxu0 %v378
    %382 = vmatprep.subr.bf16.mxu0 0
    %383 = vmatpush1.bf16.msra.mxu0 0
    %384 = vmatprep.subr.bf16.mxu0 0
    %385 = vmatpush1.bf16.msra.mxu0 0
    %386 = vmatprep.subr.bf16.mxu0 0
    %387 = vmatpush1.bf16.msra.mxu0 0
    %388 = vmatprep.subr.bf16.mxu0 0
    %389 = vmatpush1.bf16.msra.mxu0 0
    %390 = vmatprep.subr.bf16.mxu0 0
    %391 = vmatpush1.bf16.msra.mxu0 0
    %392 = vmatprep.subr.bf16.mxu0 0
    %393 = vmatpush1.bf16.msra.mxu0 0
    %394 = vmatprep.subr.bf16.mxu0 0
    %395 = vmatpush1.bf16.msra.mxu0 0
    %396 = vmatprep.subr.bf16.mxu0 0
    %397 = vmatpush1.bf16.msra.mxu0 0
    %398 = vmatprep.subr.bf16.mxu0 0
    %399 = vmatpush1.bf16.msra.mxu0 0
    %400 = vmatprep.subr.bf16.mxu0 0
    %401 = vmatpush1.bf16.msra.mxu0 0
    %402 = vmatprep.subr.bf16.mxu0 0
    %403 = vmatpush1.bf16.msra.mxu0 0
    %404 = vmatprep.subr.bf16.mxu0 0
    %405 = vmatpush1.bf16.msra.mxu0 0
    %406 = vmatprep.subr.bf16.mxu0 0
    %407 = vmatpush1.bf16.msra.mxu0 0
    %408 = vmatprep.subr.bf16.mxu0 0
    %409 = vmatpush1.bf16.msra.mxu0 0
    %410 = vmatprep.subr.bf16.mxu0 0
    %411 = vmatpush1.bf16.msra.mxu0 0
    %412 = vmatprep.mubr.bf16.mxu0 0
    %413 = vmatmul.mubr.bf16.gmra.mrb[0].mxu0 %v375
    %v414 = vpop.f32.mrb[0].mxu0
    %v415 = vadd.f32 0.0, %v414
    %v416 = vpop.f32.mrb[0].mxu0
    %v417 = vpop.f32.mrb[0].mxu0
    %v418 = vpop.f32.mrb[0].mxu0
    %419 = vdwg.mxu0
    %v420 = vpack.c.bf16 %v415, %v415
    %v423 = vunpack.c.l.b16 %v71
    %v424 = vunpack.c.l.b16 %v72
    %v425 = vpack.c.b16 %v424, %v423
    %v428 = vsel %vm192, %v420, 0
    %430 = vmatprep.subr.bf16.mxu0 0
    %431 = vmatpush1.bf16.msra.mxu0 %v425
    %432 = vmatprep.subr.bf16.mxu0 0
    %433 = vmatpush1.bf16.msra.mxu0 0
    %434 = vmatprep.subr.bf16.mxu0 0
    %435 = vmatpush1.bf16.msra.mxu0 0
    %436 = vmatprep.subr.bf16.mxu0 0
    %437 = vmatpush1.bf16.msra.mxu0 0
    %438 = vmatprep.subr.bf16.mxu0 0
    %439 = vmatpush1.bf16.msra.mxu0 0
    %440 = vmatprep.subr.bf16.mxu0 0
    %441 = vmatpush1.bf16.msra.mxu0 0
    %442 = vmatprep.subr.bf16.mxu0 0
    %443 = vmatpush1.bf16.msra.mxu0 0
    %444 = vmatprep.subr.bf16.mxu0 0
    %445 = vmatpush1.bf16.msra.mxu0 0
    %446 = vmatprep.subr.bf16.mxu0 0
    %447 = vmatpush1.bf16.msra.mxu0 0
    %448 = vmatprep.subr.bf16.mxu0 0
    %449 = vmatpush1.bf16.msra.mxu0 0
    %450 = vmatprep.subr.bf16.mxu0 0
    %451 = vmatpush1.bf16.msra.mxu0 0
    %452 = vmatprep.subr.bf16.mxu0 0
    %453 = vmatpush1.bf16.msra.mxu0 0
    %454 = vmatprep.subr.bf16.mxu0 0
    %455 = vmatpush1.bf16.msra.mxu0 0
    %456 = vmatprep.subr.bf16.mxu0 0
    %457 = vmatpush1.bf16.msra.mxu0 0
    %458 = vmatprep.subr.bf16.mxu0 0
    %459 = vmatpush1.bf16.msra.mxu0 0
    %460 = vmatprep.subr.bf16.mxu0 0
    %461 = vmatpush1.bf16.msra.mxu0 0
    %462 = vmatprep.mubr.bf16.mxu0 0
    %463 = vmatmul.mubr.bf16.gmra.mrb[0].mxu0 %v428
    %v464 = vpop.f32.mrb[0].mxu0
    %v465 = vadd.f32 0.0, %v464
    %v466 = vpop.f32.mrb[0].mxu0
    %v467 = vpop.f32.mrb[0].mxu0
    %v468 = vpop.f32.mrb[0].mxu0
    %469 = vdwg.mxu0
    %v472 = vunpack.c.l.b16 %v69
    %v473 = vunpack.c.l.b16 %v70
    %v474 = vpack.c.b16 %v473, %v472
    %v477 = vsel %vm192, %v307, 0
    %479 = vmatprep.subr.bf16.mxu0 0
    %480 = vmatpush1.bf16.msra.mxu0 %v474
    %481 = vmatprep.subr.bf16.mxu0 0
    %482 = vmatpush1.bf16.msra.mxu0 0
    %483 = vmatprep.subr.bf16.mxu0 0
    %484 = vmatpush1.bf16.msra.mxu0 0
    %485 = vmatprep.subr.bf16.mxu0 0
    %486 = vmatpush1.bf16.msra.mxu0 0
    %487 = vmatprep.subr.bf16.mxu0 0
    %488 = vmatpush1.bf16.msra.mxu0 0
    %489 = vmatprep.subr.bf16.mxu0 0
    %490 = vmatpush1.bf16.msra.mxu0 0
    %491 = vmatprep.subr.bf16.mxu0 0
    %492 = vmatpush1.bf16.msra.mxu0 0
    %493 = vmatprep.subr.bf16.mxu0 0
    %494 = vmatpush1.bf16.msra.mxu0 0
    %495 = vmatprep.subr.bf16.mxu0 0
    %496 = vmatpush1.bf16.msra.mxu0 0
    %497 = vmatprep.subr.bf16.mxu0 0
    %498 = vmatpush1.bf16.msra.mxu0 0
    %499 = vmatprep.subr.bf16.mxu0 0
    %500 = vmatpush1.bf16.msra.mxu0 0
    %501 = vmatprep.subr.bf16.mxu0 0
    %502 = vmatpush1.bf16.msra.mxu0 0
    %503 = vmatprep.subr.bf16.mxu0 0
    %504 = vmatpush1.bf16.msra.mxu0 0
    %505 = vmatprep.subr.bf16.mxu0 0
    %506 = vmatpush1.bf16.msra.mxu0 0
    %507 = vmatprep.subr.bf16.mxu0 0
    %508 = vmatpush1.bf16.msra.mxu0 0
    %509 = vmatprep.subr.bf16.mxu0 0
    %510 = vmatpush1.bf16.msra.mxu0 0
    %511 = vmatprep.mubr.bf16.mxu0 0
    %512 = vmatmul.mubr.bf16.gmra.mrb[0].mxu0 %v477
    %v513 = vpop.f32.mrb[0].mxu0
    %v514 = vadd.f32 %v465, %v513
    %v515 = vpop.f32.mrb[0].mxu0
    %v516 = vpop.f32.mrb[0].mxu0
    %v517 = vpop.f32.mrb[0].mxu0
    %518 = vdwg.mxu0
    %v519 = vrot.slane %v188, 4
    %520 = vrot.lane.b32.xlu0 %v519, 96
    %v521 = vpop.permute.xlu0 %520
    %v523 = vsel %vm192, %v519, 0
    %v526 = vsel %vm192, %v521, 0
    %528 = vmatprep.subr.bf16.mxu0 0
    %529 = vmatpush1.bf16.xpose.msra.mxu0 %v526
    %530 = vmatprep.subr.bf16.mxu0 0
    %531 = vmatpush1.bf16.xpose.msra.mxu0 0
    %532 = vmatprep.subr.bf16.mxu0 0
    %533 = vmatpush1.bf16.xpose.msra.mxu0 0
    %534 = vmatprep.subr.bf16.mxu0 0
    %535 = vmatpush1.bf16.xpose.msra.mxu0 0
    %536 = vmatprep.subr.bf16.mxu0 0
    %537 = vmatpush1.bf16.xpose.msra.mxu0 0
    %538 = vmatprep.subr.bf16.mxu0 0
    %539 = vmatpush1.bf16.xpose.msra.mxu0 0
    %540 = vmatprep.subr.bf16.mxu0 0
    %541 = vmatpush1.bf16.xpose.msra.mxu0 0
    %542 = vmatprep.subr.bf16.mxu0 0
    %543 = vmatpush1.bf16.xpose.msra.mxu0 0
    %544 = vmatprep.subr.bf16.mxu0 0
    %545 = vmatpush1.bf16.xpose.msra.mxu0 0
    %546 = vmatprep.subr.bf16.mxu0 0
    %547 = vmatpush1.bf16.xpose.msra.mxu0 0
    %548 = vmatprep.subr.bf16.mxu0 0
    %549 = vmatpush1.bf16.xpose.msra.mxu0 0
    %550 = vmatprep.subr.bf16.mxu0 0
    %551 = vmatpush1.bf16.xpose.msra.mxu0 0
    %552 = vmatprep.subr.bf16.mxu0 0
    %553 = vmatpush1.bf16.xpose.msra.mxu0 0
    %554 = vmatprep.subr.bf16.mxu0 0
    %555 = vmatpush1.bf16.xpose.msra.mxu0 0
    %556 = vmatprep.subr.bf16.mxu0 0
    %557 = vmatpush1.bf16.xpose.msra.mxu0 0
    %558 = vmatprep.subr.bf16.mxu0 0
    %559 = vmatpush1.bf16.xpose.msra.mxu0 0
    %560 = vmatprep.mubr.bf16.mxu0 0
    %561 = vmatmul.mubr.bf16.gmra.mrb[0].mxu0 %v523
    %v562 = vpop.f32.mrb[0].mxu0
    %v563 = vadd.f32 0.0, %v562
    %v564 = vpop.f32.mrb[0].mxu0
    %v565 = vpop.f32.mrb[0].mxu0
    %v566 = vpop.f32.mrb[0].mxu0
    %567 = vdwg.mxu0
    %v568 = vmul.f32 %v563, 0.25
    %v569 = vlaneseq
    %v570 = vshrl.u32 %v569, 7
    %v571 = vsub.s32 1, %v570
    %v572 = vrot.slane %v61, %v571
    %v573 = vadd.f32 %v568, %v572
    %v574 = vsel %vm245, %v573, -inf
    %575 = vmax.xlane.f32.xlu0 %v574
    %v576 = vpop.xlane.xlu0 %575
    %v577 = vsub.f32 %v573, %v576
    %v578 = vmul.f32 %v577, 1.442695
    %v579 = vpow.pop %v578
    %v580 = vsel %vm245, %v579, 0.0
    %581 = vadd.xlane.f32.xlu0 %v580
    %v582 = vpop.xlane.xlu0 %581
    %v583 = vrcp.pop %v582
    %v584 = vmul.f32 %v579, %v583
    %v585 = vpack.c.bf16 %v584, %v584
    %586 = vrot.lane.b32.xlu0 %v519, 64
    %v587 = vpop.permute.xlu0 %586
    %v589 = vsel %vm245, %v585, 0
    %v592 = vsel %vm263, %v587, 0
    %594 = vmatprep.subr.bf16.mxu0 0
    %595 = vmatpush1.bf16.msra.mxu0 %v592
    %596 = vmatprep.subr.bf16.mxu0 0
    %597 = vmatpush1.bf16.msra.mxu0 0
    %598 = vmatprep.subr.bf16.mxu0 0
    %599 = vmatpush1.bf16.msra.mxu0 0
    %600 = vmatprep.subr.bf16.mxu0 0
    %601 = vmatpush1.bf16.msra.mxu0 0
    %602 = vmatprep.subr.bf16.mxu0 0
    %603 = vmatpush1.bf16.msra.mxu0 0
    %604 = vmatprep.subr.bf16.mxu0 0
    %605 = vmatpush1.bf16.msra.mxu0 0
    %606 = vmatprep.subr.bf16.mxu0 0
    %607 = vmatpush1.bf16.msra.mxu0 0
    %608 = vmatprep.subr.bf16.mxu0 0
    %609 = vmatpush1.bf16.msra.mxu0 0
    %610 = vmatprep.subr.bf16.mxu0 0
    %611 = vmatpush1.bf16.msra.mxu0 0
    %612 = vmatprep.subr.bf16.mxu0 0
    %613 = vmatpush1.bf16.msra.mxu0 0
    %614 = vmatprep.subr.bf16.mxu0 0
    %615 = vmatpush1.bf16.msra.mxu0 0
    %616 = vmatprep.subr.bf16.mxu0 0
    %617 = vmatpush1.bf16.msra.mxu0 0
    %618 = vmatprep.subr.bf16.mxu0 0
    %619 = vmatpush1.bf16.msra.mxu0 0
    %620 = vmatprep.subr.bf16.mxu0 0
    %621 = vmatpush1.bf16.msra.mxu0 0
    %622 = vmatprep.subr.bf16.mxu0 0
    %623 = vmatpush1.bf16.msra.mxu0 0
    %624 = vmatprep.subr.bf16.mxu0 0
    %625 = vmatpush1.bf16.msra.mxu0 0
    %626 = vmatprep.mubr.bf16.mxu0 0
    %627 = vmatmul.mubr.bf16.gmra.mrb[0].mxu0 %v589
    %v628 = vpop.f32.mrb[0].mxu0
    %v629 = vadd.f32 0.0, %v628
    %v630 = vpop.f32.mrb[0].mxu0
    %v631 = vpop.f32.mrb[0].mxu0
    %v632 = vpop.f32.mrb[0].mxu0
    %633 = vdwg.mxu0
    %v634 = vpack.c.bf16 %v629, %v629
    %635 = vrot.lane.b32.xlu0 %v519, 112
    %v636 = vpop.permute.xlu0 %635
    %637 = vrot.lane.b32.xlu0 %v519, 80
    %v638 = vpop.permute.xlu0 %637
    %v640 = vsel %vm192, %v636, 0
    %v643 = vsel %vm192, %v638, 0
    %645 = vmatprep.subr.bf16.mxu0 0
    %646 = vmatpush1.bf16.xpose.msra.mxu0 %v643
    %647 = vmatprep.subr.bf16.mxu0 0
    %648 = vmatpush1.bf16.xpose.msra.mxu0 0
    %649 = vmatprep.subr.bf16.mxu0 0
    %650 = vmatpush1.bf16.xpose.msra.mxu0 0
    %651 = vmatprep.subr.bf16.mxu0 0
    %652 = vmatpush1.bf16.xpose.msra.mxu0 0
    %653 = vmatprep.subr.bf16.mxu0 0
    %654 = vmatpush1.bf16.xpose.msra.mxu0 0
    %655 = vmatprep.subr.bf16.mxu0 0
    %656 = vmatpush1.bf16.xpose.msra.mxu0 0
    %657 = vmatprep.subr.bf16.mxu0 0
    %658 = vmatpush1.bf16.xpose.msra.mxu0 0
    %659 = vmatprep.subr.bf16.mxu0 0
    %660 = vmatpush1.bf16.xpose.msra.mxu0 0
    %661 = vmatprep.subr.bf16.mxu0 0
    %662 = vmatpush1.bf16.xpose.msra.mxu0 0
    %663 = vmatprep.subr.bf16.mxu0 0
    %664 = vmatpush1.bf16.xpose.msra.mxu0 0
    %665 = vmatprep.subr.bf16.mxu0 0
    %666 = vmatpush1.bf16.xpose.msra.mxu0 0
    %667 = vmatprep.subr.bf16.mxu0 0
    %668 = vmatpush1.bf16.xpose.msra.mxu0 0
    %669 = vmatprep.subr.bf16.mxu0 0
    %670 = vmatpush1.bf16.xpose.msra.mxu0 0
    %671 = vmatprep.subr.bf16.mxu0 0
    %672 = vmatpush1.bf16.xpose.msra.mxu0 0
    %673 = vmatprep.subr.bf16.mxu0 0
    %674 = vmatpush1.bf16.xpose.msra.mxu0 0
    %675 = vmatprep.subr.bf16.mxu0 0
    %676 = vmatpush1.bf16.xpose.msra.mxu0 0
    %677 = vmatprep.mubr.bf16.mxu0 0
    %678 = vmatmul.mubr.bf16.gmra.mrb[0].mxu0 %v640
    %v679 = vpop.f32.mrb[0].mxu0
    %v680 = vadd.f32 0.0, %v679
    %v681 = vpop.f32.mrb[0].mxu0
    %v682 = vpop.f32.mrb[0].mxu0
    %v683 = vpop.f32.mrb[0].mxu0
    %684 = vdwg.mxu0
    %v685 = vmul.f32 %v680, 0.25
    %v686 = vadd.f32 %v685, %v572
    %v687 = vsel %vm245, %v686, -inf
    %688 = vmax.xlane.f32.xlu0 %v687
    %v689 = vpop.xlane.xlu0 %688
    %v690 = vsub.f32 %v686, %v689
    %v691 = vmul.f32 %v690, 1.442695
    %v692 = vpow.pop %v691
    %v693 = vsel %vm245, %v692, 0.0
    %694 = vadd.xlane.f32.xlu0 %v693
    %v695 = vpop.xlane.xlu0 %694
    %v696 = vrcp.pop %v695
    %v697 = vmul.f32 %v692, %v696
    %v698 = vpack.c.bf16 %v697, %v697
    %699 = vrot.lane.b32.xlu0 %v519, 48
    %v700 = vpop.permute.xlu0 %699
    %v702 = vsel %vm245, %v698, 0
    %v705 = vsel %vm263, %v700, 0
    %707 = vmatprep.subr.bf16.mxu0 0
    %708 = vmatpush1.bf16.msra.mxu0 %v705
    %709 = vmatprep.subr.bf16.mxu0 0
    %710 = vmatpush1.bf16.msra.mxu0 0
    %711 = vmatprep.subr.bf16.mxu0 0
    %712 = vmatpush1.bf16.msra.mxu0 0
    %713 = vmatprep.subr.bf16.mxu0 0
    %714 = vmatpush1.bf16.msra.mxu0 0
    %715 = vmatprep.subr.bf16.mxu0 0
    %716 = vmatpush1.bf16.msra.mxu0 0
    %717 = vmatprep.subr.bf16.mxu0 0
    %718 = vmatpush1.bf16.msra.mxu0 0
    %719 = vmatprep.subr.bf16.mxu0 0
    %720 = vmatpush1.bf16.msra.mxu0 0
    %721 = vmatprep.subr.bf16.mxu0 0
    %722 = vmatpush1.bf16.msra.mxu0 0
    %723 = vmatprep.subr.bf16.mxu0 0
    %724 = vmatpush1.bf16.msra.mxu0 0
    %725 = vmatprep.subr.bf16.mxu0 0
    %726 = vmatpush1.bf16.msra.mxu0 0
    %727 = vmatprep.subr.bf16.mxu0 0
    %728 = vmatpush1.bf16.msra.mxu0 0
    %729 = vmatprep.subr.bf16.mxu0 0
    %730 = vmatpush1.bf16.msra.mxu0 0
    %731 = vmatprep.subr.bf16.mxu0 0
    %732 = vmatpush1.bf16.msra.mxu0 0
    %733 = vmatprep.subr.bf16.mxu0 0
    %734 = vmatpush1.bf16.msra.mxu0 0
    %735 = vmatprep.subr.bf16.mxu0 0
    %736 = vmatpush1.bf16.msra.mxu0 0
    %737 = vmatprep.subr.bf16.mxu0 0
    %738 = vmatpush1.bf16.msra.mxu0 0
    %739 = vmatprep.mubr.bf16.mxu0 0
    %740 = vmatmul.mubr.bf16.gmra.mrb[0].mxu0 %v702
    %v741 = vpop.f32.mrb[0].mxu0
    %v742 = vadd.f32 0.0, %v741
    %v743 = vpop.f32.mrb[0].mxu0
    %v744 = vpop.f32.mrb[0].mxu0
    %v745 = vpop.f32.mrb[0].mxu0
    %746 = vdwg.mxu0
    %v747 = vpack.c.bf16 %v742, %v742
    %v749 = vsel %vm192, %v747, 0
    %751 = vmatprep.subr.bf16.mxu0 0
    %752 = vmatpush1.bf16.msra.mxu0 %v425
    %753 = vmatprep.subr.bf16.mxu0 0
    %754 = vmatpush1.bf16.msra.mxu0 0
    %755 = vmatprep.subr.bf16.mxu0 0
    %756 = vmatpush1.bf16.msra.mxu0 0
    %757 = vmatprep.subr.bf16.mxu0 0
    %758 = vmatpush1.bf16.msra.mxu0 0
    %759 = vmatprep.subr.bf16.mxu0 0
    %760 = vmatpush1.bf16.msra.mxu0 0
    %761 = vmatprep.subr.bf16.mxu0 0
    %762 = vmatpush1.bf16.msra.mxu0 0
    %763 = vmatprep.subr.bf16.mxu0 0
    %764 = vmatpush1.bf16.msra.mxu0 0
    %765 = vmatprep.subr.bf16.mxu0 0
    %766 = vmatpush1.bf16.msra.mxu0 0
    %767 = vmatprep.subr.bf16.mxu0 0
    %768 = vmatpush1.bf16.msra.mxu0 0
    %769 = vmatprep.subr.bf16.mxu0 0
    %770 = vmatpush1.bf16.msra.mxu0 0
    %771 = vmatprep.subr.bf16.mxu0 0
    %772 = vmatpush1.bf16.msra.mxu0 0
    %773 = vmatprep.subr.bf16.mxu0 0
    %774 = vmatpush1.bf16.msra.mxu0 0
    %775 = vmatprep.subr.bf16.mxu0 0
    %776 = vmatpush1.bf16.msra.mxu0 0
    %777 = vmatprep.subr.bf16.mxu0 0
    %778 = vmatpush1.bf16.msra.mxu0 0
    %779 = vmatprep.subr.bf16.mxu0 0
    %780 = vmatpush1.bf16.msra.mxu0 0
    %781 = vmatprep.subr.bf16.mxu0 0
    %782 = vmatpush1.bf16.msra.mxu0 0
    %783 = vmatprep.mubr.bf16.mxu0 0
    %784 = vmatmul.mubr.bf16.gmra.mrb[0].mxu0 %v749
    %v785 = vpop.f32.mrb[0].mxu0
    %v786 = vadd.f32 0.0, %v785
    %v787 = vpop.f32.mrb[0].mxu0
    %v788 = vpop.f32.mrb[0].mxu0
    %v789 = vpop.f32.mrb[0].mxu0
    %790 = vdwg.mxu0
    %v792 = vsel %vm192, %v634, 0
    %794 = vmatprep.subr.bf16.mxu0 0
    %795 = vmatpush1.bf16.msra.mxu0 %v474
    %796 = vmatprep.subr.bf16.mxu0 0
    %797 = vmatpush1.bf16.msra.mxu0 0
    %798 = vmatprep.subr.bf16.mxu0 0
    %799 = vmatpush1.bf16.msra.mxu0 0
    %800 = vmatprep.subr.bf16.mxu0 0
    %801 = vmatpush1.bf16.msra.mxu0 0
    %802 = vmatprep.subr.bf16.mxu0 0
    %803 = vmatpush1.bf16.msra.mxu0 0
    %804 = vmatprep.subr.bf16.mxu0 0
    %805 = vmatpush1.bf16.msra.mxu0 0
    %806 = vmatprep.subr.bf16.mxu0 0
    %807 = vmatpush1.bf16.msra.mxu0 0
    %808 = vmatprep.subr.bf16.mxu0 0
    %809 = vmatpush1.bf16.msra.mxu0 0
    %810 = vmatprep.subr.bf16.mxu0 0
    %811 = vmatpush1.bf16.msra.mxu0 0
    %812 = vmatprep.subr.bf16.mxu0 0
    %813 = vmatpush1.bf16.msra.mxu0 0
    %814 = vmatprep.subr.bf16.mxu0 0
    %815 = vmatpush1.bf16.msra.mxu0 0
    %816 = vmatprep.subr.bf16.mxu0 0
    %817 = vmatpush1.bf16.msra.mxu0 0
    %818 = vmatprep.subr.bf16.mxu0 0
    %819 = vmatpush1.bf16.msra.mxu0 0
    %820 = vmatprep.subr.bf16.mxu0 0
    %821 = vmatpush1.bf16.msra.mxu0 0
    %822 = vmatprep.subr.bf16.mxu0 0
    %823 = vmatpush1.bf16.msra.mxu0 0
    %824 = vmatprep.subr.bf16.mxu0 0
    %825 = vmatpush1.bf16.msra.mxu0 0
    %826 = vmatprep.mubr.bf16.mxu0 0
    %827 = vmatmul.mubr.bf16.gmra.mrb[0].mxu0 %v792
    %v828 = vpop.f32.mrb[0].mxu0
    %v829 = vadd.f32 %v786, %v828
    %v830 = vpop.f32.mrb[0].mxu0
    %v831 = vpop.f32.mrb[0].mxu0
    %v832 = vpop.f32.mrb[0].mxu0
    %833 = vdwg.mxu0
    %v835 = vlaneseq
    %v836 = vshrl.u32 %v835, 7
    %v837 = vsub.s32 0, %v836
    %v838 = vrot.slane %v73, %v837
    %v840 = vadd.f32 %v514, %v838
    %v841 = vadd.f32 %v829, %v838
    %v842 = vadd.f32 %v840, %v57
    %v843 = vadd.f32 %v841, %v60
    %v844 = vsel %vm143, %v842, 0.0
    %845 = vadd.xlane.f32.xlu0 %v844
    %v846 = vpop.xlane.xlu0 %845
    %v847 = vsel %vm143, %v843, 0.0
    %848 = vadd.xlane.f32.xlu0 %v847
    %v849 = vpop.xlane.xlu0 %848
    %v850 = vrcp.pop 32.0
    %v851 = vmul.f32 %v846, %v850
    %v852 = vmul.f32 %v849, %v850
    %v853 = vsub.f32 %v842, %v851
    %v854 = vsub.f32 %v843, %v852
    %v855 = vmul.f32 %v853, %v853
    %v856 = vmul.f32 %v854, %v854
    %v857 = vsel %vm143, %v855, 0.0
    %858 = vadd.xlane.f32.xlu0 %v857
    %v859 = vpop.xlane.xlu0 %858
    %v860 = vsel %vm143, %v856, 0.0
    %861 = vadd.xlane.f32.xlu0 %v860
    %v862 = vpop.xlane.xlu0 %861
    %v863 = vmul.f32 %v859, %v850
    %v864 = vmul.f32 %v862, %v850
    %v865 = vadd.f32 %v863, 1e-05
    %v866 = vadd.f32 %v864, 1e-05
    %v867 = vrsqrt.pop %v865
    %v868 = vrsqrt.pop %v866
    %v869 = vmul.f32 %v853, %v867
    %v870 = vmul.f32 %v854, %v868
    %v872 = vlaneseq
    %v873 = vshrl.u32 %v872, 7
    %v874 = vsub.s32 0, %v873
    %v875 = vrot.slane %v74, %v874
    %v877 = vmul.f32 %v869, %v875
    %v878 = vmul.f32 %v870, %v875
    %v880 = vlaneseq
    %v881 = vshrl.u32 %v880, 7
    %v882 = vsub.s32 0, %v881
    %v883 = vrot.slane %v75, %v882
    %v885 = vadd.f32 %v877, %v883
    %v886 = vadd.f32 %v878, %v883
    %888 = vset.pattern.permute.xlu0 0
    %889 = vperm.xlu0 %888, %v62
    %v890 = vpop.permute.xlu0 %889
    %893 = vset.pattern.permute.xlu0 0
    %894 = vperm.xlu0 %893, %v63
    %v895 = vpop.permute.xlu0 %894
    %v897 = vmul.f32 %v885, %v890
    %v898 = vmul.f32 %v886, %v895
    %v899 = vpack.c.bf16 %v897, %v897
    %v901 = vrot.slane %v899, 6
    %vm902 = vcmask 1041408
    %v905 = vsel %vm902, 0, %v901
    %vm906 = vcmask 1045504
    %v907 = vsel %vm906, %v905, 0
    %v908 = vshrl.u32 %v907, 16
    %v910 = vshll.u32 %v907, 16
    %v912 = vrot.slane %v910, 1
    %v913 = vor.u32 %v908, %v912
    %914 = vrot.lane.b32.xlu0 %v913, 32
    %v915 = vpop.permute.xlu0 %914
    %v917 = vrot.slane %v907, 1
    %918 = vrot.lane.b32.xlu0 %v917, 64
    %v919 = vpop.permute.xlu0 %918
    %v920 = vrot.slane %v908, 1
    %v921 = vrot.slane %v910, 2
    %v922 = vor.u32 %v920, %v921
    %923 = vrot.lane.b32.xlu0 %v922, 96
    %v924 = vpop.permute.xlu0 %923
    %v925 = vrot.slane %v907, 2
    %v926 = vrot.slane %v908, 2
    %v927 = vrot.slane %v910, 3
    %v928 = vor.u32 %v926, %v927
    %929 = vrot.lane.b32.xlu0 %v928, 32
    %v930 = vpop.permute.xlu0 %929
    %v931 = vrot.slane %v907, 3
    %932 = vrot.lane.b32.xlu0 %v931, 64
    %v933 = vpop.permute.xlu0 %932
    %v934 = vrot.slane %v908, 3
    %v935 = vrot.slane %v910, 4
    %v936 = vor.u32 %v934, %v935
    %937 = vrot.lane.b32.xlu0 %v936, 96
    %v938 = vpop.permute.xlu0 %937
    %v939 = vrot.slane %v907, 4
    %v941 = vsel %vm143, %v907, %v915
    %vm942 = vcmask 523264
    %v944 = vsel %vm942, %v941, %v919
    %vm945 = vcmask 785408
    %v947 = vsel %vm945, %v944, %v924
    %v950 = vsel %vm143, %v925, %v930
    %v952 = vsel %vm942, %v950, %v933
    %v954 = vsel %vm945, %v952, %v938
    %v955 = vpack.c.bf16 %v898, %v898
    %v957 = vrot.slane %v955, 6
    %v959 = vsel %vm902, 0, %v957
    %v960 = vsel %vm906, %v959, 0
    %v961 = vshrl.u32 %v960, 16
    %v963 = vshll.u32 %v960, 16
    %v965 = vrot.slane %v963, 1
    %v966 = vor.u32 %v961, %v965
    %967 = vrot.lane.b32.xlu0 %v966, 32
    %v968 = vpop.permute.xlu0 %967
    %v970 = vrot.slane %v960, 1
    %971 = vrot.lane.b32.xlu0 %v970, 64
    %v972 = vpop.permute.xlu0 %971
    %v973 = vrot.slane %v961, 1
    %v974 = vrot.slane %v963, 2
    %v975 = vor.u32 %v973, %v974
    %976 = vrot.lane.b32.xlu0 %v975, 96
    %v977 = vpop.permute.xlu0 %976
    %v978 = vrot.slane %v960, 2
    %v979 = vrot.slane %v961, 2
    %v980 = vrot.slane %v963, 3
    %v981 = vor.u32 %v979, %v980
    %982 = vrot.lane.b32.xlu0 %v981, 32
    %v983 = vpop.permute.xlu0 %982
    %v984 = vrot.slane %v960, 3
    %985 = vrot.lane.b32.xlu0 %v984, 64
    %v986 = vpop.permute.xlu0 %985
    %v987 = vrot.slane %v961, 3
    %v988 = vrot.slane %v963, 4
    %v989 = vor.u32 %v987, %v988
    %990 = vrot.lane.b32.xlu0 %v989, 96
    %v991 = vpop.permute.xlu0 %990
    %v992 = vrot.slane %v960, 4
    %v994 = vsel %vm143, %v960, %v968
    %v996 = vsel %vm942, %v994, %v972
    %v998 = vsel %vm945, %v996, %v977
    %v1001 = vsel %vm143, %v978, %v983
    %v1003 = vsel %vm942, %v1001, %v986
    %v1005 = vsel %vm945, %v1003, %v991
    %v1008 = vrot.slane %v998, 4
    %v1009 = vrot.slane %v1005, 4
    %v1010 = vrot.slane %v992, 4
    %v1012 = vsel %vm263, %v947, %v1008
    %v1015 = vsel %vm263, %v954, %v1009
    %v1019 = vsel %vm263, %v939, %v1010
    %v1021 = vlaneseq
    %v1022 = vshrl.u32 %v1021, 7
    %v1023 = vsub.s32 0, %v1022
    %v1024 = vrot.slane %v112, %v1023
    %v1062 = vunpack.c.l.b16 %v76
    %v1063 = vunpack.c.l.b16 %v77
    %v1064 = vunpack.c.l.b16 %v78
    %v1065 = vunpack.c.l.b16 %v79
    %v1066 = vunpack.c.l.b16 %v80
    %v1067 = vunpack.c.l.b16 %v81
    %v1068 = vunpack.c.l.b16 %v82
    %v1069 = vunpack.c.l.b16 %v83
    %v1070 = vunpack.c.l.b16 %v84
    %v1071 = vunpack.c.l.b16 %v85
    %v1072 = vunpack.c.l.b16 %v86
    %v1073 = vunpack.c.l.b16 %v87
    %v1074 = vunpack.c.l.b16 %v88
    %v1075 = vunpack.c.l.b16 %v89
    %v1076 = vunpack.c.l.b16 %v90
    %v1077 = vunpack.c.l.b16 %v91
    %v1078 = vunpack.c.l.b16 %v92
    %v1079 = vunpack.c.l.b16 %v93
    %v1080 = vunpack.c.l.b16 %v94
    %v1081 = vunpack.c.l.b16 %v95
    %v1082 = vunpack.c.l.b16 %v96
    %v1083 = vunpack.c.l.b16 %v97
    %v1084 = vunpack.c.l.b16 %v98
    %v1085 = vunpack.c.l.b16 %v99
    %v1086 = vunpack.c.l.b16 %v100
    %v1087 = vunpack.c.l.b16 %v101
    %v1088 = vunpack.c.l.b16 %v102
    %v1089 = vunpack.c.l.b16 %v103
    %v1090 = vunpack.c.l.b16 %v104
    %v1091 = vunpack.c.l.b16 %v105
    %v1092 = vunpack.c.l.b16 %v106
    %v1093 = vunpack.c.l.b16 %v107
    %v1094 = vunpack.c.l.b16 %v108
    %v1095 = vunpack.c.l.b16 %v109
    %v1096 = vunpack.c.l.b16 %v110
    %v1097 = vunpack.c.l.b16 %v111
    %v1098 = vpack.c.b16 %v1063, %v1062
    %v1099 = vpack.c.b16 %v1065, %v1064
    %v1100 = vpack.c.b16 %v1067, %v1066
    %v1101 = vpack.c.b16 %v1069, %v1068
    %v1102 = vpack.c.b16 %v1071, %v1070
    %v1103 = vpack.c.b16 %v1073, %v1072
    %v1104 = vpack.c.b16 %v1075, %v1074
    %v1105 = vpack.c.b16 %v1077, %v1076
    %v1106 = vpack.c.b16 %v1079, %v1078
    %v1107 = vpack.c.b16 %v1081, %v1080
    %v1108 = vpack.c.b16 %v1083, %v1082
    %v1109 = vpack.c.b16 %v1085, %v1084
    %v1110 = vpack.c.b16 %v1087, %v1086
    %v1111 = vpack.c.b16 %v1089, %v1088
    %v1112 = vpack.c.b16 %v1091, %v1090
    %v1113 = vpack.c.b16 %v1093, %v1092
    %v1114 = vpack.c.b16 %v1095, %v1094
    %v1115 = vpack.c.b16 %v1097, %v1096
    %v1134 = vsel %vm143, %v1019, 0
    %1136 = vmatprep.subr.bf16.mxu0 0
    %1137 = vmatpush1.bf16.msra.mxu0 %v1098
    %1138 = vmatprep.subr.bf16.mxu0 0
    %1139 = vmatpush1.bf16.msra.mxu0 %v1099
    %1140 = vmatprep.subr.bf16.mxu0 0
    %1141 = vmatpush1.bf16.msra.mxu0 %v1100
    %1142 = vmatprep.subr.bf16.mxu0 0
    %1143 = vmatpush1.bf16.msra.mxu0 %v1101
    %1144 = vmatprep.subr.bf16.mxu0 0
    %1145 = vmatpush1.bf16.msra.mxu0 %v1102
    %1146 = vmatprep.subr.bf16.mxu0 0
    %1147 = vmatpush1.bf16.msra.mxu0 %v1103
    %1148 = vmatprep.subr.bf16.mxu0 0
    %1149 = vmatpush1.bf16.msra.mxu0 %v1104
    %1150 = vmatprep.subr.bf16.mxu0 0
    %1151 = vmatpush1.bf16.msra.mxu0 %v1105
    %1152 = vmatprep.subr.bf16.mxu0 0
    %1153 = vmatpush1.bf16.msra.mxu0 %v1106
    %1154 = vmatprep.subr.bf16.mxu0 0
    %1155 = vmatpush1.bf16.msra.mxu0 %v1107
    %1156 = vmatprep.subr.bf16.mxu0 0
    %1157 = vmatpush1.bf16.msra.mxu0 %v1108
    %1158 = vmatprep.subr.bf16.mxu0 0
    %1159 = vmatpush1.bf16.msra.mxu0 %v1109
    %1160 = vmatprep.subr.bf16.mxu0 0
    %1161 = vmatpush1.bf16.msra.mxu0 %v1110
    %1162 = vmatprep.subr.bf16.mxu0 0
    %1163 = vmatpush1.bf16.msra.mxu0 %v1111
    %1164 = vmatprep.subr.bf16.mxu0 0
    %1165 = vmatpush1.bf16.msra.mxu0 %v1112
    %1166 = vmatprep.subr.bf16.mxu0 0
    %1167 = vmatpush1.bf16.msra.mxu0 %v1113
    %1168 = vmatprep.mubr.bf16.mxu0 %v1015
    %1169 = vmatmul.mubr.bf16.gmra.mrb[0].mxu0 %v1012
    %v1170 = vpop.f32.mrb[0].mxu0
    %v1171 = vadd.f32 %v1024, %v1170
    %v1172 = vpop.f32.mrb[0].mxu0
    %v1173 = vpop.f32.mrb[0].mxu0
    %v1174 = vadd.f32 %v1024, %v1173
    %v1175 = vpop.f32.mrb[0].mxu0
    %1176 = vdwg.mxu0
    %1177 = vmatprep.subr.bf16.mxu0 0
    %1178 = vmatpush1.bf16.msra.mxu0 %v1114
    %1179 = vmatprep.subr.bf16.mxu0 0
    %1180 = vmatpush1.bf16.msra.mxu0 %v1115
    %1181 = vmatprep.subr.bf16.mxu0 0
    %1182 = vmatpush1.bf16.msra.mxu0 0
    %1183 = vmatprep.subr.bf16.mxu0 0
    %1184 = vmatpush1.bf16.msra.mxu0 0
    %1185 = vmatprep.subr.bf16.mxu0 0
    %1186 = vmatpush1.bf16.msra.mxu0 0
    %1187 = vmatprep.subr.bf16.mxu0 0
    %1188 = vmatpush1.bf16.msra.mxu0 0
    %1189 = vmatprep.subr.bf16.mxu0 0
    %1190 = vmatpush1.bf16.msra.mxu0 0
    %1191 = vmatprep.subr.bf16.mxu0 0
    %1192 = vmatpush1.bf16.msra.mxu0 0
    %1193 = vmatprep.subr.bf16.mxu0 0
    %1194 = vmatpush1.bf16.msra.mxu0 0
    %1195 = vmatprep.subr.bf16.mxu0 0
    %1196 = vmatpush1.bf16.msra.mxu0 0
    %1197 = vmatprep.subr.bf16.mxu0 0
    %1198 = vmatpush1.bf16.msra.mxu0 0
    %1199 = vmatprep.subr.bf16.mxu0 0
    %1200 = vmatpush1.bf16.msra.mxu0 0
    %1201 = vmatprep.subr.bf16.mxu0 0
    %1202 = vmatpush1.bf16.msra.mxu0 0
    %1203 = vmatprep.subr.bf16.mxu0 0
    %1204 = vmatpush1.bf16.msra.mxu0 0
    %1205 = vmatprep.subr.bf16.mxu0 0
    %1206 = vmatpush1.bf16.msra.mxu0 0
    %1207 = vmatprep.subr.bf16.mxu0 0
    %1208 = vmatpush1.bf16.msra.mxu0 0
    %1209 = vmatprep.mubr.bf16.mxu0 0
    %1210 = vmatmul.mubr.bf16.gmra.mrb[0].mxu0 %v1134
    %v1211 = vpop.f32.mrb[0].mxu0
    %v1212 = vadd.f32 %v1171, %v1211
    %v1213 = vpop.f32.mrb[0].mxu0
    %v1214 = vpop.f32.mrb[0].mxu0
    %v1215 = vadd.f32 %v1174, %v1214
    %v1216 = vpop.f32.mrb[0].mxu0
    %1217 = vdwg.mxu0
    %v1218 = vmax.f32 %v1212, 0.0
    %v1219 = vmax.f32 %v1215, 0.0
    %v1220 = vpack.c.bf16 %v1219, %v1218
    %v1222 = vlaneseq
    %v1223 = vshrl.u32 %v1222, 7
    %v1224 = vsub.s32 0, %v1223
    %v1225 = vrot.slane %v121, %v1224
    %v1235 = vunpack.c.l.b16 %v113
    %v1236 = vunpack.c.l.b16 %v114
    %v1237 = vunpack.c.l.b16 %v115
    %v1238 = vunpack.c.l.b16 %v116
    %v1239 = vunpack.c.l.b16 %v117
    %v1240 = vunpack.c.l.b16 %v118
    %v1241 = vunpack.c.l.b16 %v119
    %v1242 = vunpack.c.l.b16 %v120
    %v1243 = vpack.c.b16 %v1236, %v1235
    %v1244 = vpack.c.b16 %v1238, %v1237
    %v1245 = vpack.c.b16 %v1240, %v1239
    %v1246 = vpack.c.b16 %v1242, %v1241
    %v1252 = vsel %vm942, %v1220, 0
    %1254 = vmatprep.subr.bf16.mxu0 0
    %1255 = vmatpush1.bf16.msra.mxu0 %v1243
    %1256 = vmatprep.subr.bf16.mxu0 0
    %1257 = vmatpush1.bf16.msra.mxu0 %v1244
    %1258 = vmatprep.subr.bf16.mxu0 0
    %1259 = vmatpush1.bf16.msra.mxu0 %v1245
    %1260 = vmatprep.subr.bf16.mxu0 0
    %1261 = vmatpush1.bf16.msra.mxu0 %v1246
    %1262 = vmatprep.subr.bf16.mxu0 0
    %1263 = vmatpush1.bf16.msra.mxu0 0
    %1264 = vmatprep.subr.bf16.mxu0 0
    %1265 = vmatpush1.bf16.msra.mxu0 0
    %1266 = vmatprep.subr.bf16.mxu0 0
    %1267 = vmatpush1.bf16.msra.mxu0 0
    %1268 = vmatprep.subr.bf16.mxu0 0
    %1269 = vmatpush1.bf16.msra.mxu0 0
    %1270 = vmatprep.subr.bf16.mxu0 0
    %1271 = vmatpush1.bf16.msra.mxu0 0
    %1272 = vmatprep.subr.bf16.mxu0 0
    %1273 = vmatpush1.bf16.msra.mxu0 0
    %1274 = vmatprep.subr.bf16.mxu0 0
    %1275 = vmatpush1.bf16.msra.mxu0 0
    %1276 = vmatprep.subr.bf16.mxu0 0
    %1277 = vmatpush1.bf16.msra.mxu0 0
    %1278 = vmatprep.subr.bf16.mxu0 0
    %1279 = vmatpush1.bf16.msra.mxu0 0
    %1280 = vmatprep.subr.bf16.mxu0 0
    %1281 = vmatpush1.bf16.msra.mxu0 0
    %1282 = vmatprep.subr.bf16.mxu0 0
    %1283 = vmatpush1.bf16.msra.mxu0 0
    %1284 = vmatprep.subr.bf16.mxu0 0
    %1285 = vmatpush1.bf16.msra.mxu0 0
    %1286 = vmatprep.mubr.bf16.mxu0 0
    %1287 = vmatmul.mubr.bf16.gmra.mrb[0].mxu0 %v1252
    %v1288 = vpop.f32.mrb[0].mxu0
    %v1289 = vadd.f32 %v1225, %v1288
    %v1290 = vpop.f32.mrb[0].mxu0
    %v1291 = vpop.f32.mrb[0].mxu0
    %v1292 = vadd.f32 %v1225, %v1291
    %v1293 = vpop.f32.mrb[0].mxu0
    %1294 = vdwg.mxu0
    %v1295 = vadd.f32 %v1289, %v897
    %v1296 = vadd.f32 %v1292, %v898
    %v1297 = vsel %vm143, %v1295, 0.0
    %1298 = vadd.xlane.f32.xlu0 %v1297
    %v1299 = vpop.xlane.xlu0 %1298
    %v1300 = vsel %vm143, %v1296, 0.0
    %1301 = vadd.xlane.f32.xlu0 %v1300
    %v1302 = vpop.xlane.xlu0 %1301
    %v1303 = vmul.f32 %v1299, %v850
    %v1304 = vmul.f32 %v1302, %v850
    %v1305 = vsub.f32 %v1295, %v1303
    %v1306 = vsub.f32 %v1296, %v1304
    %v1307 = vmul.f32 %v1305, %v1305
    %v1308 = vmul.f32 %v1306, %v1306
    %v1309 = vsel %vm143, %v1307, 0.0
    %1310 = vadd.xlane.f32.xlu0 %v1309
    %v1311 = vpop.xlane.xlu0 %1310
    %v1312 = vsel %vm143, %v1308, 0.0
    %1313 = vadd.xlane.f32.xlu0 %v1312
    %v1314 = vpop.xlane.xlu0 %1313
    %v1315 = vmul.f32 %v1311, %v850
    %v1316 = vmul.f32 %v1314, %v850
    %v1317 = vadd.f32 %v1315, 1e-05
    %v1318 = vadd.f32 %v1316, 1e-05
    %v1319 = vrsqrt.pop %v1317
    %v1320 = vrsqrt.pop %v1318
    %v1321 = vmul.f32 %v1305, %v1319
    %v1322 = vmul.f32 %v1306, %v1320
    %v1324 = vlaneseq
    %v1325 = vshrl.u32 %v1324, 7
    %v1326 = vsub.s32 0, %v1325
    %v1327 = vrot.slane %v122, %v1326
    %v1329 = vmul.f32 %v1321, %v1327
    %v1330 = vmul.f32 %v1322, %v1327
    %v1332 = vlaneseq
    %v1333 = vshrl.u32 %v1332, 7
    %v1334 = vsub.s32 0, %v1333
    %v1335 = vrot.slane %v123, %v1334
    %v1337 = vadd.f32 %v1329, %v1335
    %v1338 = vadd.f32 %v1330, %v1335
    %v1339 = vmul.f32 %v1337, %v890
    %v1340 = vmul.f32 %v1338, %v895
    %s1341 = scalar_lea.vmem %s4, 16
    %v1342 = vld [vmem:[%s1341] sm:$0xf]
    %v1343 = vld [vmem:[%s1341 + $0x4] sm:$0xf]
    %v1344 = vld [vmem:[%s1341 + $0x8] sm:$0xf]
    %v1345 = vld [vmem:[%s1341 + $0xc] sm:$0xf]
    %s1346 = scalar_lea.vmem %s5, 1
    %v1347 = vld [vmem:[%s1346] sm:$0x1]
    %s1348 = scalar_lea.vmem %s6, 16
    %v1349 = vld [vmem:[%s1348] sm:$0xf]
    %v1350 = vld [vmem:[%s1348 + $0x4] sm:$0xf]
    %v1351 = vld [vmem:[%s1348 + $0x8] sm:$0xf]
    %v1352 = vld [vmem:[%s1348 + $0xc] sm:$0xf]
    %s1353 = scalar_lea.vmem %s7, 1
    %v1354 = vld [vmem:[%s1353] sm:$0x1]
    %s1355 = scalar_lea.vmem %s8, 1
    %v1356 = vld [vmem:[%s1355] sm:$0x1]
    %s1357 = scalar_lea.vmem %s9, 1
    %v1358 = vld [vmem:[%s1357] sm:$0x1]
    %s1359 = scalar_lea.vmem %s10, 144
    %v1360 = vld [vmem:[%s1359] sm:$0xf]
    %v1361 = vld [vmem:[%s1359 + $0x4] sm:$0xf]
    %v1362 = vld [vmem:[%s1359 + $0x8] sm:$0xf]
    %v1363 = vld [vmem:[%s1359 + $0xc] sm:$0xf]
    %v1364 = vld [vmem:[%s1359 + $0x10] sm:$0xf]
    %v1365 = vld [vmem:[%s1359 + $0x14] sm:$0xf]
    %v1366 = vld [vmem:[%s1359 + $0x18] sm:$0xf]
    %v1367 = vld [vmem:[%s1359 + $0x1c] sm:$0xf]
    %v1368 = vld [vmem:[%s1359 + $0x20] sm:$0xf]
    %v1369 = vld [vmem:[%s1359 + $0x24] sm:$0xf]
    %v1370 = vld [vmem:[%s1359 + $0x28] sm:$0xf]
    %v1371 = vld [vmem:[%s1359 + $0x2c] sm:$0xf]
    %v1372 = vld [vmem:[%s1359 + $0x30] sm:$0xf]
    %v1373 = vld [vmem:[%s1359 + $0x34] sm:$0xf]
    %v1374 = vld [vmem:[%s1359 + $0x38] sm:$0xf]
    %v1375 = vld [vmem:[%s1359 + $0x3c] sm:$0xf]
    %v1376 = vld [vmem:[%s1359 + $0x40] sm:$0xf]
    %v1377 = vld [vmem:[%s1359 + $0x44] sm:$0xf]
    %v1378 = vld [vmem:[%s1359 + $0x48] sm:$0xf]
    %v1379 = vld [vmem:[%s1359 + $0x4c] sm:$0xf]
    %v1380 = vld [vmem:[%s1359 + $0x50] sm:$0xf]
    %v1381 = vld [vmem:[%s1359 + $0x54] sm:$0xf]
    %v1382 = vld [vmem:[%s1359 + $0x58] sm:$0xf]
    %v1383 = vld [vmem:[%s1359 + $0x5c] sm:$0xf]
    %v1384 = vld [vmem:[%s1359 + $0x60] sm:$0xf]
    %v1385 = vld [vmem:[%s1359 + $0x64] sm:$0xf]
    %v1386 = vld [vmem:[%s1359 + $0x68] sm:$0xf]
    %v1387 = vld [vmem:[%s1359 + $0x6c] sm:$0xf]
    %v1388 = vld [vmem:[%s1359 + $0x70] sm:$0xf]
    %v1389 = vld [vmem:[%s1359 + $0x74] sm:$0xf]
    %v1390 = vld [vmem:[%s1359 + $0x78] sm:$0xf]
    %v1391 = vld [vmem:[%s1359 + $0x7c] sm:$0xf]
    %v1392 = vld [vmem:[%s1359 + $0x80] sm:$0xf]
    %v1393 = vld [vmem:[%s1359 + $0x84] sm:$0xf]
    %v1394 = vld [vmem:[%s1359 + $0x88] sm:$0xf]
    %v1395 = vld [vmem:[%s1359 + $0x8c] sm:$0xf]
    %s1396 = scalar_lea.vmem %s11, 1
    %v1397 = vld [vmem:[%s1396] sm:$0x1]
    %s1398 = scalar_lea.vmem %s12, 32
    %v1399 = vld [vmem:[%s1398] sm:$0xf]
    %v1400 = vld [vmem:[%s1398 + $0x4] sm:$0xf]
    %v1401 = vld [vmem:[%s1398 + $0x8] sm:$0xf]
    %v1402 = vld [vmem:[%s1398 + $0xc] sm:$0xf]
    %v1403 = vld [vmem:[%s1398 + $0x10] sm:$0xf]
    %v1404 = vld [vmem:[%s1398 + $0x14] sm:$0xf]
    %v1405 = vld [vmem:[%s1398 + $0x18] sm:$0xf]
    %v1406 = vld [vmem:[%s1398 + $0x1c] sm:$0xf]
    %s1407 = scalar_lea.vmem %s13, 1
    %v1408 = vld [vmem:[%s1407] sm:$0x1]
    %s1409 = scalar_lea.vmem %s14, 1
    %v1410 = vld [vmem:[%s1409] sm:$0x1]
    %s1411 = scalar_lea.vmem %s15, 1
    %v1412 = vld [vmem:[%s1411] sm:$0x1]
    %v1413 = vpack.c.bf16 %v1340, %v1339
    %v1415 = vlaneseq
    %v1416 = vshrl.u32 %v1415, 7
    %v1417 = vsub.s32 0, %v1416
    %v1418 = vrot.slane %v1347, %v1417
    %v1424 = vunpack.c.l.b16 %v1342
    %v1425 = vunpack.c.l.b16 %v1343
    %v1426 = vunpack.c.l.b16 %v1344
    %v1427 = vunpack.c.l.b16 %v1345
    %v1428 = vpack.c.b16 %v1425, %v1424
    %v1429 = vpack.c.b16 %v1427, %v1426
    %v1433 = vsel %vm143, %v1413, 0
    %1435 = vmatprep.subr.bf16.mxu0 0
    %1436 = vmatpush1.bf16.msra.mxu0 %v1428
    %1437 = vmatprep.subr.bf16.mxu0 0
    %1438 = vmatpush1.bf16.msra.mxu0 %v1429
    %1439 = vmatprep.subr.bf16.mxu0 0
    %1440 = vmatpush1.bf16.msra.mxu0 0
    %1441 = vmatprep.subr.bf16.mxu0 0
    %1442 = vmatpush1.bf16.msra.mxu0 0
    %1443 = vmatprep.subr.bf16.mxu0 0
    %1444 = vmatpush1.bf16.msra.mxu0 0
    %1445 = vmatprep.subr.bf16.mxu0 0
    %1446 = vmatpush1.bf16.msra.mxu0 0
    %1447 = vmatprep.subr.bf16.mxu0 0
    %1448 = vmatpush1.bf16.msra.mxu0 0
    %1449 = vmatprep.subr.bf16.mxu0 0
    %1450 = vmatpush1.bf16.msra.mxu0 0
    %1451 = vmatprep.subr.bf16.mxu0 0
    %1452 = vmatpush1.bf16.msra.mxu0 0
    %1453 = vmatprep.subr.bf16.mxu0 0
    %1454 = vmatpush1.bf16.msra.mxu0 0
    %1455 = vmatprep.subr.bf16.mxu0 0
    %1456 = vmatpush1.bf16.msra.mxu0 0
    %1457 = vmatprep.subr.bf16.mxu0 0
    %1458 = vmatpush1.bf16.msra.mxu0 0
    %1459 = vmatprep.subr.bf16.mxu0 0
    %1460 = vmatpush1.bf16.msra.mxu0 0
    %1461 = vmatprep.subr.bf16.mxu0 0
    %1462 = vmatpush1.bf16.msra.mxu0 0
    %1463 = vmatprep.subr.bf16.mxu0 0
    %1464 = vmatpush1.bf16.msra.mxu0 0
    %1465 = vmatprep.subr.bf16.mxu0 0
    %1466 = vmatpush1.bf16.msra.mxu0 0
    %1467 = vmatprep.mubr.bf16.mxu0 0
    %1468 = vmatmul.mubr.bf16.gmra.mrb[0].mxu0 %v1433
    %v1469 = vpop.f32.mrb[0].mxu0
    %v1470 = vadd.f32 %v1418, %v1469
    %v1471 = vpop.f32.mrb[0].mxu0
    %v1472 = vpop.f32.mrb[0].mxu0
    %v1473 = vadd.f32 %v1418, %v1472
    %v1474 = vpop.f32.mrb[0].mxu0
    %1475 = vdwg.mxu0
    %v1476 = vpack.c.bf16 %v1473, %v1470
    %1478 = vrot.lane.b32.xlu0 %v1476, 96
    %v1479 = vpop.permute.xlu0 %1478
    %v1481 = vsel %vm192, %v1476, 0
    %v1484 = vsel %vm192, %v1479, 0
    %1486 = vmatprep.subr.bf16.mxu0 0
    %1487 = vmatpush1.bf16.xpose.msra.mxu0 %v1484
    %1488 = vmatprep.subr.bf16.mxu0 0
    %1489 = vmatpush1.bf16.xpose.msra.mxu0 0
    %1490 = vmatprep.subr.bf16.mxu0 0
    %1491 = vmatpush1.bf16.xpose.msra.mxu0 0
    %1492 = vmatprep.subr.bf16.mxu0 0
    %1493 = vmatpush1.bf16.xpose.msra.mxu0 0
    %1494 = vmatprep.subr.bf16.mxu0 0
    %1495 = vmatpush1.bf16.xpose.msra.mxu0 0
    %1496 = vmatprep.subr.bf16.mxu0 0
    %1497 = vmatpush1.bf16.xpose.msra.mxu0 0
    %1498 = vmatprep.subr.bf16.mxu0 0
    %1499 = vmatpush1.bf16.xpose.msra.mxu0 0
    %1500 = vmatprep.subr.bf16.mxu0 0
    %1501 = vmatpush1.bf16.xpose.msra.mxu0 0
    %1502 = vmatprep.subr.bf16.mxu0 0
    %1503 = vmatpush1.bf16.xpose.msra.mxu0 0
    %1504 = vmatprep.subr.bf16.mxu0 0
    %1505 = vmatpush1.bf16.xpose.msra.mxu0 0
    %1506 = vmatprep.subr.bf16.mxu0 0
    %1507 = vmatpush1.bf16.xpose.msra.mxu0 0
    %1508 = vmatprep.subr.bf16.mxu0 0
    %1509 = vmatpush1.bf16.xpose.msra.mxu0 0
    %1510 = vmatprep.subr.bf16.mxu0 0
    %1511 = vmatpush1.bf16.xpose.msra.mxu0 0
    %1512 = vmatprep.subr.bf16.mxu0 0
    %1513 = vmatpush1.bf16.xpose.msra.mxu0 0
    %1514 = vmatprep.subr.bf16.mxu0 0
    %1515 = vmatpush1.bf16.xpose.msra.mxu0 0
    %1516 = vmatprep.subr.bf16.mxu0 0
    %1517 = vmatpush1.bf16.xpose.msra.mxu0 0
    %1518 = vmatprep.mubr.bf16.mxu0 0
    %1519 = vmatmul.mubr.bf16.gmra.mrb[0].mxu0 %v1481
    %v1520 = vpop.f32.mrb[0].mxu0
    %v1521 = vadd.f32 0.0, %v1520
    %v1522 = vpop.f32.mrb[0].mxu0
    %v1523 = vpop.f32.mrb[0].mxu0
    %v1524 = vpop.f32.mrb[0].mxu0
    %1525 = vdwg.mxu0
    %v1526 = vmul.f32 %v1521, 0.25
    %v1527 = vadd.f32 %v1526, %v243
    %v1528 = vsel %vm245, %v1527, -inf
    %1529 = vmax.xlane.f32.xlu0 %v1528
    %v1530 = vpop.xlane.xlu0 %1529
    %v1531 = vsub.f32 %v1527, %v1530
    %v1532 = vmul.f32 %v1531, 1.442695
    %v1533 = vpow.pop %v1532
    %v1534 = vsel %vm245, %v1533, 0.0
    %1535 = vadd.xlane.f32.xlu0 %v1534
    %v1536 = vpop.xlane.xlu0 %1535
    %v1537 = vrcp.pop %v1536
    %v1538 = vmul.f32 %v1533, %v1537
    %v1539 = vpack.c.bf16 %v1538, %v1538
    %1540 = vrot.lane.b32.xlu0 %v1476, 64
    %v1541 = vpop.permute.xlu0 %1540
    %v1543 = vsel %vm245, %v1539, 0
    %v1546 = vsel %vm263, %v1541, 0
    %1548 = vmatprep.subr.bf16.mxu0 0
    %1549 = vmatpush1.bf16.msra.mxu0 %v1546
    %1550 = vmatprep.subr.bf16.mxu0 0
    %1551 = vmatpush1.bf16.msra.mxu0 0
    %1552 = vmatprep.subr.bf16.mxu0 0
    %1553 = vmatpush1.bf16.msra.mxu0 0
    %1554 = vmatprep.subr.bf16.mxu0 0
    %1555 = vmatpush1.bf16.msra.mxu0 0
    %1556 = vmatprep.subr.bf16.mxu0 0
    %1557 = vmatpush1.bf16.msra.mxu0 0
    %1558 = vmatprep.subr.bf16.mxu0 0
    %1559 = vmatpush1.bf16.msra.mxu0 0
    %1560 = vmatprep.subr.bf16.mxu0 0
    %1561 = vmatpush1.bf16.msra.mxu0 0
    %1562 = vmatprep.subr.bf16.mxu0 0
    %1563 = vmatpush1.bf16.msra.mxu0 0
    %1564 = vmatprep.subr.bf16.mxu0 0
    %1565 = vmatpush1.bf16.msra.mxu0 0
    %1566 = vmatprep.subr.bf16.mxu0 0
    %1567 = vmatpush1.bf16.msra.mxu0 0
    %1568 = vmatprep.subr.bf16.mxu0 0
    %1569 = vmatpush1.bf16.msra.mxu0 0
    %1570 = vmatprep.subr.bf16.mxu0 0
    %1571 = vmatpush1.bf16.msra.mxu0 0
    %1572 = vmatprep.subr.bf16.mxu0 0
    %1573 = vmatpush1.bf16.msra.mxu0 0
    %1574 = vmatprep.subr.bf16.mxu0 0
    %1575 = vmatpush1.bf16.msra.mxu0 0
    %1576 = vmatprep.subr.bf16.mxu0 0
    %1577 = vmatpush1.bf16.msra.mxu0 0
    %1578 = vmatprep.subr.bf16.mxu0 0
    %1579 = vmatpush1.bf16.msra.mxu0 0
    %1580 = vmatprep.mubr.bf16.mxu0 0
    %1581 = vmatmul.mubr.bf16.gmra.mrb[0].mxu0 %v1543
    %v1582 = vpop.f32.mrb[0].mxu0
    %v1583 = vadd.f32 0.0, %v1582
    %v1584 = vpop.f32.mrb[0].mxu0
    %v1585 = vpop.f32.mrb[0].mxu0
    %v1586 = vpop.f32.mrb[0].mxu0
    %1587 = vdwg.mxu0
    %v1588 = vpack.c.bf16 %v1583, %v1583
    %1589 = vrot.lane.b32.xlu0 %v1476, 112
    %v1590 = vpop.permute.xlu0 %1589
    %1591 = vrot.lane.b32.xlu0 %v1476, 80
    %v1592 = vpop.permute.xlu0 %1591
    %v1594 = vsel %vm192, %v1590, 0
    %v1597 = vsel %vm192, %v1592, 0
    %1599 = vmatprep.subr.bf16.mxu0 0
    %1600 = vmatpush1.bf16.xpose.msra.mxu0 %v1597
    %1601 = vmatprep.subr.bf16.mxu0 0
    %1602 = vmatpush1.bf16.xpose.msra.mxu0 0
    %1603 = vmatprep.subr.bf16.mxu0 0
    %1604 = vmatpush1.bf16.xpose.msra.mxu0 0
    %1605 = vmatprep.subr.bf16.mxu0 0
    %1606 = vmatpush1.bf16.xpose.msra.mxu0 0
    %1607 = vmatprep.subr.bf16.mxu0 0
    %1608 = vmatpush1.bf16.xpose.msra.mxu0 0
    %1609 = vmatprep.subr.bf16.mxu0 0
    %1610 = vmatpush1.bf16.xpose.msra.mxu0 0
    %1611 = vmatprep.subr.bf16.mxu0 0
    %1612 = vmatpush1.bf16.xpose.msra.mxu0 0
    %1613 = vmatprep.subr.bf16.mxu0 0
    %1614 = vmatpush1.bf16.xpose.msra.mxu0 0
    %1615 = vmatprep.subr.bf16.mxu0 0
    %1616 = vmatpush1.bf16.xpose.msra.mxu0 0
    %1617 = vmatprep.subr.bf16.mxu0 0
    %1618 = vmatpush1.bf16.xpose.msra.mxu0 0
    %1619 = vmatprep.subr.bf16.mxu0 0
    %1620 = vmatpush1.bf16.xpose.msra.mxu0 0
    %1621 = vmatprep.subr.bf16.mxu0 0
    %1622 = vmatpush1.bf16.xpose.msra.mxu0 0
    %1623 = vmatprep.subr.bf16.mxu0 0
    %1624 = vmatpush1.bf16.xpose.msra.mxu0 0
    %1625 = vmatprep.subr.bf16.mxu0 0
    %1626 = vmatpush1.bf16.xpose.msra.mxu0 0
    %1627 = vmatprep.subr.bf16.mxu0 0
    %1628 = vmatpush1.bf16.xpose.msra.mxu0 0
    %1629 = vmatprep.subr.bf16.mxu0 0
    %1630 = vmatpush1.bf16.xpose.msra.mxu0 0
    %1631 = vmatprep.mubr.bf16.mxu0 0
    %1632 = vmatmul.mubr.bf16.gmra.mrb[0].mxu0 %v1594
    %v1633 = vpop.f32.mrb[0].mxu0
    %v1634 = vadd.f32 0.0, %v1633
    %v1635 = vpop.f32.mrb[0].mxu0
    %v1636 = vpop.f32.mrb[0].mxu0
    %v1637 = vpop.f32.mrb[0].mxu0
    %1638 = vdwg.mxu0
    %v1639 = vmul.f32 %v1634, 0.25
    %v1640 = vadd.f32 %v1639, %v243
    %v1641 = vsel %vm245, %v1640, -inf
    %1642 = vmax.xlane.f32.xlu0 %v1641
    %v1643 = vpop.xlane.xlu0 %1642
    %v1644 = vsub.f32 %v1640, %v1643
    %v1645 = vmul.f32 %v1644, 1.442695
    %v1646 = vpow.pop %v1645
    %v1647 = vsel %vm245, %v1646, 0.0
    %1648 = vadd.xlane.f32.xlu0 %v1647
    %v1649 = vpop.xlane.xlu0 %1648
    %v1650 = vrcp.pop %v1649
    %v1651 = vmul.f32 %v1646, %v1650
    %v1652 = vpack.c.bf16 %v1651, %v1651
    %1653 = vrot.lane.b32.xlu0 %v1476, 48
    %v1654 = vpop.permute.xlu0 %1653
    %v1656 = vsel %vm245, %v1652, 0
    %v1659 = vsel %vm263, %v1654, 0
    %1661 = vmatprep.subr.bf16.mxu0 0
    %1662 = vmatpush1.bf16.msra.mxu0 %v1659
    %1663 = vmatprep.subr.bf16.mxu0 0
    %1664 = vmatpush1.bf16.msra.mxu0 0
    %1665 = vmatprep.subr.bf16.mxu0 0
    %1666 = vmatpush1.bf16.msra.mxu0 0
    %1667 = vmatprep.subr.bf16.mxu0 0
    %1668 = vmatpush1.bf16.msra.mxu0 0
    %1669 = vmatprep.subr.bf16.mxu0 0
    %1670 = vmatpush1.bf16.msra.mxu0 0
    %1671 = vmatprep.subr.bf16.mxu0 0
    %1672 = vmatpush1.bf16.msra.mxu0 0
    %1673 = vmatprep.subr.bf16.mxu0 0
    %1674 = vmatpush1.bf16.msra.mxu0 0
    %1675 = vmatprep.subr.bf16.mxu0 0
    %1676 = vmatpush1.bf16.msra.mxu0 0
    %1677 = vmatprep.subr.bf16.mxu0 0
    %1678 = vmatpush1.bf16.msra.mxu0 0
    %1679 = vmatprep.subr.bf16.mxu0 0
    %1680 = vmatpush1.bf16.msra.mxu0 0
    %1681 = vmatprep.subr.bf16.mxu0 0
    %1682 = vmatpush1.bf16.msra.mxu0 0
    %1683 = vmatprep.subr.bf16.mxu0 0
    %1684 = vmatpush1.bf16.msra.mxu0 0
    %1685 = vmatprep.subr.bf16.mxu0 0
    %1686 = vmatpush1.bf16.msra.mxu0 0
    %1687 = vmatprep.subr.bf16.mxu0 0
    %1688 = vmatpush1.bf16.msra.mxu0 0
    %1689 = vmatprep.subr.bf16.mxu0 0
    %1690 = vmatpush1.bf16.msra.mxu0 0
    %1691 = vmatprep.subr.bf16.mxu0 0
    %1692 = vmatpush1.bf16.msra.mxu0 0
    %1693 = vmatprep.mubr.bf16.mxu0 0
    %1694 = vmatmul.mubr.bf16.gmra.mrb[0].mxu0 %v1656
    %v1695 = vpop.f32.mrb[0].mxu0
    %v1696 = vadd.f32 0.0, %v1695
    %v1697 = vpop.f32.mrb[0].mxu0
    %v1698 = vpop.f32.mrb[0].mxu0
    %v1699 = vpop.f32.mrb[0].mxu0
    %1700 = vdwg.mxu0
    %v1701 = vpack.c.bf16 %v1696, %v1696
    %v1704 = vunpack.c.l.b16 %v1351
    %v1705 = vunpack.c.l.b16 %v1352
    %v1706 = vpack.c.b16 %v1705, %v1704
    %v1709 = vsel %vm192, %v1701, 0
    %1711 = vmatprep.subr.bf16.mxu0 0
    %1712 = vmatpush1.bf16.msra.mxu0 %v1706
    %1713 = vmatprep.subr.bf16.mxu0 0
    %1714 = vmatpush1.bf16.msra.mxu0 0
    %1715 = vmatprep.subr.bf16.mxu0 0
    %1716 = vmatpush1.bf16.msra.mxu0 0
    %1717 = vmatprep.subr.bf16.mxu0 0
    %1718 = vmatpush1.bf16.msra.mxu0 0
    %1719 = vmatprep.subr.bf16.mxu0 0
    %1720 = vmatpush1.bf16.msra.mxu0 0
    %1721 = vmatprep.subr.bf16.mxu0 0
    %1722 = vmatpush1.bf16.msra.mxu0 0
    %1723 = vmatprep.subr.bf16.mxu0 0
    %1724 = vmatpush1.bf16.msra.mxu0 0
    %1725 = vmatprep.subr.bf16.mxu0 0
    %1726 = vmatpush1.bf16.msra.mxu0 0
    %1727 = vmatprep.subr.bf16.mxu0 0
    %1728 = vmatpush1.bf16.msra.mxu0 0
    %1729 = vmatprep.subr.bf16.mxu0 0
    %1730 = vmatpush1.bf16.msra.mxu0 0
    %1731 = vmatprep.subr.bf16.mxu0 0
    %1732 = vmatpush1.bf16.msra.mxu0 0
    %1733 = vmatprep.subr.bf16.mxu0 0
    %1734 = vmatpush1.bf16.msra.mxu0 0
    %1735 = vmatprep.subr.bf16.mxu0 0
    %1736 = vmatpush1.bf16.msra.mxu0 0
    %1737 = vmatprep.subr.bf16.mxu0 0
    %1738 = vmatpush1.bf16.msra.mxu0 0
    %1739 = vmatprep.subr.bf16.mxu0 0
    %1740 = vmatpush1.bf16.msra.mxu0 0
    %1741 = vmatprep.subr.bf16.mxu0 0
    %1742 = vmatpush1.bf16.msra.mxu0 0
    %1743 = vmatprep.mubr.bf16.mxu0 0
    %1744 = vmatmul.mubr.bf16.gmra.mrb[0].mxu0 %v1709
    %v1745 = vpop.f32.mrb[0].mxu0
    %v1746 = vadd.f32 0.0, %v1745
    %v1747 = vpop.f32.mrb[0].mxu0
    %v1748 = vpop.f32.mrb[0].mxu0
    %v1749 = vpop.f32.mrb[0].mxu0
    %1750 = vdwg.mxu0
    %v1753 = vunpack.c.l.b16 %v1349
    %v1754 = vunpack.c.l.b16 %v1350
    %v1755 = vpack.c.b16 %v1754, %v1753
    %v1758 = vsel %vm192, %v1588, 0
    %1760 = vmatprep.subr.bf16.mxu0 0
    %1761 = vmatpush1.bf16.msra.mxu0 %v1755
    %1762 = vmatprep.subr.bf16.mxu0 0
    %1763 = vmatpush1.bf16.msra.mxu0 0
    %1764 = vmatprep.subr.bf16.mxu0 0
    %1765 = vmatpush1.bf16.msra.mxu0 0
    %1766 = vmatprep.subr.bf16.mxu0 0
    %1767 = vmatpush1.bf16.msra.mxu0 0
    %1768 = vmatprep.subr.bf16.mxu0 0
    %1769 = vmatpush1.bf16.msra.mxu0 0
    %1770 = vmatprep.subr.bf16.mxu0 0
    %1771 = vmatpush1.bf16.msra.mxu0 0
    %1772 = vmatprep.subr.bf16.mxu0 0
    %1773 = vmatpush1.bf16.msra.mxu0 0
    %1774 = vmatprep.subr.bf16.mxu0 0
    %1775 = vmatpush1.bf16.msra.mxu0 0
    %1776 = vmatprep.subr.bf16.mxu0 0
    %1777 = vmatpush1.bf16.msra.mxu0 0
    %1778 = vmatprep.subr.bf16.mxu0 0
    %1779 = vmatpush1.bf16.msra.mxu0 0
    %1780 = vmatprep.subr.bf16.mxu0 0
    %1781 = vmatpush1.bf16.msra.mxu0 0
    %1782 = vmatprep.subr.bf16.mxu0 0
    %1783 = vmatpush1.bf16.msra.mxu0 0
    %1784 = vmatprep.subr.bf16.mxu0 0
    %1785 = vmatpush1.bf16.msra.mxu0 0
    %1786 = vmatprep.subr.bf16.mxu0 0
    %1787 = vmatpush1.bf16.msra.mxu0 0
    %1788 = vmatprep.subr.bf16.mxu0 0
    %1789 = vmatpush1.bf16.msra.mxu0 0
    %1790 = vmatprep.subr.bf16.mxu0 0
    %1791 = vmatpush1.bf16.msra.mxu0 0
    %1792 = vmatprep.mubr.bf16.mxu0 0
    %1793 = vmatmul.mubr.bf16.gmra.mrb[0].mxu0 %v1758
    %v1794 = vpop.f32.mrb[0].mxu0
    %v1795 = vadd.f32 %v1746, %v1794
    %v1796 = vpop.f32.mrb[0].mxu0
    %v1797 = vpop.f32.mrb[0].mxu0
    %v1798 = vpop.f32.mrb[0].mxu0
    %1799 = vdwg.mxu0
    %v1800 = vrot.slane %v1476, 4
    %1801 = vrot.lane.b32.xlu0 %v1800, 96
    %v1802 = vpop.permute.xlu0 %1801
    %v1804 = vsel %vm192, %v1800, 0
    %v1807 = vsel %vm192, %v1802, 0
    %1809 = vmatprep.subr.bf16.mxu0 0
    %1810 = vmatpush1.bf16.xpose.msra.mxu0 %v1807
    %1811 = vmatprep.subr.bf16.mxu0 0
    %1812 = vmatpush1.bf16.xpose.msra.mxu0 0
    %1813 = vmatprep.subr.bf16.mxu0 0
    %1814 = vmatpush1.bf16.xpose.msra.mxu0 0
    %1815 = vmatprep.subr.bf16.mxu0 0
    %1816 = vmatpush1.bf16.xpose.msra.mxu0 0
    %1817 = vmatprep.subr.bf16.mxu0 0
    %1818 = vmatpush1.bf16.xpose.msra.mxu0 0
    %1819 = vmatprep.subr.bf16.mxu0 0
    %1820 = vmatpush1.bf16.xpose.msra.mxu0 0
    %1821 = vmatprep.subr.bf16.mxu0 0
    %1822 = vmatpush1.bf16.xpose.msra.mxu0 0
    %1823 = vmatprep.subr.bf16.mxu0 0
    %1824 = vmatpush1.bf16.xpose.msra.mxu0 0
    %1825 = vmatprep.subr.bf16.mxu0 0
    %1826 = vmatpush1.bf16.xpose.msra.mxu0 0
    %1827 = vmatprep.subr.bf16.mxu0 0
    %1828 = vmatpush1.bf16.xpose.msra.mxu0 0
    %1829 = vmatprep.subr.bf16.mxu0 0
    %1830 = vmatpush1.bf16.xpose.msra.mxu0 0
    %1831 = vmatprep.subr.bf16.mxu0 0
    %1832 = vmatpush1.bf16.xpose.msra.mxu0 0
    %1833 = vmatprep.subr.bf16.mxu0 0
    %1834 = vmatpush1.bf16.xpose.msra.mxu0 0
    %1835 = vmatprep.subr.bf16.mxu0 0
    %1836 = vmatpush1.bf16.xpose.msra.mxu0 0
    %1837 = vmatprep.subr.bf16.mxu0 0
    %1838 = vmatpush1.bf16.xpose.msra.mxu0 0
    %1839 = vmatprep.subr.bf16.mxu0 0
    %1840 = vmatpush1.bf16.xpose.msra.mxu0 0
    %1841 = vmatprep.mubr.bf16.mxu0 0
    %1842 = vmatmul.mubr.bf16.gmra.mrb[0].mxu0 %v1804
    %v1843 = vpop.f32.mrb[0].mxu0
    %v1844 = vadd.f32 0.0, %v1843
    %v1845 = vpop.f32.mrb[0].mxu0
    %v1846 = vpop.f32.mrb[0].mxu0
    %v1847 = vpop.f32.mrb[0].mxu0
    %1848 = vdwg.mxu0
    %v1849 = vmul.f32 %v1844, 0.25
    %v1850 = vadd.f32 %v1849, %v572
    %v1851 = vsel %vm245, %v1850, -inf
    %1852 = vmax.xlane.f32.xlu0 %v1851
    %v1853 = vpop.xlane.xlu0 %1852
    %v1854 = vsub.f32 %v1850, %v1853
    %v1855 = vmul.f32 %v1854, 1.442695
    %v1856 = vpow.pop %v1855
    %v1857 = vsel %vm245, %v1856, 0.0
    %1858 = vadd.xlane.f32.xlu0 %v1857
    %v1859 = vpop.xlane.xlu0 %1858
    %v1860 = vrcp.pop %v1859
    %v1861 = vmul.f32 %v1856, %v1860
    %v1862 = vpack.c.bf16 %v1861, %v1861
    %1863 = vrot.lane.b32.xlu0 %v1800, 64
    %v1864 = vpop.permute.xlu0 %1863
    %v1866 = vsel %vm245, %v1862, 0
    %v1869 = vsel %vm263, %v1864, 0
    %1871 = vmatprep.subr.bf16.mxu0 0
    %1872 = vmatpush1.bf16.msra.mxu0 %v1869
    %1873 = vmatprep.subr.bf16.mxu0 0
    %1874 = vmatpush1.bf16.msra.mxu0 0
    %1875 = vmatprep.subr.bf16.mxu0 0
    %1876 = vmatpush1.bf16.msra.mxu0 0
    %1877 = vmatprep.subr.bf16.mxu0 0
    %1878 = vmatpush1.bf16.msra.mxu0 0
    %1879 = vmatprep.subr.bf16.mxu0 0
    %1880 = vmatpush1.bf16.msra.mxu0 0
    %1881 = vmatprep.subr.bf16.mxu0 0
    %1882 = vmatpush1.bf16.msra.mxu0 0
    %1883 = vmatprep.subr.bf16.mxu0 0
    %1884 = vmatpush1.bf16.msra.mxu0 0
    %1885 = vmatprep.subr.bf16.mxu0 0
    %1886 = vmatpush1.bf16.msra.mxu0 0
    %1887 = vmatprep.subr.bf16.mxu0 0
    %1888 = vmatpush1.bf16.msra.mxu0 0
    %1889 = vmatprep.subr.bf16.mxu0 0
    %1890 = vmatpush1.bf16.msra.mxu0 0
    %1891 = vmatprep.subr.bf16.mxu0 0
    %1892 = vmatpush1.bf16.msra.mxu0 0
    %1893 = vmatprep.subr.bf16.mxu0 0
    %1894 = vmatpush1.bf16.msra.mxu0 0
    %1895 = vmatprep.subr.bf16.mxu0 0
    %1896 = vmatpush1.bf16.msra.mxu0 0
    %1897 = vmatprep.subr.bf16.mxu0 0
    %1898 = vmatpush1.bf16.msra.mxu0 0
    %1899 = vmatprep.subr.bf16.mxu0 0
    %1900 = vmatpush1.bf16.msra.mxu0 0
    %1901 = vmatprep.subr.bf16.mxu0 0
    %1902 = vmatpush1.bf16.msra.mxu0 0
    %1903 = vmatprep.mubr.bf16.mxu0 0
    %1904 = vmatmul.mubr.bf16.gmra.mrb[0].mxu0 %v1866
    %v1905 = vpop.f32.mrb[0].mxu0
    %v1906 = vadd.f32 0.0, %v1905
    %v1907 = vpop.f32.mrb[0].mxu0
    %v1908 = vpop.f32.mrb[0].mxu0
    %v1909 = vpop.f32.mrb[0].mxu0
    %1910 = vdwg.mxu0
    %v1911 = vpack.c.bf16 %v1906, %v1906
    %1912 = vrot.lane.b32.xlu0 %v1800, 112
    %v1913 = vpop.permute.xlu0 %1912
    %1914 = vrot.lane.b32.xlu0 %v1800, 80
    %v1915 = vpop.permute.xlu0 %1914
    %v1917 = vsel %vm192, %v1913, 0
    %v1920 = vsel %vm192, %v1915, 0
    %1922 = vmatprep.subr.bf16.mxu0 0
    %1923 = vmatpush1.bf16.xpose.msra.mxu0 %v1920
    %1924 = vmatprep.subr.bf16.mxu0 0
    %1925 = vmatpush1.bf16.xpose.msra.mxu0 0
    %1926 = vmatprep.subr.bf16.mxu0 0
    %1927 = vmatpush1.bf16.xpose.msra.mxu0 0
    %1928 = vmatprep.subr.bf16.mxu0 0
    %1929 = vmatpush1.bf16.xpose.msra.mxu0 0
    %1930 = vmatprep.subr.bf16.mxu0 0
    %1931 = vmatpush1.bf16.xpose.msra.mxu0 0
    %1932 = vmatprep.subr.bf16.mxu0 0
    %1933 = vmatpush1.bf16.xpose.msra.mxu0 0
    %1934 = vmatprep.subr.bf16.mxu0 0
    %1935 = vmatpush1.bf16.xpose.msra.mxu0 0
    %1936 = vmatprep.subr.bf16.mxu0 0
    %1937 = vmatpush1.bf16.xpose.msra.mxu0 0
    %1938 = vmatprep.subr.bf16.mxu0 0
    %1939 = vmatpush1.bf16.xpose.msra.mxu0 0
    %1940 = vmatprep.subr.bf16.mxu0 0
    %1941 = vmatpush1.bf16.xpose.msra.mxu0 0
    %1942 = vmatprep.subr.bf16.mxu0 0
    %1943 = vmatpush1.bf16.xpose.msra.mxu0 0
    %1944 = vmatprep.subr.bf16.mxu0 0
    %1945 = vmatpush1.bf16.xpose.msra.mxu0 0
    %1946 = vmatprep.subr.bf16.mxu0 0
    %1947 = vmatpush1.bf16.xpose.msra.mxu0 0
    %1948 = vmatprep.subr.bf16.mxu0 0
    %1949 = vmatpush1.bf16.xpose.msra.mxu0 0
    %1950 = vmatprep.subr.bf16.mxu0 0
    %1951 = vmatpush1.bf16.xpose.msra.mxu0 0
    %1952 = vmatprep.subr.bf16.mxu0 0
    %1953 = vmatpush1.bf16.xpose.msra.mxu0 0
    %1954 = vmatprep.mubr.bf16.mxu0 0
    %1955 = vmatmul.mubr.bf16.gmra.mrb[0].mxu0 %v1917
    %v1956 = vpop.f32.mrb[0].mxu0
    %v1957 = vadd.f32 0.0, %v1956
    %v1958 = vpop.f32.mrb[0].mxu0
    %v1959 = vpop.f32.mrb[0].mxu0
    %v1960 = vpop.f32.mrb[0].mxu0
    %1961 = vdwg.mxu0
    %v1962 = vmul.f32 %v1957, 0.25
    %v1963 = vadd.f32 %v1962, %v572
    %v1964 = vsel %vm245, %v1963, -inf
    %1965 = vmax.xlane.f32.xlu0 %v1964
    %v1966 = vpop.xlane.xlu0 %1965
    %v1967 = vsub.f32 %v1963, %v1966
    %v1968 = vmul.f32 %v1967, 1.442695
    %v1969 = vpow.pop %v1968
    %v1970 = vsel %vm245, %v1969, 0.0
    %1971 = vadd.xlane.f32.xlu0 %v1970
    %v1972 = vpop.xlane.xlu0 %1971
    %v1973 = vrcp.pop %v1972
    %v1974 = vmul.f32 %v1969, %v1973
    %v1975 = vpack.c.bf16 %v1974, %v1974
    %1976 = vrot.lane.b32.xlu0 %v1800, 48
    %v1977 = vpop.permute.xlu0 %1976
    %v1979 = vsel %vm245, %v1975, 0
    %v1982 = vsel %vm263, %v1977, 0
    %1984 = vmatprep.subr.bf16.mxu0 0
    %1985 = vmatpush1.bf16.msra.mxu0 %v1982
    %1986 = vmatprep.subr.bf16.mxu0 0
    %1987 = vmatpush1.bf16.msra.mxu0 0
    %1988 = vmatprep.subr.bf16.mxu0 0
    %1989 = vmatpush1.bf16.msra.mxu0 0
    %1990 = vmatprep.subr.bf16.mxu0 0
    %1991 = vmatpush1.bf16.msra.mxu0 0
    %1992 = vmatprep.subr.bf16.mxu0 0
    %1993 = vmatpush1.bf16.msra.mxu0 0
    %1994 = vmatprep.subr.bf16.mxu0 0
    %1995 = vmatpush1.bf16.msra.mxu0 0
    %1996 = vmatprep.subr.bf16.mxu0 0
    %1997 = vmatpush1.bf16.msra.mxu0 0
    %1998 = vmatprep.subr.bf16.mxu0 0
    %1999 = vmatpush1.bf16.msra.mxu0 0
    %2000 = vmatprep.subr.bf16.mxu0 0
    %2001 = vmatpush1.bf16.msra.mxu0 0
    %2002 = vmatprep.subr.bf16.mxu0 0
    %2003 = vmatpush1.bf16.msra.mxu0 0
    %2004 = vmatprep.subr.bf16.mxu0 0
    %2005 = vmatpush1.bf16.msra.mxu0 0
    %2006 = vmatprep.subr.bf16.mxu0 0
    %2007 = vmatpush1.bf16.msra.mxu0 0
    %2008 = vmatprep.subr.bf16.mxu0 0
    %2009 = vmatpush1.bf16.msra.mxu0 0
    %2010 = vmatprep.subr.bf16.mxu0 0
    %2011 = vmatpush1.bf16.msra.mxu0 0
    %2012 = vmatprep.subr.bf16.mxu0 0
    %2013 = vmatpush1.bf16.msra.mxu0 0
    %2014 = vmatprep.subr.bf16.mxu0 0
    %2015 = vmatpush1.bf16.msra.mxu0 0
    %2016 = vmatprep.mubr.bf16.mxu0 0
    %2017 = vmatmul.mubr.bf16.gmra.mrb[0].mxu0 %v1979
    %v2018 = vpop.f32.mrb[0].mxu0
    %v2019 = vadd.f32 0.0, %v2018
    %v2020 = vpop.f32.mrb[0].mxu0
    %v2021 = vpop.f32.mrb[0].mxu0
    %v2022 = vpop.f32.mrb[0].mxu0
    %2023 = vdwg.mxu0
    %v2024 = vpack.c.bf16 %v2019, %v2019
    %v2026 = vsel %vm192, %v2024, 0
    %2028 = vmatprep.subr.bf16.mxu0 0
    %2029 = vmatpush1.bf16.msra.mxu0 %v1706
    %2030 = vmatprep.subr.bf16.mxu0 0
    %2031 = vmatpush1.bf16.msra.mxu0 0
    %2032 = vmatprep.subr.bf16.mxu0 0
    %2033 = vmatpush1.bf16.msra.mxu0 0
    %2034 = vmatprep.subr.bf16.mxu0 0
    %2035 = vmatpush1.bf16.msra.mxu0 0
    %2036 = vmatprep.subr.bf16.mxu0 0
    %2037 = vmatpush1.bf16.msra.mxu0 0
    %2038 = vmatprep.subr.bf16.mxu0 0
    %2039 = vmatpush1.bf16.msra.mxu0 0
    %2040 = vmatprep.subr.bf16.mxu0 0
    %2041 = vmatpush1.bf16.msra.mxu0 0
    %2042 = vmatprep.subr.bf16.mxu0 0
    %2043 = vmatpush1.bf16.msra.mxu0 0
    %2044 = vmatprep.subr.bf16.mxu0 0
    %2045 = vmatpush1.bf16.msra.mxu0 0
    %2046 = vmatprep.subr.bf16.mxu0 0
    %2047 = vmatpush1.bf16.msra.mxu0 0
    %2048 = vmatprep.subr.bf16.mxu0 0
    %2049 = vmatpush1.bf16.msra.mxu0 0
    %2050 = vmatprep.subr.bf16.mxu0 0
    %2051 = vmatpush1.bf16.msra.mxu0 0
    %2052 = vmatprep.subr.bf16.mxu0 0
    %2053 = vmatpush1.bf16.msra.mxu0 0
    %2054 = vmatprep.subr.bf16.mxu0 0
    %2055 = vmatpush1.bf16.msra.mxu0 0
    %2056 = vmatprep.subr.bf16.mxu0 0
    %2057 = vmatpush1.bf16.msra.mxu0 0
    %2058 = vmatprep.subr.bf16.mxu0 0
    %2059 = vmatpush1.bf16.msra.mxu0 0
    %2060 = vmatprep.mubr.bf16.mxu0 0
    %2061 = vmatmul.mubr.bf16.gmra.mrb[0].mxu0 %v2026
    %v2062 = vpop.f32.mrb[0].mxu0
    %v2063 = vadd.f32 0.0, %v2062
    %v2064 = vpop.f32.mrb[0].mxu0
    %v2065 = vpop.f32.mrb[0].mxu0
    %v2066 = vpop.f32.mrb[0].mxu0
    %2067 = vdwg.mxu0
    %v2069 = vsel %vm192, %v1911, 0
    %2071 = vmatprep.subr.bf16.mxu0 0
    %2072 = vmatpush1.bf16.msra.mxu0 %v1755
    %2073 = vmatprep.subr.bf16.mxu0 0
    %2074 = vmatpush1.bf16.msra.mxu0 0
    %2075 = vmatprep.subr.bf16.mxu0 0
    %2076 = vmatpush1.bf16.msra.mxu0 0
    %2077 = vmatprep.subr.bf16.mxu0 0
    %2078 = vmatpush1.bf16.msra.mxu0 0
    %2079 = vmatprep.subr.bf16.mxu0 0
    %2080 = vmatpush1.bf16.msra.mxu0 0
    %2081 = vmatprep.subr.bf16.mxu0 0
    %2082 = vmatpush1.bf16.msra.mxu0 0
    %2083 = vmatprep.subr.bf16.mxu0 0
    %2084 = vmatpush1.bf16.msra.mxu0 0
    %2085 = vmatprep.subr.bf16.mxu0 0
    %2086 = vmatpush1.bf16.msra.mxu0 0
    %2087 = vmatprep.subr.bf16.mxu0 0
    %2088 = vmatpush1.bf16.msra.mxu0 0
    %2089 = vmatprep.subr.bf16.mxu0 0
    %2090 = vmatpush1.bf16.msra.mxu0 0
    %2091 = vmatprep.subr.bf16.mxu0 0
    %2092 = vmatpush1.bf16.msra.mxu0 0
    %2093 = vmatprep.subr.bf16.mxu0 0
    %2094 = vmatpush1.bf16.msra.mxu0 0
    %2095 = vmatprep.subr.bf16.mxu0 0
    %2096 = vmatpush1.bf16.msra.mxu0 0
    %2097 = vmatprep.subr.bf16.mxu0 0
    %2098 = vmatpush1.bf16.msra.mxu0 0
    %2099 = vmatprep.subr.bf16.mxu0 0
    %2100 = vmatpush1.bf16.msra.mxu0 0
    %2101 = vmatprep.subr.bf16.mxu0 0
    %2102 = vmatpush1.bf16.msra.mxu0 0
    %2103 = vmatprep.mubr.bf16.mxu0 0
    %2104 = vmatmul.mubr.bf16.gmra.mrb[0].mxu0 %v2069
    %v2105 = vpop.f32.mrb[0].mxu0
    %v2106 = vadd.f32 %v2063, %v2105
    %v2107 = vpop.f32.mrb[0].mxu0
    %v2108 = vpop.f32.mrb[0].mxu0
    %v2109 = vpop.f32.mrb[0].mxu0
    %2110 = vdwg.mxu0
    %v2112 = vlaneseq
    %v2113 = vshrl.u32 %v2112, 7
    %v2114 = vsub.s32 0, %v2113
    %v2115 = vrot.slane %v1354, %v2114
    %v2117 = vadd.f32 %v1795, %v2115
    %v2118 = vadd.f32 %v2106, %v2115
    %v2119 = vadd.f32 %v2117, %v1339
    %v2120 = vadd.f32 %v2118, %v1340
    %v2121 = vsel %vm143, %v2119, 0.0
    %2122 = vadd.xlane.f32.xlu0 %v2121
    %v2123 = vpop.xlane.xlu0 %2122
    %v2124 = vsel %vm143, %v2120, 0.0
    %2125 = vadd.xlane.f32.xlu0 %v2124
    %v2126 = vpop.xlane.xlu0 %2125
    %v2127 = vmul.f32 %v2123, %v850
    %v2128 = vmul.f32 %v2126, %v850
    %v2129 = vsub.f32 %v2119, %v2127
    %v2130 = vsub.f32 %v2120, %v2128
    %v2131 = vmul.f32 %v2129, %v2129
    %v2132 = vmul.f32 %v2130, %v2130
    %v2133 = vsel %vm143, %v2131, 0.0
    %2134 = vadd.xlane.f32.xlu0 %v2133
    %v2135 = vpop.xlane.xlu0 %2134
    %v2136 = vsel %vm143, %v2132, 0.0
    %2137 = vadd.xlane.f32.xlu0 %v2136
    %v2138 = vpop.xlane.xlu0 %2137
    %v2139 = vmul.f32 %v2135, %v850
    %v2140 = vmul.f32 %v2138, %v850
    %v2141 = vadd.f32 %v2139, 1e-05
    %v2142 = vadd.f32 %v2140, 1e-05
    %v2143 = vrsqrt.pop %v2141
    %v2144 = vrsqrt.pop %v2142
    %v2145 = vmul.f32 %v2129, %v2143
    %v2146 = vmul.f32 %v2130, %v2144
    %v2148 = vlaneseq
    %v2149 = vshrl.u32 %v2148, 7
    %v2150 = vsub.s32 0, %v2149
    %v2151 = vrot.slane %v1356, %v2150
    %v2153 = vmul.f32 %v2145, %v2151
    %v2154 = vmul.f32 %v2146, %v2151
    %v2156 = vlaneseq
    %v2157 = vshrl.u32 %v2156, 7
    %v2158 = vsub.s32 0, %v2157
    %v2159 = vrot.slane %v1358, %v2158
    %v2161 = vadd.f32 %v2153, %v2159
    %v2162 = vadd.f32 %v2154, %v2159
    %v2163 = vmul.f32 %v2161, %v890
    %v2164 = vmul.f32 %v2162, %v895
    %v2165 = vpack.c.bf16 %v2163, %v2163
    %v2167 = vrot.slane %v2165, 6
    %v2169 = vsel %vm902, 0, %v2167
    %v2170 = vsel %vm906, %v2169, 0
    %v2171 = vshrl.u32 %v2170, 16
    %v2173 = vshll.u32 %v2170, 16
    %v2175 = vrot.slane %v2173, 1
    %v2176 = vor.u32 %v2171, %v2175
    %2177 = vrot.lane.b32.xlu0 %v2176, 32
    %v2178 = vpop.permute.xlu0 %2177
    %v2180 = vrot.slane %v2170, 1
    %2181 = vrot.lane.b32.xlu0 %v2180, 64
    %v2182 = vpop.permute.xlu0 %2181
    %v2183 = vrot.slane %v2171, 1
    %v2184 = vrot.slane %v2173, 2
    %v2185 = vor.u32 %v2183, %v2184
    %2186 = vrot.lane.b32.xlu0 %v2185, 96
    %v2187 = vpop.permute.xlu0 %2186
    %v2188 = vrot.slane %v2170, 2
    %v2189 = vrot.slane %v2171, 2
    %v2190 = vrot.slane %v2173, 3
    %v2191 = vor.u32 %v2189, %v2190
    %2192 = vrot.lane.b32.xlu0 %v2191, 32
    %v2193 = vpop.permute.xlu0 %2192
    %v2194 = vrot.slane %v2170, 3
    %2195 = vrot.lane.b32.xlu0 %v2194, 64
    %v2196 = vpop.permute.xlu0 %2195
    %v2197 = vrot.slane %v2171, 3
    %v2198 = vrot.slane %v2173, 4
    %v2199 = vor.u32 %v2197, %v2198
    %2200 = vrot.lane.b32.xlu0 %v2199, 96
    %v2201 = vpop.permute.xlu0 %2200
    %v2202 = vrot.slane %v2170, 4
    %v2204 = vsel %vm143, %v2170, %v2178
    %v2206 = vsel %vm942, %v2204, %v2182
    %v2208 = vsel %vm945, %v2206, %v2187
    %v2211 = vsel %vm143, %v2188, %v2193
    %v2213 = vsel %vm942, %v2211, %v2196
    %v2215 = vsel %vm945, %v2213, %v2201
    %v2216 = vpack.c.bf16 %v2164, %v2164
    %v2218 = vrot.slane %v2216, 6
    %v2220 = vsel %vm902, 0, %v2218
    %v2221 = vsel %vm906, %v2220, 0
    %v2222 = vshrl.u32 %v2221, 16
    %v2224 = vshll.u32 %v2221, 16
    %v2226 = vrot.slane %v2224, 1
    %v2227 = vor.u32 %v2222, %v2226
    %2228 = vrot.lane.b32.xlu0 %v2227, 32
    %v2229 = vpop.permute.xlu0 %2228
    %v2231 = vrot.slane %v2221, 1
    %2232 = vrot.lane.b32.xlu0 %v2231, 64
    %v2233 = vpop.permute.xlu0 %2232
    %v2234 = vrot.slane %v2222, 1
    %v2235 = vrot.slane %v2224, 2
    %v2236 = vor.u32 %v2234, %v2235
    %2237 = vrot.lane.b32.xlu0 %v2236, 96
    %v2238 = vpop.permute.xlu0 %2237
    %v2239 = vrot.slane %v2221, 2
    %v2240 = vrot.slane %v2222, 2
    %v2241 = vrot.slane %v2224, 3
    %v2242 = vor.u32 %v2240, %v2241
    %2243 = vrot.lane.b32.xlu0 %v2242, 32
    %v2244 = vpop.permute.xlu0 %2243
    %v2245 = vrot.slane %v2221, 3
    %2246 = vrot.lane.b32.xlu0 %v2245, 64
    %v2247 = vpop.permute.xlu0 %2246
    %v2248 = vrot.slane %v2222, 3
    %v2249 = vrot.slane %v2224, 4
    %v2250 = vor.u32 %v2248, %v2249
    %2251 = vrot.lane.b32.xlu0 %v2250, 96
    %v2252 = vpop.permute.xlu0 %2251
    %v2253 = vrot.slane %v2221, 4
    %v2255 = vsel %vm143, %v2221, %v2229
    %v2257 = vsel %vm942, %v2255, %v2233
    %v2259 = vsel %vm945, %v2257, %v2238
    %v2262 = vsel %vm143, %v2239, %v2244
    %v2264 = vsel %vm942, %v2262, %v2247
    %v2266 = vsel %vm945, %v2264, %v2252
    %v2269 = vrot.slane %v2259, 4
    %v2270 = vrot.slane %v2266, 4
    %v2271 = vrot.slane %v2253, 4
    %v2273 = vsel %vm263, %v2208, %v2269
    %v2276 = vsel %vm263, %v2215, %v2270
    %v2280 = vsel %vm263, %v2202, %v2271
    %v2282 = vlaneseq
    %v2283 = vshrl.u32 %v2282, 7
    %v2284 = vsub.s32 0, %v2283
    %v2285 = vrot.slane %v1397, %v2284
    %v2323 = vunpack.c.l.b16 %v1360
    %v2324 = vunpack.c.l.b16 %v1361
    %v2325 = vunpack.c.l.b16 %v1362
    %v2326 = vunpack.c.l.b16 %v1363
    %v2327 = vunpack.c.l.b16 %v1364
    %v2328 = vunpack.c.l.b16 %v1365
    %v2329 = vunpack.c.l.b16 %v1366
    %v2330 = vunpack.c.l.b16 %v1367
    %v2331 = vunpack.c.l.b16 %v1368
    %v2332 = vunpack.c.l.b16 %v1369
    %v2333 = vunpack.c.l.b16 %v1370
    %v2334 = vunpack.c.l.b16 %v1371
    %v2335 = vunpack.c.l.b16 %v1372
    %v2336 = vunpack.c.l.b16 %v1373
    %v2337 = vunpack.c.l.b16 %v1374
    %v2338 = vunpack.c.l.b16 %v1375
    %v2339 = vunpack.c.l.b16 %v1376
    %v2340 = vunpack.c.l.b16 %v1377
    %v2341 = vunpack.c.l.b16 %v1378
    %v2342 = vunpack.c.l.b16 %v1379
    %v2343 = vunpack.c.l.b16 %v1380
    %v2344 = vunpack.c.l.b16 %v1381
    %v2345 = vunpack.c.l.b16 %v1382
    %v2346 = vunpack.c.l.b16 %v1383
    %v2347 = vunpack.c.l.b16 %v1384
    %v2348 = vunpack.c.l.b16 %v1385
    %v2349 = vunpack.c.l.b16 %v1386
    %v2350 = vunpack.c.l.b16 %v1387
    %v2351 = vunpack.c.l.b16 %v1388
    %v2352 = vunpack.c.l.b16 %v1389
    %v2353 = vunpack.c.l.b16 %v1390
    %v2354 = vunpack.c.l.b16 %v1391
    %v2355 = vunpack.c.l.b16 %v1392
    %v2356 = vunpack.c.l.b16 %v1393
    %v2357 = vunpack.c.l.b16 %v1394
    %v2358 = vunpack.c.l.b16 %v1395
    %v2359 = vpack.c.b16 %v2324, %v2323
    %v2360 = vpack.c.b16 %v2326, %v2325
    %v2361 = vpack.c.b16 %v2328, %v2327
    %v2362 = vpack.c.b16 %v2330, %v2329
    %v2363 = vpack.c.b16 %v2332, %v2331
    %v2364 = vpack.c.b16 %v2334, %v2333
    %v2365 = vpack.c.b16 %v2336, %v2335
    %v2366 = vpack.c.b16 %v2338, %v2337
    %v2367 = vpack.c.b16 %v2340, %v2339
    %v2368 = vpack.c.b16 %v2342, %v2341
    %v2369 = vpack.c.b16 %v2344, %v2343
    %v2370 = vpack.c.b16 %v2346, %v2345
    %v2371 = vpack.c.b16 %v2348, %v2347
    %v2372 = vpack.c.b16 %v2350, %v2349
    %v2373 = vpack.c.b16 %v2352, %v2351
    %v2374 = vpack.c.b16 %v2354, %v2353
    %v2375 = vpack.c.b16 %v2356, %v2355
    %v2376 = vpack.c.b16 %v2358, %v2357
    %v2395 = vsel %vm143, %v2280, 0
    %2397 = vmatprep.subr.bf16.mxu0 0
    %2398 = vmatpush1.bf16.msra.mxu0 %v2359
    %2399 = vmatprep.subr.bf16.mxu0 0
    %2400 = vmatpush1.bf16.msra.mxu0 %v2360
    %2401 = vmatprep.subr.bf16.mxu0 0
    %2402 = vmatpush1.bf16.msra.mxu0 %v2361
    %2403 = vmatprep.subr.bf16.mxu0 0
    %2404 = vmatpush1.bf16.msra.mxu0 %v2362
    %2405 = vmatprep.subr.bf16.mxu0 0
    %2406 = vmatpush1.bf16.msra.mxu0 %v2363
    %2407 = vmatprep.subr.bf16.mxu0 0
    %2408 = vmatpush1.bf16.msra.mxu0 %v2364
    %2409 = vmatprep.subr.bf16.mxu0 0
    %2410 = vmatpush1.bf16.msra.mxu0 %v2365
    %2411 = vmatprep.subr.bf16.mxu0 0
    %2412 = vmatpush1.bf16.msra.mxu0 %v2366
    %2413 = vmatprep.subr.bf16.mxu0 0
    %2414 = vmatpush1.bf16.msra.mxu0 %v2367
    %2415 = vmatprep.subr.bf16.mxu0 0
    %2416 = vmatpush1.bf16.msra.mxu0 %v2368
    %2417 = vmatprep.subr.bf16.mxu0 0
    %2418 = vmatpush1.bf16.msra.mxu0 %v2369
    %2419 = vmatprep.subr.bf16.mxu0 0
    %2420 = vmatpush1.bf16.msra.mxu0 %v2370
    %2421 = vmatprep.subr.bf16.mxu0 0
    %2422 = vmatpush1.bf16.msra.mxu0 %v2371
    %2423 = vmatprep.subr.bf16.mxu0 0
    %2424 = vmatpush1.bf16.msra.mxu0 %v2372
    %2425 = vmatprep.subr.bf16.mxu0 0
    %2426 = vmatpush1.bf16.msra.mxu0 %v2373
    %2427 = vmatprep.subr.bf16.mxu0 0
    %2428 = vmatpush1.bf16.msra.mxu0 %v2374
    %2429 = vmatprep.mubr.bf16.mxu0 %v2276
    %2430 = vmatmul.mubr.bf16.gmra.mrb[0].mxu0 %v2273
    %v2431 = vpop.f32.mrb[0].mxu0
    %v2432 = vadd.f32 %v2285, %v2431
    %v2433 = vpop.f32.mrb[0].mxu0
    %v2434 = vpop.f32.mrb[0].mxu0
    %v2435 = vadd.f32 %v2285, %v2434
    %v2436 = vpop.f32.mrb[0].mxu0
    %2437 = vdwg.mxu0
    %2438 = vmatprep.subr.bf16.mxu0 0
    %2439 = vmatpush1.bf16.msra.mxu0 %v2375
    %2440 = vmatprep.subr.bf16.mxu0 0
    %2441 = vmatpush1.bf16.msra.mxu0 %v2376
    %2442 = vmatprep.subr.bf16.mxu0 0
    %2443 = vmatpush1.bf16.msra.mxu0 0
    %2444 = vmatprep.subr.bf16.mxu0 0
    %2445 = vmatpush1.bf16.msra.mxu0 0
    %2446 = vmatprep.subr.bf16.mxu0 0
    %2447 = vmatpush1.bf16.msra.mxu0 0
    %2448 = vmatprep.subr.bf16.mxu0 0
    %2449 = vmatpush1.bf16.msra.mxu0 0
    %2450 = vmatprep.subr.bf16.mxu0 0
    %2451 = vmatpush1.bf16.msra.mxu0 0
    %2452 = vmatprep.subr.bf16.mxu0 0
    %2453 = vmatpush1.bf16.msra.mxu0 0
    %2454 = vmatprep.subr.bf16.mxu0 0
    %2455 = vmatpush1.bf16.msra.mxu0 0
    %2456 = vmatprep.subr.bf16.mxu0 0
    %2457 = vmatpush1.bf16.msra.mxu0 0
    %2458 = vmatprep.subr.bf16.mxu0 0
    %2459 = vmatpush1.bf16.msra.mxu0 0
    %2460 = vmatprep.subr.bf16.mxu0 0
    %2461 = vmatpush1.bf16.msra.mxu0 0
    %2462 = vmatprep.subr.bf16.mxu0 0
    %2463 = vmatpush1.bf16.msra.mxu0 0
    %2464 = vmatprep.subr.bf16.mxu0 0
    %2465 = vmatpush1.bf16.msra.mxu0 0
    %2466 = vmatprep.subr.bf16.mxu0 0
    %2467 = vmatpush1.bf16.msra.mxu0 0
    %2468 = vmatprep.subr.bf16.mxu0 0
    %2469 = vmatpush1.bf16.msra.mxu0 0
    %2470 = vmatprep.mubr.bf16.mxu0 0
    %2471 = vmatmul.mubr.bf16.gmra.mrb[0].mxu0 %v2395
    %v2472 = vpop.f32.mrb[0].mxu0
    %v2473 = vadd.f32 %v2432, %v2472
    %v2474 = vpop.f32.mrb[0].mxu0
    %v2475 = vpop.f32.mrb[0].mxu0
    %v2476 = vadd.f32 %v2435, %v2475
    %v2477 = vpop.f32.mrb[0].mxu0
    %2478 = vdwg.mxu0
    %v2479 = vmax.f32 %v2473, 0.0
    %v2480 = vmax.f32 %v2476, 0.0
    %v2481 = vpack.c.bf16 %v2480, %v2479
    %v2483 = vlaneseq
    %v2484 = vshrl.u32 %v2483, 7
    %v2485 = vsub.s32 0, %v2484
    %v2486 = vrot.slane %v1408, %v2485
    %v2496 = vunpack.c.l.b16 %v1399
    %v2497 = vunpack.c.l.b16 %v1400
    %v2498 = vunpack.c.l.b16 %v1401
    %v2499 = vunpack.c.l.b16 %v1402
    %v2500 = vunpack.c.l.b16 %v1403
    %v2501 = vunpack.c.l.b16 %v1404
    %v2502 = vunpack.c.l.b16 %v1405
    %v2503 = vunpack.c.l.b16 %v1406
    %v2504 = vpack.c.b16 %v2497, %v2496
    %v2505 = vpack.c.b16 %v2499, %v2498
    %v2506 = vpack.c.b16 %v2501, %v2500
    %v2507 = vpack.c.b16 %v2503, %v2502
    %v2513 = vsel %vm942, %v2481, 0
    %2515 = vmatprep.subr.bf16.mxu0 0
    %2516 = vmatpush1.bf16.msra.mxu0 %v2504
    %2517 = vmatprep.subr.bf16.mxu0 0
    %2518 = vmatpush1.bf16.msra.mxu0 %v2505
    %2519 = vmatprep.subr.bf16.mxu0 0
    %2520 = vmatpush1.bf16.msra.mxu0 %v2506
    %2521 = vmatprep.subr.bf16.mxu0 0
    %2522 = vmatpush1.bf16.msra.mxu0 %v2507
    %2523 = vmatprep.subr.bf16.mxu0 0
    %2524 = vmatpush1.bf16.msra.mxu0 0
    %2525 = vmatprep.subr.bf16.mxu0 0
    %2526 = vmatpush1.bf16.msra.mxu0 0
    %2527 = vmatprep.subr.bf16.mxu0 0
    %2528 = vmatpush1.bf16.msra.mxu0 0
    %2529 = vmatprep.subr.bf16.mxu0 0
    %2530 = vmatpush1.bf16.msra.mxu0 0
    %2531 = vmatprep.subr.bf16.mxu0 0
    %2532 = vmatpush1.bf16.msra.mxu0 0
    %2533 = vmatprep.subr.bf16.mxu0 0
    %2534 = vmatpush1.bf16.msra.mxu0 0
    %2535 = vmatprep.subr.bf16.mxu0 0
    %2536 = vmatpush1.bf16.msra.mxu0 0
    %2537 = vmatprep.subr.bf16.mxu0 0
    %2538 = vmatpush1.bf16.msra.mxu0 0
    %2539 = vmatprep.subr.bf16.mxu0 0
    %2540 = vmatpush1.bf16.msra.mxu0 0
    %2541 = vmatprep.subr.bf16.mxu0 0
    %2542 = vmatpush1.bf16.msra.mxu0 0
    %2543 = vmatprep.subr.bf16.mxu0 0
    %2544 = vmatpush1.bf16.msra.mxu0 0
    %2545 = vmatprep.subr.bf16.mxu0 0
    %2546 = vmatpush1.bf16.msra.mxu0 0
    %2547 = vmatprep.mubr.bf16.mxu0 0
    %2548 = vmatmul.mubr.bf16.gmra.mrb[0].mxu0 %v2513
    %v2549 = vpop.f32.mrb[0].mxu0
    %v2550 = vadd.f32 %v2486, %v2549
    %v2551 = vpop.f32.mrb[0].mxu0
    %v2552 = vpop.f32.mrb[0].mxu0
    %v2553 = vadd.f32 %v2486, %v2552
    %v2554 = vpop.f32.mrb[0].mxu0
    %2555 = vdwg.mxu0
    %v2556 = vadd.f32 %v2550, %v2163
    %v2557 = vadd.f32 %v2553, %v2164
    %v2558 = vsel %vm143, %v2556, 0.0
    %2559 = vadd.xlane.f32.xlu0 %v2558
    %v2560 = vpop.xlane.xlu0 %2559
    %v2561 = vsel %vm143, %v2557, 0.0
    %2562 = vadd.xlane.f32.xlu0 %v2561
    %v2563 = vpop.xlane.xlu0 %2562
    %v2564 = vmul.f32 %v2560, %v850
    %v2565 = vmul.f32 %v2563, %v850
    %v2566 = vsub.f32 %v2556, %v2564
    %v2567 = vsub.f32 %v2557, %v2565
    %v2568 = vmul.f32 %v2566, %v2566
    %v2569 = vmul.f32 %v2567, %v2567
    %v2570 = vsel %vm143, %v2568, 0.0
    %2571 = vadd.xlane.f32.xlu0 %v2570
    %v2572 = vpop.xlane.xlu0 %2571
    %v2573 = vsel %vm143, %v2569, 0.0
    %2574 = vadd.xlane.f32.xlu0 %v2573
    %v2575 = vpop.xlane.xlu0 %2574
    %v2576 = vmul.f32 %v2572, %v850
    %v2577 = vmul.f32 %v2575, %v850
    %v2578 = vadd.f32 %v2576, 1e-05
    %v2579 = vadd.f32 %v2577, 1e-05
    %v2580 = vrsqrt.pop %v2578
    %v2581 = vrsqrt.pop %v2579
    %v2582 = vmul.f32 %v2566, %v2580
    %v2583 = vmul.f32 %v2567, %v2581
    %v2585 = vlaneseq
    %v2586 = vshrl.u32 %v2585, 7
    %v2587 = vsub.s32 0, %v2586
    %v2588 = vrot.slane %v1410, %v2587
    %v2590 = vmul.f32 %v2582, %v2588
    %v2591 = vmul.f32 %v2583, %v2588
    %v2593 = vlaneseq
    %v2594 = vshrl.u32 %v2593, 7
    %v2595 = vsub.s32 0, %v2594
    %v2596 = vrot.slane %v1412, %v2595
    %v2598 = vadd.f32 %v2590, %v2596
    %v2599 = vadd.f32 %v2591, %v2596
    %v2600 = vmul.f32 %v2598, %v890
    %v2601 = vmul.f32 %v2599, %v895
    %2602 = vst.msk [vmem:[#allocation2] sm:$0xff] %vm143, %v2600
    %2603 = vst.msk [vmem:[#allocation2 + $0x8] sm:$0xff] %vm143, %v2601
    // Predicated region
    $region66: #{tpu_custom_call.1} parent=1 // pred_check
      _
    $region67: #{tpu_custom_call.1} parent=1 // pred_check_branch
      %2605 = sbr.rel (0) target = $region69
    $region68: #{tpu_custom_call.1} parent=1 // pred_region
      %s2607 = ssub.s32 256, 256
      %2608 = vsyncadd [#allocation3], %s2607
      %s2609 = sshll.u32 [#allocation2], 4
      %s2610 = int_to_ptr.vmem [resolvable:$true] %s2609
      %2615 = dma.vmem_to_hbm [thread:$0]  %s2610, 256, %s16, [#allocation3], 128, 128, 8
    $region69: #{tpu_custom_call.1} parent=1 // pred_fallthru
      _
    // Predicated region
    $region70: #{tpu_custom_call.1} parent=1 // pred_check
      _
    $region71: #{tpu_custom_call.1} parent=1 // pred_check_branch
      %2617 = sbr.rel (0) target = $region73
    $region72: #{tpu_custom_call.1} parent=1 // pred_region
      %2618 = dma.done [#allocation3], 256
    $region73: #{tpu_custom_call.1} parent=1 // pred_fallthru
      _
    %2619 = vsyncpa [#allocation3], 1

</llo_original>
